<compile_context>
chip_gen: v5e
topology: v5e:2x2
jax: 0.10.0
libtpu: 0.0.40
codegen_flags: <defaults>
</compile_context>

<pallas_src>
import jax
import jax.numpy as jnp
from jax.experimental import pallas as pl
from jax.experimental.pallas import tpu as pltpu

PROJ_DIM = 128          # cfg['MODEL']['PROJECTION']['DIM']
HIDDEN = 512            # proj_head hidden width
NUM_ANCHORS = 10
FPN_CHANNELS = 256
IN_CHANNELS = 3
STEM_K = 8              # stem K dim zero-padded 3 -> 8 so it rides the MXU
FPN_LEVELS = (("0", 4), ("1", 8), ("2", 16), ("3", 32), ("pool", 64))


def _max_tile_rows():
    # v6e/v7x: per-step MXU work at TM=256 (~0.1 us) is dominated by the
    # ~0.35 us grid-step overhead -> use ~1024 rows.  v5e: 512 keeps the f32
    # intermediates comfortably inside the 16 MiB default scoped-VMEM limit.
    try:
        kind = jax.devices()[0].device_kind.lower()
    except Exception:
        return 1024
    if "v5e" in kind or "v5 lite" in kind or "v5lite" in kind:
        return 512
    return 1024


# ----------------------------------------------------------------------------
# Fused Pallas kernel: stem (8->256, K-padded) + proj head (256->512->128)
# ----------------------------------------------------------------------------
def _fused_encoder_kernel(x_ref, sw_ref, sb_ref, w1_ref, b1_ref, w2_ref,
                          b2_ref, o_ref):
    # Stem 1x1 conv as a small MXU matmul (bf16 inputs, f32 accumulation).
    feat = jnp.dot(x_ref[...], sw_ref[...],
                   preferred_element_type=jnp.float32)        # (TM, 256) f32
    feat = jnp.maximum(feat + sb_ref[...], 0.0)

    # proj head: conv1x1(256->512) -> ReLU -> conv1x1(512->128)
    h = jnp.dot(feat.astype(jnp.bfloat16), w1_ref[...],
                preferred_element_type=jnp.float32)
    h = jnp.maximum(h + b1_ref[...], 0.0)
    y = jnp.dot(h.astype(jnp.bfloat16), w2_ref[...],
                preferred_element_type=jnp.float32)
    # bf16 writeback: halves the dominant HBM byte term; 128-wide lane-dense.
    o_ref[...] = (y + b2_ref[...]).astype(o_ref.dtype)


def fused_stem_proj(pix, params):
    """pix: (N, 3) f32 pixels of all levels/batches -> padded (N_pad, PROJ_DIM) bf16.

    Returns the PADDED output (no trailing-slice copy); callers only read
    rows < N via per-level offsets, so the pad rows are never touched.
    """
    n, c = pix.shape
    tm_max = _max_tile_rows()
    steps = max(1, pl.cdiv(n, tm_max))
    if steps % 2:               # v7x: 2 TCs shard the 'parallel' axis -> even grid
        steps += 1
    tm = ((pl.cdiv(n, steps) + 7) // 8) * 8
    n_pad = steps * tm

    # pad rows to n_pad and channels 3 -> STEM_K (zeros), cast to bf16 for MXU
    pix8 = jnp.pad(pix, ((0, n_pad - n), (0, STEM_K - c))).astype(jnp.bfloat16)

    out = pl.pallas_call(
        _fused_encoder_kernel,
        out_shape=jax.ShapeDtypeStruct((n_pad, PROJ_DIM), jnp.bfloat16),
        grid_spec=pltpu.PrefetchScalarGridSpec(
            num_scalar_prefetch=0,
            grid=(steps,),
            in_specs=[
                pl.BlockSpec((tm, STEM_K), lambda i: (i, 0)),
                # grid-invariant weights/biases: constant block index -> the
                # pipeline keeps them resident instead of re-DMA'ing per step.
                pl.BlockSpec((STEM_K, FPN_CHANNELS), lambda i: (0, 0)),
                pl.BlockSpec((1, FPN_CHANNELS), lambda i: (0, 0)),
                pl.BlockSpec((FPN_CHANNELS, HIDDEN), lambda i: (0, 0)),
                pl.BlockSpec((1, HIDDEN), lambda i: (0, 0)),
                pl.BlockSpec((HIDDEN, PROJ_DIM), lambda i: (0, 0)),
                pl.BlockSpec((1, PROJ_DIM), lambda i: (0, 0)),
            ],
            out_specs=pl.BlockSpec((tm, PROJ_DIM), lambda i: (i, 0)),
        ),
        compiler_params=pltpu.CompilerParams(
            dimension_semantics=("parallel",)),
    )(pix8,
      params["stem_w"], params["stem_b"].reshape(1, FPN_CHANNELS),
      params["w1"], params["b1"].reshape(1, HIDDEN),
      params["w2"], params["b2"].reshape(1, PROJ_DIM))
    return out


# ----------------------------------------------------------------------------
# FPNEncoder.forward (fully device-side, one jit, zero host syncs)
# ----------------------------------------------------------------------------
def _avg_pool_nhwc(x_nhwc, k):
    b, h, w, c = x_nhwc.shape
    return x_nhwc.reshape(b, h // k, k, w // k, k, c).mean(axis=(2, 4))


@jax.jit
def fpn_encoder_forward(params, x, crop_coords, rng_key):
    """x: (B, 3, H, W) f32 NCHW; crop_coords: (B, 4) = (y, x, h, w) in pixels."""
    B, C, H, W = x.shape

    # ---- synthetic multi-scale backbone stand-in (hierarchical avg-pool) ----
    # Single NCHW->NHWC transpose, then all levels stay NHWC: the per-level
    # pixel rows are plain reshapes (no extra transpose/copy passes).
    x_nhwc = jnp.transpose(x, (0, 2, 3, 1))
    pooled = [_avg_pool_nhwc(x_nhwc, FPN_LEVELS[0][1])]
    for idx in range(1, len(FPN_LEVELS)):
        pooled.append(_avg_pool_nhwc(pooled[-1],
                                     FPN_LEVELS[idx][1] // FPN_LEVELS[idx - 1][1]))
    level_hw = [(p.shape[1], p.shape[2]) for p in pooled]

    # rows ordered (level, b, y, x) -- matches flat index y*w + x used below
    pix = jnp.concatenate([p.reshape(-1, C) for p in pooled], axis=0)

    # ---- ONE fused Pallas call: stem + proj head for every level ------------
    proj_flat = fused_stem_proj(pix, params)          # (N_pad, PROJ_DIM) bf16

    # ---- device-side positive / negative feature sampling -------------------
    cx = crop_coords[:, 1] + crop_coords[:, 3] * 0.5
    cy = crop_coords[:, 0] + crop_coords[:, 2] * 0.5
    level_keys = jax.random.split(rng_key, len(level_hw))
    batch_idx = jnp.arange(B)

    pos_levels, neg_levels = [], []
    offset = 0
    for li, (h, w) in enumerate(level_hw):
        P = h * w
        proj_lvl = proj_flat[offset: offset + B * P].reshape(B, P, PROJ_DIM)
        offset += B * P

        gy, gx = jnp.meshgrid(jnp.arange(h, dtype=jnp.float32),
                              jnp.arange(w, dtype=jnp.float32), indexing="ij")
        scale = float(W) / float(h)       # same quirk as reference: img W / feat H
        gxf = (gx * scale).reshape(-1)
        gyf = (gy * scale).reshape(-1)
        dx = gxf[None, :] - cx[:, None]
        dy = gyf[None, :] - cy[:, None]
        d = dx * dx + dy * dy                                  # (B, P)

        d_min = jnp.min(d, axis=1)
        min_idx = jnp.argmin(d, axis=1)                        # (B,)
        pos_levels.append(proj_lvl[batch_idx, min_idx].astype(jnp.float32))

        # negatives: random subset of {d > 2*d_min}; with-replacement fallback
        # when fewer than NUM_ANCHORS valid points (matches reference branches).
        # TODO(synk): RNG uses jax.random, not torch.randperm/randint semantics;
        # count == 0 (which would raise in the torch reference) degenerates to an
        # arbitrary grid point here.
        mask = d > (2.0 * d_min)[:, None]                      # (B, P)
        count = jnp.sum(mask, axis=1)                          # (B,) int32
        k = min(NUM_ANCHORS, P)
        ku, kr = jax.random.split(level_keys[li])
        noise = jax.random.uniform(ku, (B, P))
        scores = jnp.where(mask, noise, -1.0)
        _, cand = jax.lax.top_k(scores, k)     # (B, k): valid-first, random order
        cnt_sel = jnp.maximum(jnp.minimum(count, k), 1)
        r = jnp.floor(jax.random.uniform(kr, (B, NUM_ANCHORS)) *
                      cnt_sel[:, None].astype(jnp.float32)).astype(jnp.int32)
        r = jnp.minimum(r, cnt_sel[:, None] - 1)
        with_repl = jnp.take_along_axis(cand, r, axis=1)       # (B, NUM_ANCHORS)
        if k == NUM_ANCHORS:
            neg_idx = jnp.where((count >= NUM_ANCHORS)[:, None], cand, with_repl)
        else:
            neg_idx = with_repl
        neg_levels.append(
            proj_lvl[batch_idx[:, None], neg_idx].astype(jnp.float32))  # (B, A, D)

    # same stack/view ordering as the reference (level-major, batch-minor rows)
    pos = jnp.stack(pos_levels, axis=0)                 # (L, B, D)
    z_j = jnp.mean(pos.reshape(B, -1, PROJ_DIM), axis=1)
    neg = jnp.stack(neg_levels, axis=0)                 # (L, B, A, D)
    z_a = jnp.mean(neg.reshape(B, -1, NUM_ANCHORS, PROJ_DIM), axis=1)
    return z_j, z_a


# ----------------------------------------------------------------------------
# Deterministic parameter init (shapes from the module's __init__)
# ----------------------------------------------------------------------------
def init_params(key):
    ks = jax.random.split(key, 6)
    # backbone stand-in: 1x1 conv 3 -> 256, K zero-padded to STEM_K=8 for MXU
    stem_w3 = 0.1 * jax.random.normal(ks[0], (IN_CHANNELS, FPN_CHANNELS),
                                      jnp.float32)
    stem_w = jnp.zeros((STEM_K, FPN_CHANNELS), jnp.float32)
    stem_w = stem_w.at[:IN_CHANNELS].set(stem_w3)
    return {
        "stem_w": stem_w.astype(jnp.bfloat16),
        "stem_b": 0.01 * jax.random.normal(ks[1], (FPN_CHANNELS,), jnp.float32),
        # proj_head: Conv2d(256,512,1) -> ReLU -> Conv2d(512,proj_dim,1)
        # matmul weights stored in bf16 (f32 accumulation inside the kernel)
        "w1": (0.05 * jax.random.normal(ks[2], (FPN_CHANNELS, HIDDEN),
                                        jnp.float32)).astype(jnp.bfloat16),
        "b1": 0.01 * jax.random.normal(ks[3], (HIDDEN,), jnp.float32),
        "w2": (0.05 * jax.random.normal(ks[4], (HIDDEN, PROJ_DIM),
                                        jnp.float32)).astype(jnp.bfloat16),
        "b2": 0.01 * jax.random.normal(ks[5], (PROJ_DIM,), jnp.float32),
    }


if __name__ == "__main__":
    key = jax.random.PRNGKey(0)
    pkey, xkey, skey = jax.random.split(key, 3)
    params = init_params(pkey)

    B, C, H, W = 2, 3, 128, 128      # H, W divisible by the max FPN stride (64)
    x = jax.random.normal(xkey, (B, C, H, W), jnp.float32)
    # crop_coords rows are (y, x, h, w) in image pixels
    crop_coords = jnp.array([[20.0, 30.0, 40.0, 50.0],
                             [60.0, 10.0, 30.0, 30.0]], dtype=jnp.float32)

    z_j, z_a = fpn_encoder_forward(params, x, crop_coords, skey)
    jax.block_until_ready((z_j, z_a))
    assert z_j.shape == (B, PROJ_DIM)
    assert z_a.shape == (B, NUM_ANCHORS, PROJ_DIM)
    print("KERNEL_OK")
</pallas_src>

<mosaic_0001>
module attributes {stable_mosaic.version = 11 : i64} {
  func.func @_fused_encoder_kernel(%arg0: i32, %arg1: memref<688x8xbf16, #tpu.memory_space<vmem>>, %arg2: memref<8x256xbf16, #tpu.memory_space<vmem>>, %arg3: memref<1x256xf32, #tpu.memory_space<vmem>>, %arg4: memref<256x512xbf16, #tpu.memory_space<vmem>>, %arg5: memref<1x512xf32, #tpu.memory_space<vmem>>, %arg6: memref<512x128xbf16, #tpu.memory_space<vmem>>, %arg7: memref<1x128xf32, #tpu.memory_space<vmem>>, %arg8: memref<688x128xbf16, #tpu.memory_space<vmem>>) attributes {dimension_semantics = [#tpu.dimension_semantics<parallel>], iteration_bounds = array<i64: 4>, scalar_prefetch = 0 : i64, scratch_operands = 0 : i64, tpu.core_type = #tpu.core_type<tc>, window_params = [{transform_indices = @transform_0, window_bounds = array<i64: 688, 8>}, {pipeline_mode = #tpu.pipeline_mode<synchronous>, transform_indices = @transform_1, window_bounds = array<i64: 8, 256>}, {pipeline_mode = #tpu.pipeline_mode<synchronous>, transform_indices = @transform_2, window_bounds = array<i64: 1, 256>}, {pipeline_mode = #tpu.pipeline_mode<synchronous>, transform_indices = @transform_3, window_bounds = array<i64: 256, 512>}, {pipeline_mode = #tpu.pipeline_mode<synchronous>, transform_indices = @transform_4, window_bounds = array<i64: 1, 512>}, {pipeline_mode = #tpu.pipeline_mode<synchronous>, transform_indices = @transform_5, window_bounds = array<i64: 512, 128>}, {pipeline_mode = #tpu.pipeline_mode<synchronous>, transform_indices = @transform_6, window_bounds = array<i64: 1, 128>}, {transform_indices = @transform_7, window_bounds = array<i64: 688, 128>}]} {
    %c0 = arith.constant 0 : index
    %c0_0 = arith.constant 0 : index
    %0 = vector.load %arg1[%c0, %c0_0] : memref<688x8xbf16, #tpu.memory_space<vmem>>, vector<688x8xbf16>
    %c0_1 = arith.constant 0 : index
    %c0_2 = arith.constant 0 : index
    %1 = vector.load %arg2[%c0_1, %c0_2] : memref<8x256xbf16, #tpu.memory_space<vmem>>, vector<8x256xbf16>
    %cst = arith.constant dense<0.000000e+00> : vector<688x256xf32>
    %2 = tpu.matmul %0, %1, %cst {dimension_numbers = #tpu.dot_dimension_numbers<[1], [0], [0], [1], [0, 0, 1, 1], [], []>} : vector<688x8xbf16>, vector<8x256xbf16>, vector<688x256xf32> -> vector<688x256xf32>
    %c0_3 = arith.constant 0 : index
    %c0_4 = arith.constant 0 : index
    %3 = vector.load %arg3[%c0_3, %c0_4] : memref<1x256xf32, #tpu.memory_space<vmem>>, vector<1x256xf32>
    %4 = vector.broadcast %3 : vector<1x256xf32> to vector<688x256xf32>
    %5 = arith.addf %2, %4 : vector<688x256xf32>
    %cst_5 = arith.constant 0.000000e+00 : f32
    %6 = vector.broadcast %cst_5 : f32 to vector<688x256xf32>
    %7 = arith.maximumf %5, %6 : vector<688x256xf32>
    %8 = arith.truncf %7 : vector<688x256xf32> to vector<688x256xbf16>
    %c0_6 = arith.constant 0 : index
    %c0_7 = arith.constant 0 : index
    %9 = vector.load %arg4[%c0_6, %c0_7] : memref<256x512xbf16, #tpu.memory_space<vmem>>, vector<256x512xbf16>
    %cst_8 = arith.constant dense<0.000000e+00> : vector<688x512xf32>
    %10 = tpu.matmul %8, %9, %cst_8 {dimension_numbers = #tpu.dot_dimension_numbers<[1], [0], [0], [1], [0, 0, 1, 1], [], []>} : vector<688x256xbf16>, vector<256x512xbf16>, vector<688x512xf32> -> vector<688x512xf32>
    %c0_9 = arith.constant 0 : index
    %c0_10 = arith.constant 0 : index
    %11 = vector.load %arg5[%c0_9, %c0_10] : memref<1x512xf32, #tpu.memory_space<vmem>>, vector<1x512xf32>
    %12 = vector.broadcast %11 : vector<1x512xf32> to vector<688x512xf32>
    %13 = arith.addf %10, %12 : vector<688x512xf32>
    %cst_11 = arith.constant 0.000000e+00 : f32
    %14 = vector.broadcast %cst_11 : f32 to vector<688x512xf32>
    %15 = arith.maximumf %13, %14 : vector<688x512xf32>
    %16 = arith.truncf %15 : vector<688x512xf32> to vector<688x512xbf16>
    %c0_12 = arith.constant 0 : index
    %c0_13 = arith.constant 0 : index
    %17 = vector.load %arg6[%c0_12, %c0_13] : memref<512x128xbf16, #tpu.memory_space<vmem>>, vector<512x128xbf16>
    %cst_14 = arith.constant dense<0.000000e+00> : vector<688x128xf32>
    %18 = tpu.matmul %16, %17, %cst_14 {dimension_numbers = #tpu.dot_dimension_numbers<[1], [0], [0], [1], [0, 0, 1, 1], [], []>} : vector<688x512xbf16>, vector<512x128xbf16>, vector<688x128xf32> -> vector<688x128xf32>
    %c0_15 = arith.constant 0 : index
    %c0_16 = arith.constant 0 : index
    %19 = vector.load %arg7[%c0_15, %c0_16] : memref<1x128xf32, #tpu.memory_space<vmem>>, vector<1x128xf32>
    %20 = vector.broadcast %19 : vector<1x128xf32> to vector<688x128xf32>
    %21 = arith.addf %18, %20 : vector<688x128xf32>
    %22 = arith.truncf %21 : vector<688x128xf32> to vector<688x128xbf16>
    %c0_17 = arith.constant 0 : index
    %c0_18 = arith.constant 0 : index
    %23 = vector.load %arg8[%c0_17, %c0_18] : memref<688x128xbf16, #tpu.memory_space<vmem>>, vector<688x128xbf16>
    tpu.vector_store %arg8[%c0_17, %c0_18], %22 {strides = array<i32>} : memref<688x128xbf16, #tpu.memory_space<vmem>>, vector<688x128xbf16>,
    return
  }
  func.func @transform_0(%arg0: i32) -> (i32, i32) {
    %c0_i32 = arith.constant 0 : i32
    %c0_i32_0 = arith.constant 0 : i32
    return %arg0, %c0_i32 : i32, i32
  }
  func.func @transform_1(%arg0: i32) -> (i32, i32) {
    %c0_i32 = arith.constant 0 : i32
    %c0_i32_0 = arith.constant 0 : i32
    %c0_i32_1 = arith.constant 0 : i32
    return %c0_i32, %c0_i32_0 : i32, i32
  }
  func.func @transform_2(%arg0: i32) -> (i32, i32) {
    %c0_i32 = arith.constant 0 : i32
    %c0_i32_0 = arith.constant 0 : i32
    %c0_i32_1 = arith.constant 0 : i32
    return %c0_i32, %c0_i32_0 : i32, i32
  }
  func.func @transform_3(%arg0: i32) -> (i32, i32) {
    %c0_i32 = arith.constant 0 : i32
    %c0_i32_0 = arith.constant 0 : i32
    %c0_i32_1 = arith.constant 0 : i32
    return %c0_i32, %c0_i32_0 : i32, i32
  }
  func.func @transform_4(%arg0: i32) -> (i32, i32) {
    %c0_i32 = arith.constant 0 : i32
    %c0_i32_0 = arith.constant 0 : i32
    %c0_i32_1 = arith.constant 0 : i32
    return %c0_i32, %c0_i32_0 : i32, i32
  }
  func.func @transform_5(%arg0: i32) -> (i32, i32) {
    %c0_i32 = arith.constant 0 : i32
    %c0_i32_0 = arith.constant 0 : i32
    %c0_i32_1 = arith.constant 0 : i32
    return %c0_i32, %c0_i32_0 : i32, i32
  }
  func.func @transform_6(%arg0: i32) -> (i32, i32) {
    %c0_i32 = arith.constant 0 : i32
    %c0_i32_0 = arith.constant 0 : i32
    %c0_i32_1 = arith.constant 0 : i32
    return %c0_i32, %c0_i32_0 : i32, i32
  }
  func.func @transform_7(%arg0: i32) -> (i32, i32) {
    %c0_i32 = arith.constant 0 : i32
    %c0_i32_0 = arith.constant 0 : i32
    return %arg0, %c0_i32 : i32, i32
  }
}

</mosaic_0001>

<llo_original>
// kernel: sub.115
$region0: #{sub.115}
  %s0 = inlined_call_operand.vmem [shape: f32[32,32], index: 0, kind: input, shape index: {}]
  %s1 = inlined_call_operand.vmem [shape: f32[1024], index: 1, kind: output, shape index: {}]
  %v2 = vld [vmem:[%s0] ss:$4 sm:$0xff]
  %vm3 = vcmask 261120
  %4 = vst.msk [vmem:[%s1] sm:$0xff] %vm3, %v2
  %s5 = scalar_lea.vmem %s0, 3
  %v6 = vld [vmem:[%s5] ss:$4 sm:$0xff]
  %7 = vrot.lane.b32.xlu0 %v6, 96
  %v8 = vpop.permute.xlu0 %7
  %vm9 = vcmask 1048320
  %10 = vst.msk [vmem:[%s1] sm:$0xff] %vm9, %v8
  %s11 = scalar_lea.vmem %s0, 2
  %v12 = vld [vmem:[%s11] ss:$4 sm:$0xff]
  %13 = vrot.lane.b32.xlu0 %v12, 64
  %v14 = vpop.permute.xlu0 %13
  %vm15 = vcmask 785920
  %16 = vst.msk [vmem:[%s1] sm:$0xff] %vm15, %v14
  %s17 = scalar_lea.vmem %s0, 1
  %v18 = vld [vmem:[%s17] ss:$4 sm:$0xff]
  %19 = vrot.lane.b32.xlu0 %v18, 32
  %v20 = vpop.permute.xlu0 %19
  %vm21 = vcmask 523520
  %22 = vst.msk [vmem:[%s1] sm:$0xff] %vm21, %v20

// kernel: sub.130
$region0: #{sub.130}
  %s0 = inlined_call_operand.vmem [shape: f32[16,16], index: 0, kind: input, shape index: {}]
  %s1 = inlined_call_operand.vmem [shape: f32[256], index: 1, kind: output, shape index: {}]
  $region1: #{sub.130} parent=0
    #allocation0 [shape = 'u8[4096]{0}', space=vmem, size = 0x1000, scoped, tag = 'scoped mem for output reshape']
    %s2 = smov 3
    %v3 = vld [vmem:[%s0] ss:$8 sm:%s2]
    %vm4 = vcmask 130048
    %5 = vst.msk [vmem:[#allocation0] sm:$0x3] %vm4, %v3
    %s6 = scalar_lea.vmem %s0, 7
    %s7 = smov 3
    %v8 = vld [vmem:[%s6] ss:$8 sm:%s7]
    %9 = vrot.lane.b32.xlu0 %v8, 112
    %v10 = vpop.permute.xlu0 %9
    %vm11 = vcmask 1048448
    %12 = vst.msk [vmem:[#allocation0] sm:$0x3] %vm11, %v10
    %s13 = scalar_lea.vmem %s0, 6
    %s14 = smov 3
    %v15 = vld [vmem:[%s13] ss:$8 sm:%s14]
    %16 = vrot.lane.b32.xlu0 %v15, 96
    %v17 = vpop.permute.xlu0 %16
    %vm18 = vcmask 917248
    %19 = vst.msk [vmem:[#allocation0] sm:$0x3] %vm18, %v17
    %s20 = scalar_lea.vmem %s0, 5
    %s21 = smov 3
    %v22 = vld [vmem:[%s20] ss:$8 sm:%s21]
    %23 = vrot.lane.b32.xlu0 %v22, 80
    %v24 = vpop.permute.xlu0 %23
    %vm25 = vcmask 786048
    %26 = vst.msk [vmem:[#allocation0] sm:$0x3] %vm25, %v24
    %s27 = scalar_lea.vmem %s0, 4
    %s28 = smov 3
    %v29 = vld [vmem:[%s27] ss:$8 sm:%s28]
    %30 = vrot.lane.b32.xlu0 %v29, 64
    %v31 = vpop.permute.xlu0 %30
    %vm32 = vcmask 654848
    %33 = vst.msk [vmem:[#allocation0] sm:$0x3] %vm32, %v31
    %s34 = scalar_lea.vmem %s0, 3
    %s35 = smov 3
    %v36 = vld [vmem:[%s34] ss:$8 sm:%s35]
    %37 = vrot.lane.b32.xlu0 %v36, 48
    %v38 = vpop.permute.xlu0 %37
    %vm39 = vcmask 523648
    %40 = vst.msk [vmem:[#allocation0] sm:$0x3] %vm39, %v38
    %s41 = scalar_lea.vmem %s0, 2
    %s42 = smov 3
    %v43 = vld [vmem:[%s41] ss:$8 sm:%s42]
    %44 = vrot.lane.b32.xlu0 %v43, 32
    %v45 = vpop.permute.xlu0 %44
    %vm46 = vcmask 392448
    %47 = vst.msk [vmem:[#allocation0] sm:$0x3] %vm46, %v45
    %s48 = scalar_lea.vmem %s0, 1
    %s49 = smov 3
    %v50 = vld [vmem:[%s48] ss:$8 sm:%s49]
    %51 = vrot.lane.b32.xlu0 %v50, 16
    %v52 = vpop.permute.xlu0 %51
    %vm53 = vcmask 261248
    %54 = vst.msk [vmem:[#allocation0] sm:$0x3] %vm53, %v52
    %s56 = ssub.s32 4, 1
    %v57 = vld [vmem:[#allocation0] sm:%s56]
    %s59 = ssub.s32 4, 1
    %60 = vst [vmem:[%s1] sm:%s59] %v57

// kernel: sub.145
$region0: #{sub.145}
  %s0 = inlined_call_operand.vmem [shape: f32[8,8], index: 0, kind: input, shape index: {}]
  %s1 = inlined_call_operand.vmem [shape: f32[64], index: 1, kind: output, shape index: {}]
  $region1: #{sub.145} parent=0
    #allocation0 [shape = 'u8[4096]{0}', space=vmem, size = 0x1000, scoped, tag = 'scoped mem for output reshape']
    %v2 = vld [vmem:[%s0] sm:$0x1]
    %vm3 = vcmask 64512
    %4 = vst.msk [vmem:[#allocation0] sm:$0x1] %vm3, %v2
    %s5 = scalar_lea.vmem %s0, 7
    %v6 = vld [vmem:[%s5] sm:$0x1]
    %7 = vrot.lane.b32.xlu0 %v6, 56
    %v8 = vpop.permute.xlu0 %7
    %vm9 = vcmask 523712
    %10 = vst.msk [vmem:[#allocation0] sm:$0x1] %vm9, %v8
    %s11 = scalar_lea.vmem %s0, 6
    %v12 = vld [vmem:[%s11] sm:$0x1]
    %13 = vrot.lane.b32.xlu0 %v12, 48
    %v14 = vpop.permute.xlu0 %13
    %vm15 = vcmask 458112
    %16 = vst.msk [vmem:[#allocation0] sm:$0x1] %vm15, %v14
    %s17 = scalar_lea.vmem %s0, 5
    %v18 = vld [vmem:[%s17] sm:$0x1]
    %19 = vrot.lane.b32.xlu0 %v18, 40
    %v20 = vpop.permute.xlu0 %19
    %vm21 = vcmask 392512
    %22 = vst.msk [vmem:[#allocation0] sm:$0x1] %vm21, %v20
    %s23 = scalar_lea.vmem %s0, 4
    %v24 = vld [vmem:[%s23] sm:$0x1]
    %25 = vrot.lane.b32.xlu0 %v24, 32
    %v26 = vpop.permute.xlu0 %25
    %vm27 = vcmask 326912
    %28 = vst.msk [vmem:[#allocation0] sm:$0x1] %vm27, %v26
    %s29 = scalar_lea.vmem %s0, 3
    %v30 = vld [vmem:[%s29] sm:$0x1]
    %31 = vrot.lane.b32.xlu0 %v30, 24
    %v32 = vpop.permute.xlu0 %31
    %vm33 = vcmask 261312
    %34 = vst.msk [vmem:[#allocation0] sm:$0x1] %vm33, %v32
    %s35 = scalar_lea.vmem %s0, 2
    %v36 = vld [vmem:[%s35] sm:$0x1]
    %37 = vrot.lane.b32.xlu0 %v36, 16
    %v38 = vpop.permute.xlu0 %37
    %vm39 = vcmask 195712
    %40 = vst.msk [vmem:[#allocation0] sm:$0x1] %vm39, %v38
    %s41 = scalar_lea.vmem %s0, 1
    %v42 = vld [vmem:[%s41] sm:$0x1]
    %43 = vrot.lane.b32.xlu0 %v42, 8
    %v44 = vpop.permute.xlu0 %43
    %vm45 = vcmask 130112
    %46 = vst.msk [vmem:[#allocation0] sm:$0x1] %vm45, %v44
    %s48 = ssub.s32 2, 1
    %v49 = vld [vmem:[#allocation0] sm:%s48]
    %s51 = ssub.s32 2, 1
    %52 = vst [vmem:[%s1] sm:%s51] %v49

// kernel: sub.160
$region0: #{sub.160}
  %s0 = inlined_call_operand.vmem [shape: f32[4,4], index: 0, kind: input, shape index: {}]
  %s1 = inlined_call_operand.vmem [shape: f32[16], index: 1, kind: output, shape index: {}]
  $region1: #{sub.160} parent=0
    #allocation0 [shape = 'u8[4096]{0}', space=vmem, size = 0x1000, scoped, tag = 'scoped mem for output reshape']
    #allocation1 [shape = 'u8[4096]{0}', space=vmem, size = 0x1000, scoped, tag = 'scoped mem for input reshape']
    %s3 = ssub.s32 16, 1
    %v4 = vld [vmem:[%s0] sm:%s3]
    %5 = vst [vmem:[#allocation1] sm:%s3] %v4
    %v6 = vld [vmem:[#allocation1] sm:$0x1]
    %vm7 = vcmask 31744
    %8 = vst.msk [vmem:[#allocation0] sm:$0x1] %vm7, %v6
    %s9 = scalar_lea.vmem [#allocation1], 3
    %v10 = vld [vmem:[%s9] sm:$0x1]
    %11 = vrot.lane.b32.xlu0 %v10, 12
    %v12 = vpop.permute.xlu0 %11
    %vm13 = vcmask 130144
    %14 = vst.msk [vmem:[#allocation0] sm:$0x1] %vm13, %v12
    %s15 = scalar_lea.vmem [#allocation1], 2
    %v16 = vld [vmem:[%s15] sm:$0x1]
    %17 = vrot.lane.b32.xlu0 %v16, 8
    %v18 = vpop.permute.xlu0 %17
    %vm19 = vcmask 97344
    %20 = vst.msk [vmem:[#allocation0] sm:$0x1] %vm19, %v18
    %s21 = scalar_lea.vmem [#allocation1], 1
    %v22 = vld [vmem:[%s21] sm:$0x1]
    %23 = vrot.lane.b32.xlu0 %v22, 4
    %v24 = vpop.permute.xlu0 %23
    %vm25 = vcmask 64544
    %26 = vst.msk [vmem:[#allocation0] sm:$0x1] %vm25, %v24
    %s28 = ssub.s32 2, 1
    %v29 = vld [vmem:[#allocation0] sm:%s28]
    %s31 = ssub.s32 2, 1
    %32 = vst [vmem:[%s1] sm:%s31] %v29

// kernel: sub.175
$region0: #{sub.175}
  %s0 = inlined_call_operand.vmem [shape: f32[2,2], index: 0, kind: input, shape index: {}]
  %s1 = inlined_call_operand.vmem [shape: f32[4], index: 1, kind: output, shape index: {}]
  $region1: #{sub.175} parent=0
    #allocation0 [shape = 'u8[4096]{0}', space=vmem, size = 0x1000, scoped, tag = 'scoped mem for output reshape']
    #allocation1 [shape = 'u8[4096]{0}', space=vmem, size = 0x1000, scoped, tag = 'scoped mem for input reshape']
    %s3 = ssub.s32 4, 1
    %v4 = vld [vmem:[%s0] sm:%s3]
    %5 = vst [vmem:[#allocation1] sm:%s3] %v4
    %v6 = vld [vmem:[#allocation1] sm:$0x1]
    %vm7 = vcmask 15360
    %8 = vst.msk [vmem:[#allocation0] sm:$0x1] %vm7, %v6
    %s9 = scalar_lea.vmem [#allocation1], 1
    %v10 = vld [vmem:[%s9] sm:$0x1]
    %11 = vrot.lane.b32.xlu0 %v10, 2
    %v12 = vpop.permute.xlu0 %11
    %vm13 = vcmask 31760
    %14 = vst.msk [vmem:[#allocation0] sm:$0x1] %vm13, %v12
    %s16 = ssub.s32 2, 1
    %v17 = vld [vmem:[#allocation0] sm:%s16]
    %s19 = ssub.s32 2, 1
    %20 = vst [vmem:[%s1] sm:%s19] %v17

// kernel: fpn_encoder_forward.3
$region0: #{fpn_encoder_forward.3}
  #allocation0 [shape = 'u32[]', space=smem, size = 0x4, offset = 0x4, fixed_abs, tag = 'smem constant byte address 0x4 - core index']
  #allocation1 [shape = 'u32[72,128]{1,0:T(1,128)}', space=vmem, size = 0x9000, scoped, tag = 'internal scratch']
  %s0 = inlined_call_operand.vmem [shape: bf16[2752,8], index: 0, kind: input, shape index: {}]
  %s1 = inlined_call_operand.vmem [shape: bf16[8,256], index: 1, kind: input, shape index: {}]
  %s2 = inlined_call_operand.vmem [shape: f32[1,256], index: 2, kind: input, shape index: {}]
  %s3 = inlined_call_operand.vmem [shape: bf16[256,512], index: 3, kind: input, shape index: {}]
  %s4 = inlined_call_operand.vmem [shape: f32[1,512], index: 4, kind: input, shape index: {}]
  %s5 = inlined_call_operand.vmem [shape: bf16[512,128], index: 5, kind: input, shape index: {}]
  %s6 = inlined_call_operand.vmem [shape: f32[1,128], index: 6, kind: input, shape index: {}]
  %s7 = inlined_call_operand.vmem [shape: bf16[2752,128], index: 7, kind: output, shape index: {}]
  %s8 = sld [smem:[#allocation0]]
  $region61: #{fpn_encoder_forward.3} parent=0
    _
  %s10 = ssub.s32 1, %s8
  %s11 = scalar_select 0, %s10, %s8
  loop: start=0, step=1, limit=6
  $region2: #{fpn_encoder_forward.3} parent=0 // loop_pre_header
    _
  $region3: #{fpn_encoder_forward.3} parent=0 // loop_header
    %s13 = sphi 0, %s17
    %p14 = scmp.ge.s32.totalorder %s13, 6
    %s23 = sphi 0, %s25
    %s26 = sphi 0, %s23
    %s27 = sphi 0, %s26
    %s43 = sphi 0, %s27
    %s47 = sphi 0, %s47
    %s49 = sphi 0, %s47
    %s50 = sphi 0, %s49
    %s64 = sphi 0, %s50
    %s68 = sphi 0, %s68
    %s70 = sphi 0, %s68
    %s71 = sphi 0, %s70
    %s85 = sphi 0, %s71
    %s89 = sphi 0, %s89
    %s91 = sphi 0, %s89
    %s92 = sphi 0, %s91
    %s106 = sphi 0, %s92
    %s110 = sphi 0, %s110
    %s112 = sphi 0, %s110
    %s113 = sphi 0, %s112
    %s127 = sphi 0, %s113
    %s131 = sphi 0, %s131
    %s133 = sphi 0, %s131
    %s134 = sphi 0, %s133
    %s148 = sphi 0, %s134
    %s152 = sphi 0, %s152
    %s154 = sphi 0, %s152
    %s155 = sphi 0, %s154
    %s169 = sphi 0, %s155
    %s175 = sphi 0, %s177
    %s178 = sphi 0, %s175
    %s179 = sphi 0, %s178
    %s195 = sphi 0, %s179
  $region4: #{fpn_encoder_forward.3} parent=0 // loop_header_branch
    %16 = sbr.rel (%p14) target = $region8
  $region5: #{fpn_encoder_forward.3} parent=0 // loop_body
    %s18 = ssub.s32 %s13, 1
    %s19 = ssub.s32 %s13, 2
    %s20 = sadd.s32 %s13, 1
    %s21 = ssub.s32 %s13, %s20
    %p22 = scmp.eq.s32.totalorder %s21, 0
    %s24 = sadd.s32 %s23, 1
    %s25 = scalar_select %p22, %s23, %s24
    %p28 = pneg %p22
    %p29 = scmp.eq.s32.totalorder %s13, 3
    %p30 = por %p28, %p29
    %p31 = scmp.ne.s32.totalorder %s23, %s26
    %p32 = scmp.eq.s32.totalorder %s13, 0
    %p33 = por %p31, %p32
    %p34 = scmp.ne.s32.totalorder %s23, %s26
    %p35 = scmp.eq.s32.totalorder %s18, 3
    %p36 = por %p34, %p35
    %p37 = scmp.ne.s32.totalorder %s26, %s27
    %p38 = scmp.eq.s32.totalorder %s18, 0
    %p39 = por %p37, %p38
    %p40 = scmp.ne.s32.totalorder %s26, %s27
    %p41 = scmp.eq.s32.totalorder %s19, 3
    %p42 = por %p40, %p41
    %p44 = scmp.ne.s32.totalorder %s27, %s43
    %p45 = scmp.eq.s32.totalorder %s19, 0
    %p46 = por %p44, %p45
    %s48 = sadd.s32 %s47, 1
    %p51 = scmp.eq.s32.totalorder %s13, 3
    %p52 = scmp.ne.s32.totalorder %s47, %s49
    %p53 = scmp.eq.s32.totalorder %s13, 0
    %p54 = por %p52, %p53
    %p55 = scmp.ne.s32.totalorder %s47, %s49
    %p56 = scmp.eq.s32.totalorder %s18, 3
    %p57 = por %p55, %p56
    %p58 = scmp.ne.s32.totalorder %s49, %s50
    %p59 = scmp.eq.s32.totalorder %s18, 0
    %p60 = por %p58, %p59
    %p61 = scmp.ne.s32.totalorder %s49, %s50
    %p62 = scmp.eq.s32.totalorder %s19, 3
    %p63 = por %p61, %p62
    %p65 = scmp.ne.s32.totalorder %s50, %s64
    %p66 = scmp.eq.s32.totalorder %s19, 0
    %p67 = por %p65, %p66
    %s69 = sadd.s32 %s68, 1
    %p72 = scmp.eq.s32.totalorder %s13, 3
    %p73 = scmp.ne.s32.totalorder %s68, %s70
    %p74 = scmp.eq.s32.totalorder %s13, 0
    %p75 = por %p73, %p74
    %p76 = scmp.ne.s32.totalorder %s68, %s70
    %p77 = scmp.eq.s32.totalorder %s18, 3
    %p78 = por %p76, %p77
    %p79 = scmp.ne.s32.totalorder %s70, %s71
    %p80 = scmp.eq.s32.totalorder %s18, 0
    %p81 = por %p79, %p80
    %p82 = scmp.ne.s32.totalorder %s70, %s71
    %p83 = scmp.eq.s32.totalorder %s19, 3
    %p84 = por %p82, %p83
    %p86 = scmp.ne.s32.totalorder %s71, %s85
    %p87 = scmp.eq.s32.totalorder %s19, 0
    %p88 = por %p86, %p87
    %s90 = sadd.s32 %s89, 1
    %p93 = scmp.eq.s32.totalorder %s13, 3
    %p94 = scmp.ne.s32.totalorder %s89, %s91
    %p95 = scmp.eq.s32.totalorder %s13, 0
    %p96 = por %p94, %p95
    %p97 = scmp.ne.s32.totalorder %s89, %s91
    %p98 = scmp.eq.s32.totalorder %s18, 3
    %p99 = por %p97, %p98
    %p100 = scmp.ne.s32.totalorder %s91, %s92
    %p101 = scmp.eq.s32.totalorder %s18, 0
    %p102 = por %p100, %p101
    %p103 = scmp.ne.s32.totalorder %s91, %s92
    %p104 = scmp.eq.s32.totalorder %s19, 3
    %p105 = por %p103, %p104
    %p107 = scmp.ne.s32.totalorder %s92, %s106
    %p108 = scmp.eq.s32.totalorder %s19, 0
    %p109 = por %p107, %p108
    %s111 = sadd.s32 %s110, 1
    %p114 = scmp.eq.s32.totalorder %s13, 3
    %p115 = scmp.ne.s32.totalorder %s110, %s112
    %p116 = scmp.eq.s32.totalorder %s13, 0
    %p117 = por %p115, %p116
    %p118 = scmp.ne.s32.totalorder %s110, %s112
    %p119 = scmp.eq.s32.totalorder %s18, 3
    %p120 = por %p118, %p119
    %p121 = scmp.ne.s32.totalorder %s112, %s113
    %p122 = scmp.eq.s32.totalorder %s18, 0
    %p123 = por %p121, %p122
    %p124 = scmp.ne.s32.totalorder %s112, %s113
    %p125 = scmp.eq.s32.totalorder %s19, 3
    %p126 = por %p124, %p125
    %p128 = scmp.ne.s32.totalorder %s113, %s127
    %p129 = scmp.eq.s32.totalorder %s19, 0
    %p130 = por %p128, %p129
    %s132 = sadd.s32 %s131, 1
    %p135 = scmp.eq.s32.totalorder %s13, 3
    %p136 = scmp.ne.s32.totalorder %s131, %s133
    %p137 = scmp.eq.s32.totalorder %s13, 0
    %p138 = por %p136, %p137
    %p139 = scmp.ne.s32.totalorder %s131, %s133
    %p140 = scmp.eq.s32.totalorder %s18, 3
    %p141 = por %p139, %p140
    %p142 = scmp.ne.s32.totalorder %s133, %s134
    %p143 = scmp.eq.s32.totalorder %s18, 0
    %p144 = por %p142, %p143
    %p145 = scmp.ne.s32.totalorder %s133, %s134
    %p146 = scmp.eq.s32.totalorder %s19, 3
    %p147 = por %p145, %p146
    %p149 = scmp.ne.s32.totalorder %s134, %s148
    %p150 = scmp.eq.s32.totalorder %s19, 0
    %p151 = por %p149, %p150
    %s153 = sadd.s32 %s152, 1
    %p156 = scmp.eq.s32.totalorder %s13, 3
    %p157 = scmp.ne.s32.totalorder %s152, %s154
    %p158 = scmp.eq.s32.totalorder %s13, 0
    %p159 = por %p157, %p158
    %p160 = scmp.ne.s32.totalorder %s152, %s154
    %p161 = scmp.eq.s32.totalorder %s18, 3
    %p162 = por %p160, %p161
    %p163 = scmp.ne.s32.totalorder %s154, %s155
    %p164 = scmp.eq.s32.totalorder %s18, 0
    %p165 = por %p163, %p164
    %p166 = scmp.ne.s32.totalorder %s154, %s155
    %p167 = scmp.eq.s32.totalorder %s19, 3
    %p168 = por %p166, %p167
    %p170 = scmp.ne.s32.totalorder %s155, %s169
    %p171 = scmp.eq.s32.totalorder %s19, 0
    %p172 = por %p170, %p171
    %s173 = ssub.s32 %s13, %s20
    %p174 = scmp.eq.s32.totalorder %s173, 0
    %s176 = sadd.s32 %s175, 1
    %s177 = scalar_select %p174, %s175, %s176
    %p180 = pneg %p174
    %p181 = scmp.eq.s32.totalorder %s13, 3
    %p182 = por %p180, %p181
    %p183 = scmp.ne.s32.totalorder %s175, %s178
    %p184 = scmp.eq.s32.totalorder %s13, 0
    %p185 = por %p183, %p184
    %p186 = scmp.ne.s32.totalorder %s175, %s178
    %p187 = scmp.eq.s32.totalorder %s18, 3
    %p188 = por %p186, %p187
    %p189 = scmp.ne.s32.totalorder %s178, %s179
    %p190 = scmp.eq.s32.totalorder %s18, 0
    %p191 = por %p189, %p190
    %p192 = scmp.ne.s32.totalorder %s178, %s179
    %p193 = scmp.eq.s32.totalorder %s19, 3
    %p194 = por %p192, %p193
    %p196 = scmp.ne.s32.totalorder %s179, %s195
    %p197 = scmp.eq.s32.totalorder %s19, 0
    %p198 = por %p196, %p197
    %p199 = scmp.le.s32.totalorder 1, %s13
    %p200 = scmp.lt.s32.totalorder %s13, 5
    %p201 = pnand %p199, %p200
    %p202 = pneg %p201
    // Predicated region
    $region9: #{fpn_encoder_forward.3} parent=5 // pred_check
      _
    $region10: #{fpn_encoder_forward.3} parent=5 // pred_check_branch
      %204 = sbr.rel (%p201) target = $region12
    $region11: #{fpn_encoder_forward.3} parent=5 // pred_region
      %s205 = ssub.s32 %s13, 1
      // Predicated region
      $region13: #{fpn_encoder_forward.3} parent=11 // pred_check
        %p206 = pneg %p60
      $region14: #{fpn_encoder_forward.3} parent=11 // pred_check_branch
        %208 = sbr.rel (%p206) target = $region16
      $region15: #{fpn_encoder_forward.3} parent=11 // pred_region
        _
      $region16: #{fpn_encoder_forward.3} parent=11 // pred_fallthru
        _
      // Predicated region
      $region17: #{fpn_encoder_forward.3} parent=11 // pred_check
        %p209 = pneg %p81
      $region18: #{fpn_encoder_forward.3} parent=11 // pred_check_branch
        %211 = sbr.rel (%p209) target = $region20
      $region19: #{fpn_encoder_forward.3} parent=11 // pred_region
        _
      $region20: #{fpn_encoder_forward.3} parent=11 // pred_fallthru
        _
      // Predicated region
      $region21: #{fpn_encoder_forward.3} parent=11 // pred_check
        %p212 = pneg %p102
      $region22: #{fpn_encoder_forward.3} parent=11 // pred_check_branch
        %214 = sbr.rel (%p212) target = $region24
      $region23: #{fpn_encoder_forward.3} parent=11 // pred_region
        _
      $region24: #{fpn_encoder_forward.3} parent=11 // pred_fallthru
        _
      // Predicated region
      $region25: #{fpn_encoder_forward.3} parent=11 // pred_check
        %p215 = pneg %p123
      $region26: #{fpn_encoder_forward.3} parent=11 // pred_check_branch
        %217 = sbr.rel (%p215) target = $region28
      $region27: #{fpn_encoder_forward.3} parent=11 // pred_region
        _
      $region28: #{fpn_encoder_forward.3} parent=11 // pred_fallthru
        _
      // Predicated region
      $region29: #{fpn_encoder_forward.3} parent=11 // pred_check
        %p218 = pneg %p144
      $region30: #{fpn_encoder_forward.3} parent=11 // pred_check_branch
        %220 = sbr.rel (%p218) target = $region32
      $region31: #{fpn_encoder_forward.3} parent=11 // pred_region
        _
      $region32: #{fpn_encoder_forward.3} parent=11 // pred_fallthru
        _
      // Predicated region
      $region33: #{fpn_encoder_forward.3} parent=11 // pred_check
        %p221 = pneg %p165
      $region34: #{fpn_encoder_forward.3} parent=11 // pred_check_branch
        %223 = sbr.rel (%p221) target = $region36
      $region35: #{fpn_encoder_forward.3} parent=11 // pred_region
        _
      $region36: #{fpn_encoder_forward.3} parent=11 // pred_fallthru
        _
    $region12: #{fpn_encoder_forward.3} parent=5 // pred_fallthru
      _
    %p224 = scmp.lt.s32.totalorder %s13, 4
    // Predicated region
    $region37: #{fpn_encoder_forward.3} parent=5 // pred_check
      %p225 = pneg %p224
    $region38: #{fpn_encoder_forward.3} parent=5 // pred_check_branch
      %227 = sbr.rel (%p225) target = $region40
    $region39: #{fpn_encoder_forward.3} parent=5 // pred_region
      // Predicated region
      $region41: #{fpn_encoder_forward.3} parent=39 // pred_check
        %p228 = pneg %p33
      $region42: #{fpn_encoder_forward.3} parent=39 // pred_check_branch
        %230 = sbr.rel (%p228) target = $region44
      $region43: #{fpn_encoder_forward.3} parent=39 // pred_region
        %s231 = smul.u32 86, %s13
        %p232 = scmp.lt.s32.totalorder %s231, 343
        %s233 = scalar_select %p232, %s231, 343
        %s234 = smul.addr %s233, 4
        %s235 = scalar_lea.vmem %s0, %s234
        %s236 = smul.u32 86, %s13
      $region44: #{fpn_encoder_forward.3} parent=39 // pred_fallthru
        _
    $region40: #{fpn_encoder_forward.3} parent=5 // pred_fallthru
      _
    %p237 = scmp.le.s32.totalorder 1, %s13
    %p238 = scmp.lt.s32.totalorder %s13, 5
    %p239 = pnand %p237, %p238
    %p240 = pneg %p239
    // Predicated region
    $region45: #{fpn_encoder_forward.3} parent=5 // pred_check
      _
    $region46: #{fpn_encoder_forward.3} parent=5 // pred_check_branch
      %242 = sbr.rel (%p239) target = $region48
    $region47: #{fpn_encoder_forward.3} parent=5 // pred_region
      %s243 = ssub.s32 %s13, 1
      %s244 = smul.u32 86, %s18
      %p245 = scmp.lt.s32.totalorder %s244, 343
      %s246 = scalar_select %p245, %s244, 343
      %s247 = smul.addr %s246, 4
      %s248 = scalar_lea.vmem %s0, %s247
      %p249 = pneg %p39
      %p250 = pneg %p36
      %p251 = pneg %p60
      %p252 = pneg %p57
      %p253 = pneg %p81
      %p254 = pneg %p78
      %p255 = pneg %p102
      %p256 = pneg %p99
      %p257 = pneg %p123
      %p258 = pneg %p120
      %p259 = pneg %p144
      %p260 = pneg %p141
      %p261 = pneg %p165
      %p262 = pneg %p162
      %p263 = pneg %p191
      %p264 = pneg %p188
      %s265 = smul.u32 86, %s18
      %p266 = scmp.lt.s32.totalorder %s265, 343
      %s267 = scalar_select %p266, %s265, 343
      %s268 = smul.addr %s267, 4
      %s269 = scalar_lea.vmem %s7, %s268
      %s270 = smul.u32 86, %s18
      %p271 = scmp.lt.s32.totalorder %s270, 343
      %s272 = scalar_select %p271, %s270, 343
      %s273 = smul.addr %s272, 4
      %s274 = scalar_lea.vmem %s0, %s273
      %s275 = smul.u32 86, %s18
      %s276 = smul.u32 86, %s18
      %p277 = scmp.lt.s32.totalorder %s276, 343
      %s278 = scalar_select %p277, %s276, 343
      %s279 = smul.addr %s278, 4
      %s280 = scalar_lea.vmem %s7, %s279
      %s281 = smul.u32 86, %s18
      %v283 = vld [vmem:[%s274] sm:$0xf]
      %v284 = vld [vmem:[%s274 + $0x4] sm:$0xf]
      %v285 = vld [vmem:[%s274 + $0x8] sm:$0xf]
      %v286 = vld [vmem:[%s274 + $0xc] sm:$0xf]
      %v287 = vld [vmem:[%s274 + $0x10] sm:$0xf]
      %v288 = vld [vmem:[%s274 + $0x14] sm:$0xf]
      %v289 = vld [vmem:[%s274 + $0x18] sm:$0xf]
      %v290 = vld [vmem:[%s274 + $0x1c] sm:$0xf]
      %v291 = vld [vmem:[%s274 + $0x20] sm:$0xf]
      %v292 = vld [vmem:[%s274 + $0x24] sm:$0xf]
      %v293 = vld [vmem:[%s274 + $0x28] sm:$0xf]
      %v294 = vld [vmem:[%s274 + $0x2c] sm:$0xf]
      %v295 = vld [vmem:[%s274 + $0x30] sm:$0xf]
      %v296 = vld [vmem:[%s274 + $0x34] sm:$0xf]
      %v297 = vld [vmem:[%s274 + $0x38] sm:$0xf]
      %v298 = vld [vmem:[%s274 + $0x3c] sm:$0xf]
      %v299 = vld [vmem:[%s274 + $0x40] sm:$0xf]
      %v300 = vld [vmem:[%s274 + $0x44] sm:$0xf]
      %v301 = vld [vmem:[%s274 + $0x48] sm:$0xf]
      %v302 = vld [vmem:[%s274 + $0x4c] sm:$0xf]
      %v303 = vld [vmem:[%s274 + $0x50] sm:$0xf]
      %v304 = vld [vmem:[%s274 + $0x54] sm:$0xf]
      %v305 = vld [vmem:[%s274 + $0x58] sm:$0xf]
      %v306 = vld [vmem:[%s274 + $0x5c] sm:$0xf]
      %v307 = vld [vmem:[%s274 + $0x60] sm:$0xf]
      %v308 = vld [vmem:[%s274 + $0x64] sm:$0xf]
      %v309 = vld [vmem:[%s274 + $0x68] sm:$0xf]
      %v310 = vld [vmem:[%s274 + $0x6c] sm:$0xf]
      %v311 = vld [vmem:[%s274 + $0x70] sm:$0xf]
      %v312 = vld [vmem:[%s274 + $0x74] sm:$0xf]
      %v313 = vld [vmem:[%s274 + $0x78] sm:$0xf]
      %v314 = vld [vmem:[%s274 + $0x7c] sm:$0xf]
      %v315 = vld [vmem:[%s274 + $0x80] sm:$0xf]
      %v316 = vld [vmem:[%s274 + $0x84] sm:$0xf]
      %v317 = vld [vmem:[%s274 + $0x88] sm:$0xf]
      %v318 = vld [vmem:[%s274 + $0x8c] sm:$0xf]
      %v319 = vld [vmem:[%s274 + $0x90] sm:$0xf]
      %v320 = vld [vmem:[%s274 + $0x94] sm:$0xf]
      %v321 = vld [vmem:[%s274 + $0x98] sm:$0xf]
      %v322 = vld [vmem:[%s274 + $0x9c] sm:$0xf]
      %v323 = vld [vmem:[%s274 + $0xa0] sm:$0xf]
      %v324 = vld [vmem:[%s274 + $0xa4] sm:$0xf]
      %v325 = vld [vmem:[%s274 + $0xa8] sm:$0xf]
      %v326 = vld [vmem:[%s274 + $0xac] sm:$0xf]
      %v327 = vld [vmem:[%s274 + $0xb0] sm:$0xf]
      %v328 = vld [vmem:[%s274 + $0xb4] sm:$0xf]
      %v329 = vld [vmem:[%s274 + $0xb8] sm:$0xf]
      %v330 = vld [vmem:[%s274 + $0xbc] sm:$0xf]
      %v331 = vld [vmem:[%s274 + $0xc0] sm:$0xf]
      %v332 = vld [vmem:[%s274 + $0xc4] sm:$0xf]
      %v333 = vld [vmem:[%s274 + $0xc8] sm:$0xf]
      %v334 = vld [vmem:[%s274 + $0xcc] sm:$0xf]
      %v335 = vld [vmem:[%s274 + $0xd0] sm:$0xf]
      %v336 = vld [vmem:[%s274 + $0xd4] sm:$0xf]
      %v337 = vld [vmem:[%s274 + $0xd8] sm:$0xf]
      %v338 = vld [vmem:[%s274 + $0xdc] sm:$0xf]
      %v339 = vld [vmem:[%s274 + $0xe0] sm:$0xf]
      %v340 = vld [vmem:[%s274 + $0xe4] sm:$0xf]
      %v341 = vld [vmem:[%s274 + $0xe8] sm:$0xf]
      %v342 = vld [vmem:[%s274 + $0xec] sm:$0xf]
      %v343 = vld [vmem:[%s274 + $0xf0] sm:$0xf]
      %v344 = vld [vmem:[%s274 + $0xf4] sm:$0xf]
      %v345 = vld [vmem:[%s274 + $0xf8] sm:$0xf]
      %v346 = vld [vmem:[%s274 + $0xfc] sm:$0xf]
      %v347 = vld [vmem:[%s274 + $0x100] sm:$0xf]
      %v348 = vld [vmem:[%s274 + $0x104] sm:$0xf]
      %v349 = vld [vmem:[%s274 + $0x108] sm:$0xf]
      %v350 = vld [vmem:[%s274 + $0x10c] sm:$0xf]
      %v351 = vld [vmem:[%s274 + $0x110] sm:$0xf]
      %v352 = vld [vmem:[%s274 + $0x114] sm:$0xf]
      %v353 = vld [vmem:[%s274 + $0x118] sm:$0xf]
      %v354 = vld [vmem:[%s274 + $0x11c] sm:$0xf]
      %v355 = vld [vmem:[%s274 + $0x120] sm:$0xf]
      %v356 = vld [vmem:[%s274 + $0x124] sm:$0xf]
      %v357 = vld [vmem:[%s274 + $0x128] sm:$0xf]
      %v358 = vld [vmem:[%s274 + $0x12c] sm:$0xf]
      %v359 = vld [vmem:[%s274 + $0x130] sm:$0xf]
      %v360 = vld [vmem:[%s274 + $0x134] sm:$0xf]
      %v361 = vld [vmem:[%s274 + $0x138] sm:$0xf]
      %v362 = vld [vmem:[%s274 + $0x13c] sm:$0xf]
      %v363 = vld [vmem:[%s274 + $0x140] sm:$0xf]
      %v364 = vld [vmem:[%s274 + $0x144] sm:$0xf]
      %v365 = vld [vmem:[%s274 + $0x148] sm:$0xf]
      %v366 = vld [vmem:[%s274 + $0x14c] sm:$0xf]
      %v367 = vld [vmem:[%s274 + $0x150] sm:$0xf]
      %v368 = vld [vmem:[%s274 + $0x154] sm:$0xf]
      %v369 = vld [vmem:[%s1] sm:$0xff]
      %v370 = vld [vmem:[%s2] sm:$0x3]
      %v372 = vperm.slane %v370, 0
      %v373 = vperm.slane %v370, 1
      %v462 = vunpack.c.l.b16 %v283
      %v463 = vunpack.c.l.b16 %v284
      %v464 = vunpack.c.l.b16 %v285
      %v465 = vunpack.c.l.b16 %v286
      %v466 = vunpack.c.l.b16 %v287
      %v467 = vunpack.c.l.b16 %v288
      %v468 = vunpack.c.l.b16 %v289
      %v469 = vunpack.c.l.b16 %v290
      %v470 = vunpack.c.l.b16 %v291
      %v471 = vunpack.c.l.b16 %v292
      %v472 = vunpack.c.l.b16 %v293
      %v473 = vunpack.c.l.b16 %v294
      %v474 = vunpack.c.l.b16 %v295
      %v475 = vunpack.c.l.b16 %v296
      %v476 = vunpack.c.l.b16 %v297
      %v477 = vunpack.c.l.b16 %v298
      %v478 = vunpack.c.l.b16 %v299
      %v479 = vunpack.c.l.b16 %v300
      %v480 = vunpack.c.l.b16 %v301
      %v481 = vunpack.c.l.b16 %v302
      %v482 = vunpack.c.l.b16 %v303
      %v483 = vunpack.c.l.b16 %v304
      %v484 = vunpack.c.l.b16 %v305
      %v485 = vunpack.c.l.b16 %v306
      %v486 = vunpack.c.l.b16 %v307
      %v487 = vunpack.c.l.b16 %v308
      %v488 = vunpack.c.l.b16 %v309
      %v489 = vunpack.c.l.b16 %v310
      %v490 = vunpack.c.l.b16 %v311
      %v491 = vunpack.c.l.b16 %v312
      %v492 = vunpack.c.l.b16 %v313
      %v493 = vunpack.c.l.b16 %v314
      %v494 = vunpack.c.l.b16 %v315
      %v495 = vunpack.c.l.b16 %v316
      %v496 = vunpack.c.l.b16 %v317
      %v497 = vunpack.c.l.b16 %v318
      %v498 = vunpack.c.l.b16 %v319
      %v499 = vunpack.c.l.b16 %v320
      %v500 = vunpack.c.l.b16 %v321
      %v501 = vunpack.c.l.b16 %v322
      %v502 = vunpack.c.l.b16 %v323
      %v503 = vunpack.c.l.b16 %v324
      %v504 = vunpack.c.l.b16 %v325
      %v505 = vunpack.c.l.b16 %v326
      %v506 = vunpack.c.l.b16 %v327
      %v507 = vunpack.c.l.b16 %v328
      %v508 = vunpack.c.l.b16 %v329
      %v509 = vunpack.c.l.b16 %v330
      %v510 = vunpack.c.l.b16 %v331
      %v511 = vunpack.c.l.b16 %v332
      %v512 = vunpack.c.l.b16 %v333
      %v513 = vunpack.c.l.b16 %v334
      %v514 = vunpack.c.l.b16 %v335
      %v515 = vunpack.c.l.b16 %v336
      %v516 = vunpack.c.l.b16 %v337
      %v517 = vunpack.c.l.b16 %v338
      %v518 = vunpack.c.l.b16 %v339
      %v519 = vunpack.c.l.b16 %v340
      %v520 = vunpack.c.l.b16 %v341
      %v521 = vunpack.c.l.b16 %v342
      %v522 = vunpack.c.l.b16 %v343
      %v523 = vunpack.c.l.b16 %v344
      %v524 = vunpack.c.l.b16 %v345
      %v525 = vunpack.c.l.b16 %v346
      %v526 = vunpack.c.l.b16 %v347
      %v527 = vunpack.c.l.b16 %v348
      %v528 = vunpack.c.l.b16 %v349
      %v529 = vunpack.c.l.b16 %v350
      %v530 = vunpack.c.l.b16 %v351
      %v531 = vunpack.c.l.b16 %v352
      %v532 = vunpack.c.l.b16 %v353
      %v533 = vunpack.c.l.b16 %v354
      %v534 = vunpack.c.l.b16 %v355
      %v535 = vunpack.c.l.b16 %v356
      %v536 = vunpack.c.l.b16 %v357
      %v537 = vunpack.c.l.b16 %v358
      %v538 = vunpack.c.l.b16 %v359
      %v539 = vunpack.c.l.b16 %v360
      %v540 = vunpack.c.l.b16 %v361
      %v541 = vunpack.c.l.b16 %v362
      %v542 = vunpack.c.l.b16 %v363
      %v543 = vunpack.c.l.b16 %v364
      %v544 = vunpack.c.l.b16 %v365
      %v545 = vunpack.c.l.b16 %v366
      %v546 = vunpack.c.l.b16 %v367
      %v547 = vunpack.c.l.b16 %v368
      %v548 = vpack.c.b16 %v463, %v462
      %v549 = vpack.c.b16 %v465, %v464
      %v550 = vpack.c.b16 %v467, %v466
      %v551 = vpack.c.b16 %v469, %v468
      %v552 = vpack.c.b16 %v471, %v470
      %v553 = vpack.c.b16 %v473, %v472
      %v554 = vpack.c.b16 %v475, %v474
      %v555 = vpack.c.b16 %v477, %v476
      %v556 = vpack.c.b16 %v479, %v478
      %v557 = vpack.c.b16 %v481, %v480
      %v558 = vpack.c.b16 %v483, %v482
      %v559 = vpack.c.b16 %v485, %v484
      %v560 = vpack.c.b16 %v487, %v486
      %v561 = vpack.c.b16 %v489, %v488
      %v562 = vpack.c.b16 %v491, %v490
      %v563 = vpack.c.b16 %v493, %v492
      %v564 = vpack.c.b16 %v495, %v494
      %v565 = vpack.c.b16 %v497, %v496
      %v566 = vpack.c.b16 %v499, %v498
      %v567 = vpack.c.b16 %v501, %v500
      %v568 = vpack.c.b16 %v503, %v502
      %v569 = vpack.c.b16 %v505, %v504
      %v570 = vpack.c.b16 %v507, %v506
      %v571 = vpack.c.b16 %v509, %v508
      %v572 = vpack.c.b16 %v511, %v510
      %v573 = vpack.c.b16 %v513, %v512
      %v574 = vpack.c.b16 %v515, %v514
      %v575 = vpack.c.b16 %v517, %v516
      %v576 = vpack.c.b16 %v519, %v518
      %v577 = vpack.c.b16 %v521, %v520
      %v578 = vpack.c.b16 %v523, %v522
      %v579 = vpack.c.b16 %v525, %v524
      %v580 = vpack.c.b16 %v527, %v526
      %v581 = vpack.c.b16 %v529, %v528
      %v582 = vpack.c.b16 %v531, %v530
      %v583 = vpack.c.b16 %v533, %v532
      %v584 = vpack.c.b16 %v535, %v534
      %v585 = vpack.c.b16 %v537, %v536
      %v586 = vpack.c.b16 %v539, %v538
      %v587 = vpack.c.b16 %v541, %v540
      %v588 = vpack.c.b16 %v543, %v542
      %v589 = vpack.c.b16 %v545, %v544
      %v590 = vpack.c.b16 %v547, %v546
      %v592 = vunpack.c.l.b16 %v369
      %v593 = vunpack.c.h.b16 %v369
      %v594 = vpack.c.b16 %v592, %v592
      %v595 = vpack.c.b16 %v593, %v593
      %vm596 = vcmask 64512
      %v598 = vsel %vm596, %v548, 0
      %v601 = vsel %vm596, %v549, 0
      %v604 = vsel %vm596, %v550, 0
      %v607 = vsel %vm596, %v551, 0
      %v610 = vsel %vm596, %v552, 0
      %v613 = vsel %vm596, %v553, 0
      %v616 = vsel %vm596, %v554, 0
      %v619 = vsel %vm596, %v555, 0
      %v622 = vsel %vm596, %v556, 0
      %v625 = vsel %vm596, %v557, 0
      %v628 = vsel %vm596, %v558, 0
      %v631 = vsel %vm596, %v559, 0
      %v634 = vsel %vm596, %v560, 0
      %v637 = vsel %vm596, %v561, 0
      %v640 = vsel %vm596, %v562, 0
      %v643 = vsel %vm596, %v563, 0
      %v646 = vsel %vm596, %v564, 0
      %v649 = vsel %vm596, %v565, 0
      %v652 = vsel %vm596, %v566, 0
      %v655 = vsel %vm596, %v567, 0
      %v658 = vsel %vm596, %v568, 0
      %v661 = vsel %vm596, %v569, 0
      %v664 = vsel %vm596, %v570, 0
      %v667 = vsel %vm596, %v571, 0
      %v670 = vsel %vm596, %v572, 0
      %v673 = vsel %vm596, %v573, 0
      %v676 = vsel %vm596, %v574, 0
      %v679 = vsel %vm596, %v575, 0
      %v682 = vsel %vm596, %v576, 0
      %v685 = vsel %vm596, %v577, 0
      %v688 = vsel %vm596, %v578, 0
      %v691 = vsel %vm596, %v579, 0
      %v694 = vsel %vm596, %v580, 0
      %v697 = vsel %vm596, %v581, 0
      %v700 = vsel %vm596, %v582, 0
      %v703 = vsel %vm596, %v583, 0
      %v706 = vsel %vm596, %v584, 0
      %v709 = vsel %vm596, %v585, 0
      %v712 = vsel %vm596, %v586, 0
      %v715 = vsel %vm596, %v587, 0
      %v718 = vsel %vm596, %v588, 0
      %v721 = vsel %vm596, %v589, 0
      %v724 = vsel %vm596, %v590, 0
      %vm726 = vcmask 1043456
      %v728 = vsel %vm726, %v594, 0
      %v731 = vsel %vm726, %v595, 0
      %733 = vmatpush.bf16.msra.mxu0 0
      %734 = vmatpush.bf16.msra.mxu0 0
      %735 = vmatpush.bf16.msra.mxu0 0
      %736 = vmatpush.bf16.msra.mxu0 0
      %737 = vmatpush.bf16.msra.mxu0 0
      %738 = vmatpush.bf16.msra.mxu0 0
      %739 = vmatpush.bf16.msra.mxu0 0
      %740 = vmatpush.bf16.msra.mxu0 %v728
      %741 = vmatmul.bf16.gmra.mxu0 %v598
      %v742 = vpop.f32.mrf.mxu0
      %v743 = vadd.f32 %v372, %v742
      %v744 = vpop.f32.mrf.mxu0
      %v745 = vadd.f32 %v372, %v744
      %746 = vmatmul.bf16.gmra.mxu0 %v601
      %v747 = vpop.f32.mrf.mxu0
      %v748 = vadd.f32 %v372, %v747
      %v749 = vpop.f32.mrf.mxu0
      %v750 = vadd.f32 %v372, %v749
      %751 = vmatmul.bf16.gmra.mxu0 %v604
      %v752 = vpop.f32.mrf.mxu0
      %v753 = vadd.f32 %v372, %v752
      %v754 = vpop.f32.mrf.mxu0
      %v755 = vadd.f32 %v372, %v754
      %756 = vmatmul.bf16.gmra.mxu0 %v607
      %v757 = vpop.f32.mrf.mxu0
      %v758 = vadd.f32 %v372, %v757
      %v759 = vpop.f32.mrf.mxu0
      %v760 = vadd.f32 %v372, %v759
      %761 = vmatmul.bf16.gmra.mxu0 %v610
      %v762 = vpop.f32.mrf.mxu0
      %v763 = vadd.f32 %v372, %v762
      %v764 = vpop.f32.mrf.mxu0
      %v765 = vadd.f32 %v372, %v764
      %766 = vmatmul.bf16.gmra.mxu0 %v613
      %v767 = vpop.f32.mrf.mxu0
      %v768 = vadd.f32 %v372, %v767
      %v769 = vpop.f32.mrf.mxu0
      %v770 = vadd.f32 %v372, %v769
      %771 = vmatmul.bf16.gmra.mxu0 %v616
      %v772 = vpop.f32.mrf.mxu0
      %v773 = vadd.f32 %v372, %v772
      %v774 = vpop.f32.mrf.mxu0
      %v775 = vadd.f32 %v372, %v774
      %776 = vmatmul.bf16.gmra.mxu0 %v619
      %v777 = vpop.f32.mrf.mxu0
      %v778 = vadd.f32 %v372, %v777
      %v779 = vpop.f32.mrf.mxu0
      %v780 = vadd.f32 %v372, %v779
      %781 = vmatmul.bf16.gmra.mxu0 %v622
      %v782 = vpop.f32.mrf.mxu0
      %v783 = vadd.f32 %v372, %v782
      %v784 = vpop.f32.mrf.mxu0
      %v785 = vadd.f32 %v372, %v784
      %786 = vmatmul.bf16.gmra.mxu0 %v625
      %v787 = vpop.f32.mrf.mxu0
      %v788 = vadd.f32 %v372, %v787
      %v789 = vpop.f32.mrf.mxu0
      %v790 = vadd.f32 %v372, %v789
      %791 = vmatmul.bf16.gmra.mxu0 %v628
      %v792 = vpop.f32.mrf.mxu0
      %v793 = vadd.f32 %v372, %v792
      %v794 = vpop.f32.mrf.mxu0
      %v795 = vadd.f32 %v372, %v794
      %796 = vmatmul.bf16.gmra.mxu0 %v631
      %v797 = vpop.f32.mrf.mxu0
      %v798 = vadd.f32 %v372, %v797
      %v799 = vpop.f32.mrf.mxu0
      %v800 = vadd.f32 %v372, %v799
      %801 = vmatmul.bf16.gmra.mxu0 %v634
      %v802 = vpop.f32.mrf.mxu0
      %v803 = vadd.f32 %v372, %v802
      %v804 = vpop.f32.mrf.mxu0
      %v805 = vadd.f32 %v372, %v804
      %806 = vmatmul.bf16.gmra.mxu0 %v637
      %v807 = vpop.f32.mrf.mxu0
      %v808 = vadd.f32 %v372, %v807
      %v809 = vpop.f32.mrf.mxu0
      %v810 = vadd.f32 %v372, %v809
      %811 = vmatmul.bf16.gmra.mxu0 %v640
      %v812 = vpop.f32.mrf.mxu0
      %v813 = vadd.f32 %v372, %v812
      %v814 = vpop.f32.mrf.mxu0
      %v815 = vadd.f32 %v372, %v814
      %816 = vmatmul.bf16.gmra.mxu0 %v643
      %v817 = vpop.f32.mrf.mxu0
      %v818 = vadd.f32 %v372, %v817
      %v819 = vpop.f32.mrf.mxu0
      %v820 = vadd.f32 %v372, %v819
      %821 = vmatmul.bf16.gmra.mxu0 %v646
      %v822 = vpop.f32.mrf.mxu0
      %v823 = vadd.f32 %v372, %v822
      %v824 = vpop.f32.mrf.mxu0
      %v825 = vadd.f32 %v372, %v824
      %826 = vmatmul.bf16.gmra.mxu0 %v649
      %v827 = vpop.f32.mrf.mxu0
      %v828 = vadd.f32 %v372, %v827
      %v829 = vpop.f32.mrf.mxu0
      %v830 = vadd.f32 %v372, %v829
      %831 = vmatmul.bf16.gmra.mxu0 %v652
      %v832 = vpop.f32.mrf.mxu0
      %v833 = vadd.f32 %v372, %v832
      %v834 = vpop.f32.mrf.mxu0
      %v835 = vadd.f32 %v372, %v834
      %836 = vmatmul.bf16.gmra.mxu0 %v655
      %v837 = vpop.f32.mrf.mxu0
      %v838 = vadd.f32 %v372, %v837
      %v839 = vpop.f32.mrf.mxu0
      %v840 = vadd.f32 %v372, %v839
      %841 = vmatmul.bf16.gmra.mxu0 %v658
      %v842 = vpop.f32.mrf.mxu0
      %v843 = vadd.f32 %v372, %v842
      %v844 = vpop.f32.mrf.mxu0
      %v845 = vadd.f32 %v372, %v844
      %846 = vmatmul.bf16.gmra.mxu0 %v661
      %v847 = vpop.f32.mrf.mxu0
      %v848 = vadd.f32 %v372, %v847
      %v849 = vpop.f32.mrf.mxu0
      %v850 = vadd.f32 %v372, %v849
      %851 = vmatmul.bf16.gmra.mxu0 %v664
      %v852 = vpop.f32.mrf.mxu0
      %v853 = vadd.f32 %v372, %v852
      %v854 = vpop.f32.mrf.mxu0
      %v855 = vadd.f32 %v372, %v854
      %856 = vmatmul.bf16.gmra.mxu0 %v667
      %v857 = vpop.f32.mrf.mxu0
      %v858 = vadd.f32 %v372, %v857
      %v859 = vpop.f32.mrf.mxu0
      %v860 = vadd.f32 %v372, %v859
      %861 = vmatmul.bf16.gmra.mxu0 %v670
      %v862 = vpop.f32.mrf.mxu0
      %v863 = vadd.f32 %v372, %v862
      %v864 = vpop.f32.mrf.mxu0
      %v865 = vadd.f32 %v372, %v864
      %866 = vmatmul.bf16.gmra.mxu0 %v673
      %v867 = vpop.f32.mrf.mxu0
      %v868 = vadd.f32 %v372, %v867
      %v869 = vpop.f32.mrf.mxu0
      %v870 = vadd.f32 %v372, %v869
      %871 = vmatmul.bf16.gmra.mxu0 %v676
      %v872 = vpop.f32.mrf.mxu0
      %v873 = vadd.f32 %v372, %v872
      %v874 = vpop.f32.mrf.mxu0
      %v875 = vadd.f32 %v372, %v874
      %876 = vmatmul.bf16.gmra.mxu0 %v679
      %v877 = vpop.f32.mrf.mxu0
      %v878 = vadd.f32 %v372, %v877
      %v879 = vpop.f32.mrf.mxu0
      %v880 = vadd.f32 %v372, %v879
      %881 = vmatmul.bf16.gmra.mxu0 %v682
      %v882 = vpop.f32.mrf.mxu0
      %v883 = vadd.f32 %v372, %v882
      %v884 = vpop.f32.mrf.mxu0
      %v885 = vadd.f32 %v372, %v884
      %886 = vmatmul.bf16.gmra.mxu0 %v685
      %v887 = vpop.f32.mrf.mxu0
      %v888 = vadd.f32 %v372, %v887
      %v889 = vpop.f32.mrf.mxu0
      %v890 = vadd.f32 %v372, %v889
      %891 = vmatmul.bf16.gmra.mxu0 %v688
      %v892 = vpop.f32.mrf.mxu0
      %v893 = vadd.f32 %v372, %v892
      %v894 = vpop.f32.mrf.mxu0
      %v895 = vadd.f32 %v372, %v894
      %896 = vmatmul.bf16.gmra.mxu0 %v691
      %v897 = vpop.f32.mrf.mxu0
      %v898 = vadd.f32 %v372, %v897
      %v899 = vpop.f32.mrf.mxu0
      %v900 = vadd.f32 %v372, %v899
      %901 = vmatmul.bf16.gmra.mxu0 %v694
      %v902 = vpop.f32.mrf.mxu0
      %v903 = vadd.f32 %v372, %v902
      %v904 = vpop.f32.mrf.mxu0
      %v905 = vadd.f32 %v372, %v904
      %906 = vmatmul.bf16.gmra.mxu0 %v697
      %v907 = vpop.f32.mrf.mxu0
      %v908 = vadd.f32 %v372, %v907
      %v909 = vpop.f32.mrf.mxu0
      %v910 = vadd.f32 %v372, %v909
      %911 = vmatmul.bf16.gmra.mxu0 %v700
      %v912 = vpop.f32.mrf.mxu0
      %v913 = vadd.f32 %v372, %v912
      %v914 = vpop.f32.mrf.mxu0
      %v915 = vadd.f32 %v372, %v914
      %916 = vmatmul.bf16.gmra.mxu0 %v703
      %v917 = vpop.f32.mrf.mxu0
      %v918 = vadd.f32 %v372, %v917
      %v919 = vpop.f32.mrf.mxu0
      %v920 = vadd.f32 %v372, %v919
      %921 = vmatmul.bf16.gmra.mxu0 %v706
      %v922 = vpop.f32.mrf.mxu0
      %v923 = vadd.f32 %v372, %v922
      %v924 = vpop.f32.mrf.mxu0
      %v925 = vadd.f32 %v372, %v924
      %926 = vmatmul.bf16.gmra.mxu0 %v709
      %v927 = vpop.f32.mrf.mxu0
      %v928 = vadd.f32 %v372, %v927
      %v929 = vpop.f32.mrf.mxu0
      %v930 = vadd.f32 %v372, %v929
      %931 = vmatmul.bf16.gmra.mxu0 %v712
      %v932 = vpop.f32.mrf.mxu0
      %v933 = vadd.f32 %v372, %v932
      %v934 = vpop.f32.mrf.mxu0
      %v935 = vadd.f32 %v372, %v934
      %936 = vmatmul.bf16.gmra.mxu0 %v715
      %v937 = vpop.f32.mrf.mxu0
      %v938 = vadd.f32 %v372, %v937
      %v939 = vpop.f32.mrf.mxu0
      %v940 = vadd.f32 %v372, %v939
      %941 = vmatmul.bf16.gmra.mxu0 %v718
      %v942 = vpop.f32.mrf.mxu0
      %v943 = vadd.f32 %v372, %v942
      %v944 = vpop.f32.mrf.mxu0
      %v945 = vadd.f32 %v372, %v944
      %946 = vmatmul.bf16.gmra.mxu0 %v721
      %v947 = vpop.f32.mrf.mxu0
      %v948 = vadd.f32 %v372, %v947
      %v949 = vpop.f32.mrf.mxu0
      %v950 = vadd.f32 %v372, %v949
      %951 = vmatmul.bf16.gmra.mxu0 %v724
      %v952 = vpop.f32.mrf.mxu0
      %v953 = vadd.f32 %v372, %v952
      %v954 = vpop.f32.mrf.mxu0
      %v955 = vadd.f32 %v372, %v954
      %956 = vdwg.mxu0
      %957 = vmatpush.bf16.msra.mxu0 0
      %958 = vmatpush.bf16.msra.mxu0 0
      %959 = vmatpush.bf16.msra.mxu0 0
      %960 = vmatpush.bf16.msra.mxu0 0
      %961 = vmatpush.bf16.msra.mxu0 0
      %962 = vmatpush.bf16.msra.mxu0 0
      %963 = vmatpush.bf16.msra.mxu0 0
      %964 = vmatpush.bf16.msra.mxu0 %v731
      %965 = vmatmul.bf16.gmra.mxu0 %v598
      %v966 = vpop.f32.mrf.mxu0
      %v967 = vadd.f32 %v373, %v966
      %v968 = vpop.f32.mrf.mxu0
      %v969 = vadd.f32 %v373, %v968
      %970 = vmatmul.bf16.gmra.mxu0 %v601
      %v971 = vpop.f32.mrf.mxu0
      %v972 = vadd.f32 %v373, %v971
      %v973 = vpop.f32.mrf.mxu0
      %v974 = vadd.f32 %v373, %v973
      %975 = vmatmul.bf16.gmra.mxu0 %v604
      %v976 = vpop.f32.mrf.mxu0
      %v977 = vadd.f32 %v373, %v976
      %v978 = vpop.f32.mrf.mxu0
      %v979 = vadd.f32 %v373, %v978
      %980 = vmatmul.bf16.gmra.mxu0 %v607
      %v981 = vpop.f32.mrf.mxu0
      %v982 = vadd.f32 %v373, %v981
      %v983 = vpop.f32.mrf.mxu0
      %v984 = vadd.f32 %v373, %v983
      %985 = vmatmul.bf16.gmra.mxu0 %v610
      %v986 = vpop.f32.mrf.mxu0
      %v987 = vadd.f32 %v373, %v986
      %v988 = vpop.f32.mrf.mxu0
      %v989 = vadd.f32 %v373, %v988
      %990 = vmatmul.bf16.gmra.mxu0 %v613
      %v991 = vpop.f32.mrf.mxu0
      %v992 = vadd.f32 %v373, %v991
      %v993 = vpop.f32.mrf.mxu0
      %v994 = vadd.f32 %v373, %v993
      %995 = vmatmul.bf16.gmra.mxu0 %v616
      %v996 = vpop.f32.mrf.mxu0
      %v997 = vadd.f32 %v373, %v996
      %v998 = vpop.f32.mrf.mxu0
      %v999 = vadd.f32 %v373, %v998
      %1000 = vmatmul.bf16.gmra.mxu0 %v619
      %v1001 = vpop.f32.mrf.mxu0
      %v1002 = vadd.f32 %v373, %v1001
      %v1003 = vpop.f32.mrf.mxu0
      %v1004 = vadd.f32 %v373, %v1003
      %1005 = vmatmul.bf16.gmra.mxu0 %v622
      %v1006 = vpop.f32.mrf.mxu0
      %v1007 = vadd.f32 %v373, %v1006
      %v1008 = vpop.f32.mrf.mxu0
      %v1009 = vadd.f32 %v373, %v1008
      %1010 = vmatmul.bf16.gmra.mxu0 %v625
      %v1011 = vpop.f32.mrf.mxu0
      %v1012 = vadd.f32 %v373, %v1011
      %v1013 = vpop.f32.mrf.mxu0
      %v1014 = vadd.f32 %v373, %v1013
      %1015 = vmatmul.bf16.gmra.mxu0 %v628
      %v1016 = vpop.f32.mrf.mxu0
      %v1017 = vadd.f32 %v373, %v1016
      %v1018 = vpop.f32.mrf.mxu0
      %v1019 = vadd.f32 %v373, %v1018
      %1020 = vmatmul.bf16.gmra.mxu0 %v631
      %v1021 = vpop.f32.mrf.mxu0
      %v1022 = vadd.f32 %v373, %v1021
      %v1023 = vpop.f32.mrf.mxu0
      %v1024 = vadd.f32 %v373, %v1023
      %1025 = vmatmul.bf16.gmra.mxu0 %v634
      %v1026 = vpop.f32.mrf.mxu0
      %v1027 = vadd.f32 %v373, %v1026
      %v1028 = vpop.f32.mrf.mxu0
      %v1029 = vadd.f32 %v373, %v1028
      %1030 = vmatmul.bf16.gmra.mxu0 %v637
      %v1031 = vpop.f32.mrf.mxu0
      %v1032 = vadd.f32 %v373, %v1031
      %v1033 = vpop.f32.mrf.mxu0
      %v1034 = vadd.f32 %v373, %v1033
      %1035 = vmatmul.bf16.gmra.mxu0 %v640
      %v1036 = vpop.f32.mrf.mxu0
      %v1037 = vadd.f32 %v373, %v1036
      %v1038 = vpop.f32.mrf.mxu0
      %v1039 = vadd.f32 %v373, %v1038
      %1040 = vmatmul.bf16.gmra.mxu0 %v643
      %v1041 = vpop.f32.mrf.mxu0
      %v1042 = vadd.f32 %v373, %v1041
      %v1043 = vpop.f32.mrf.mxu0
      %v1044 = vadd.f32 %v373, %v1043
      %1045 = vmatmul.bf16.gmra.mxu0 %v646
      %v1046 = vpop.f32.mrf.mxu0
      %v1047 = vadd.f32 %v373, %v1046
      %v1048 = vpop.f32.mrf.mxu0
      %v1049 = vadd.f32 %v373, %v1048
      %1050 = vmatmul.bf16.gmra.mxu0 %v649
      %v1051 = vpop.f32.mrf.mxu0
      %v1052 = vadd.f32 %v373, %v1051
      %v1053 = vpop.f32.mrf.mxu0
      %v1054 = vadd.f32 %v373, %v1053
      %1055 = vmatmul.bf16.gmra.mxu0 %v652
      %v1056 = vpop.f32.mrf.mxu0
      %v1057 = vadd.f32 %v373, %v1056
      %v1058 = vpop.f32.mrf.mxu0
      %v1059 = vadd.f32 %v373, %v1058
      %1060 = vmatmul.bf16.gmra.mxu0 %v655
      %v1061 = vpop.f32.mrf.mxu0
      %v1062 = vadd.f32 %v373, %v1061
      %v1063 = vpop.f32.mrf.mxu0
      %v1064 = vadd.f32 %v373, %v1063
      %1065 = vmatmul.bf16.gmra.mxu0 %v658
      %v1066 = vpop.f32.mrf.mxu0
      %v1067 = vadd.f32 %v373, %v1066
      %v1068 = vpop.f32.mrf.mxu0
      %v1069 = vadd.f32 %v373, %v1068
      %1070 = vmatmul.bf16.gmra.mxu0 %v661
      %v1071 = vpop.f32.mrf.mxu0
      %v1072 = vadd.f32 %v373, %v1071
      %v1073 = vpop.f32.mrf.mxu0
      %v1074 = vadd.f32 %v373, %v1073
      %1075 = vmatmul.bf16.gmra.mxu0 %v664
      %v1076 = vpop.f32.mrf.mxu0
      %v1077 = vadd.f32 %v373, %v1076
      %v1078 = vpop.f32.mrf.mxu0
      %v1079 = vadd.f32 %v373, %v1078
      %1080 = vmatmul.bf16.gmra.mxu0 %v667
      %v1081 = vpop.f32.mrf.mxu0
      %v1082 = vadd.f32 %v373, %v1081
      %v1083 = vpop.f32.mrf.mxu0
      %v1084 = vadd.f32 %v373, %v1083
      %1085 = vmatmul.bf16.gmra.mxu0 %v670
      %v1086 = vpop.f32.mrf.mxu0
      %v1087 = vadd.f32 %v373, %v1086
      %v1088 = vpop.f32.mrf.mxu0
      %v1089 = vadd.f32 %v373, %v1088
      %1090 = vmatmul.bf16.gmra.mxu0 %v673
      %v1091 = vpop.f32.mrf.mxu0
      %v1092 = vadd.f32 %v373, %v1091
      %v1093 = vpop.f32.mrf.mxu0
      %v1094 = vadd.f32 %v373, %v1093
      %1095 = vmatmul.bf16.gmra.mxu0 %v676
      %v1096 = vpop.f32.mrf.mxu0
      %v1097 = vadd.f32 %v373, %v1096
      %v1098 = vpop.f32.mrf.mxu0
      %v1099 = vadd.f32 %v373, %v1098
      %1100 = vmatmul.bf16.gmra.mxu0 %v679
      %v1101 = vpop.f32.mrf.mxu0
      %v1102 = vadd.f32 %v373, %v1101
      %v1103 = vpop.f32.mrf.mxu0
      %v1104 = vadd.f32 %v373, %v1103
      %1105 = vmatmul.bf16.gmra.mxu0 %v682
      %v1106 = vpop.f32.mrf.mxu0
      %v1107 = vadd.f32 %v373, %v1106
      %v1108 = vpop.f32.mrf.mxu0
      %v1109 = vadd.f32 %v373, %v1108
      %1110 = vmatmul.bf16.gmra.mxu0 %v685
      %v1111 = vpop.f32.mrf.mxu0
      %v1112 = vadd.f32 %v373, %v1111
      %v1113 = vpop.f32.mrf.mxu0
      %v1114 = vadd.f32 %v373, %v1113
      %1115 = vmatmul.bf16.gmra.mxu0 %v688
      %v1116 = vpop.f32.mrf.mxu0
      %v1117 = vadd.f32 %v373, %v1116
      %v1118 = vpop.f32.mrf.mxu0
      %v1119 = vadd.f32 %v373, %v1118
      %1120 = vmatmul.bf16.gmra.mxu0 %v691
      %v1121 = vpop.f32.mrf.mxu0
      %v1122 = vadd.f32 %v373, %v1121
      %v1123 = vpop.f32.mrf.mxu0
      %v1124 = vadd.f32 %v373, %v1123
      %1125 = vmatmul.bf16.gmra.mxu0 %v694
      %v1126 = vpop.f32.mrf.mxu0
      %v1127 = vadd.f32 %v373, %v1126
      %v1128 = vpop.f32.mrf.mxu0
      %v1129 = vadd.f32 %v373, %v1128
      %1130 = vmatmul.bf16.gmra.mxu0 %v697
      %v1131 = vpop.f32.mrf.mxu0
      %v1132 = vadd.f32 %v373, %v1131
      %v1133 = vpop.f32.mrf.mxu0
      %v1134 = vadd.f32 %v373, %v1133
      %1135 = vmatmul.bf16.gmra.mxu0 %v700
      %v1136 = vpop.f32.mrf.mxu0
      %v1137 = vadd.f32 %v373, %v1136
      %v1138 = vpop.f32.mrf.mxu0
      %v1139 = vadd.f32 %v373, %v1138
      %1140 = vmatmul.bf16.gmra.mxu0 %v703
      %v1141 = vpop.f32.mrf.mxu0
      %v1142 = vadd.f32 %v373, %v1141
      %v1143 = vpop.f32.mrf.mxu0
      %v1144 = vadd.f32 %v373, %v1143
      %1145 = vmatmul.bf16.gmra.mxu0 %v706
      %v1146 = vpop.f32.mrf.mxu0
      %v1147 = vadd.f32 %v373, %v1146
      %v1148 = vpop.f32.mrf.mxu0
      %v1149 = vadd.f32 %v373, %v1148
      %1150 = vmatmul.bf16.gmra.mxu0 %v709
      %v1151 = vpop.f32.mrf.mxu0
      %v1152 = vadd.f32 %v373, %v1151
      %v1153 = vpop.f32.mrf.mxu0
      %v1154 = vadd.f32 %v373, %v1153
      %1155 = vmatmul.bf16.gmra.mxu0 %v712
      %v1156 = vpop.f32.mrf.mxu0
      %v1157 = vadd.f32 %v373, %v1156
      %v1158 = vpop.f32.mrf.mxu0
      %v1159 = vadd.f32 %v373, %v1158
      %1160 = vmatmul.bf16.gmra.mxu0 %v715
      %v1161 = vpop.f32.mrf.mxu0
      %v1162 = vadd.f32 %v373, %v1161
      %v1163 = vpop.f32.mrf.mxu0
      %v1164 = vadd.f32 %v373, %v1163
      %1165 = vmatmul.bf16.gmra.mxu0 %v718
      %v1166 = vpop.f32.mrf.mxu0
      %v1167 = vadd.f32 %v373, %v1166
      %v1168 = vpop.f32.mrf.mxu0
      %v1169 = vadd.f32 %v373, %v1168
      %1170 = vmatmul.bf16.gmra.mxu0 %v721
      %v1171 = vpop.f32.mrf.mxu0
      %v1172 = vadd.f32 %v373, %v1171
      %v1173 = vpop.f32.mrf.mxu0
      %v1174 = vadd.f32 %v373, %v1173
      %1175 = vmatmul.bf16.gmra.mxu0 %v724
      %v1176 = vpop.f32.mrf.mxu0
      %v1177 = vadd.f32 %v373, %v1176
      %v1178 = vpop.f32.mrf.mxu0
      %v1179 = vadd.f32 %v373, %v1178
      %1180 = vdwg.mxu0
      %v1181 = vmax.f32 %v743, 0.0
      %v1182 = vmax.f32 %v967, 0.0
      %v1183 = vmax.f32 %v745, 0.0
      %v1184 = vmax.f32 %v969, 0.0
      %v1185 = vmax.f32 %v748, 0.0
      %v1186 = vmax.f32 %v972, 0.0
      %v1187 = vmax.f32 %v750, 0.0
      %v1188 = vmax.f32 %v974, 0.0
      %v1189 = vmax.f32 %v753, 0.0
      %v1190 = vmax.f32 %v977, 0.0
      %v1191 = vmax.f32 %v755, 0.0
      %v1192 = vmax.f32 %v979, 0.0
      %v1193 = vmax.f32 %v758, 0.0
      %v1194 = vmax.f32 %v982, 0.0
      %v1195 = vmax.f32 %v760, 0.0
      %v1196 = vmax.f32 %v984, 0.0
      %v1197 = vmax.f32 %v763, 0.0
      %v1198 = vmax.f32 %v987, 0.0
      %v1199 = vmax.f32 %v765, 0.0
      %v1200 = vmax.f32 %v989, 0.0
      %v1201 = vmax.f32 %v768, 0.0
      %v1202 = vmax.f32 %v992, 0.0
      %v1203 = vmax.f32 %v770, 0.0
      %v1204 = vmax.f32 %v994, 0.0
      %v1205 = vmax.f32 %v773, 0.0
      %v1206 = vmax.f32 %v997, 0.0
      %v1207 = vmax.f32 %v775, 0.0
      %v1208 = vmax.f32 %v999, 0.0
      %v1209 = vmax.f32 %v778, 0.0
      %v1210 = vmax.f32 %v1002, 0.0
      %v1211 = vmax.f32 %v780, 0.0
      %v1212 = vmax.f32 %v1004, 0.0
      %v1213 = vmax.f32 %v783, 0.0
      %v1214 = vmax.f32 %v1007, 0.0
      %v1215 = vmax.f32 %v785, 0.0
      %v1216 = vmax.f32 %v1009, 0.0
      %v1217 = vmax.f32 %v788, 0.0
      %v1218 = vmax.f32 %v1012, 0.0
      %v1219 = vmax.f32 %v790, 0.0
      %v1220 = vmax.f32 %v1014, 0.0
      %v1221 = vmax.f32 %v793, 0.0
      %v1222 = vmax.f32 %v1017, 0.0
      %v1223 = vmax.f32 %v795, 0.0
      %v1224 = vmax.f32 %v1019, 0.0
      %v1225 = vmax.f32 %v798, 0.0
      %v1226 = vmax.f32 %v1022, 0.0
      %v1227 = vmax.f32 %v800, 0.0
      %v1228 = vmax.f32 %v1024, 0.0
      %v1229 = vmax.f32 %v803, 0.0
      %v1230 = vmax.f32 %v1027, 0.0
      %v1231 = vmax.f32 %v805, 0.0
      %v1232 = vmax.f32 %v1029, 0.0
      %v1233 = vmax.f32 %v808, 0.0
      %v1234 = vmax.f32 %v1032, 0.0
      %v1235 = vmax.f32 %v810, 0.0
      %v1236 = vmax.f32 %v1034, 0.0
      %v1237 = vmax.f32 %v813, 0.0
      %v1238 = vmax.f32 %v1037, 0.0
      %v1239 = vmax.f32 %v815, 0.0
      %v1240 = vmax.f32 %v1039, 0.0
      %v1241 = vmax.f32 %v818, 0.0
      %v1242 = vmax.f32 %v1042, 0.0
      %v1243 = vmax.f32 %v820, 0.0
      %v1244 = vmax.f32 %v1044, 0.0
      %v1245 = vmax.f32 %v823, 0.0
      %v1246 = vmax.f32 %v1047, 0.0
      %v1247 = vmax.f32 %v825, 0.0
      %v1248 = vmax.f32 %v1049, 0.0
      %v1249 = vmax.f32 %v828, 0.0
      %v1250 = vmax.f32 %v1052, 0.0
      %v1251 = vmax.f32 %v830, 0.0
      %v1252 = vmax.f32 %v1054, 0.0
      %v1253 = vmax.f32 %v833, 0.0
      %v1254 = vmax.f32 %v1057, 0.0
      %v1255 = vmax.f32 %v835, 0.0
      %v1256 = vmax.f32 %v1059, 0.0
      %v1257 = vmax.f32 %v838, 0.0
      %v1258 = vmax.f32 %v1062, 0.0
      %v1259 = vmax.f32 %v840, 0.0
      %v1260 = vmax.f32 %v1064, 0.0
      %v1261 = vmax.f32 %v843, 0.0
      %v1262 = vmax.f32 %v1067, 0.0
      %v1263 = vmax.f32 %v845, 0.0
      %v1264 = vmax.f32 %v1069, 0.0
      %v1265 = vmax.f32 %v848, 0.0
      %v1266 = vmax.f32 %v1072, 0.0
      %v1267 = vmax.f32 %v850, 0.0
      %v1268 = vmax.f32 %v1074, 0.0
      %v1269 = vmax.f32 %v853, 0.0
      %v1270 = vmax.f32 %v1077, 0.0
      %v1271 = vmax.f32 %v855, 0.0
      %v1272 = vmax.f32 %v1079, 0.0
      %v1273 = vmax.f32 %v858, 0.0
      %v1274 = vmax.f32 %v1082, 0.0
      %v1275 = vmax.f32 %v860, 0.0
      %v1276 = vmax.f32 %v1084, 0.0
      %v1277 = vmax.f32 %v863, 0.0
      %v1278 = vmax.f32 %v1087, 0.0
      %v1279 = vmax.f32 %v865, 0.0
      %v1280 = vmax.f32 %v1089, 0.0
      %v1281 = vmax.f32 %v868, 0.0
      %v1282 = vmax.f32 %v1092, 0.0
      %v1283 = vmax.f32 %v870, 0.0
      %v1284 = vmax.f32 %v1094, 0.0
      %v1285 = vmax.f32 %v873, 0.0
      %v1286 = vmax.f32 %v1097, 0.0
      %v1287 = vmax.f32 %v875, 0.0
      %v1288 = vmax.f32 %v1099, 0.0
      %v1289 = vmax.f32 %v878, 0.0
      %v1290 = vmax.f32 %v1102, 0.0
      %v1291 = vmax.f32 %v880, 0.0
      %v1292 = vmax.f32 %v1104, 0.0
      %v1293 = vmax.f32 %v883, 0.0
      %v1294 = vmax.f32 %v1107, 0.0
      %v1295 = vmax.f32 %v885, 0.0
      %v1296 = vmax.f32 %v1109, 0.0
      %v1297 = vmax.f32 %v888, 0.0
      %v1298 = vmax.f32 %v1112, 0.0
      %v1299 = vmax.f32 %v890, 0.0
      %v1300 = vmax.f32 %v1114, 0.0
      %v1301 = vmax.f32 %v893, 0.0
      %v1302 = vmax.f32 %v1117, 0.0
      %v1303 = vmax.f32 %v895, 0.0
      %v1304 = vmax.f32 %v1119, 0.0
      %v1305 = vmax.f32 %v898, 0.0
      %v1306 = vmax.f32 %v1122, 0.0
      %v1307 = vmax.f32 %v900, 0.0
      %v1308 = vmax.f32 %v1124, 0.0
      %v1309 = vmax.f32 %v903, 0.0
      %v1310 = vmax.f32 %v1127, 0.0
      %v1311 = vmax.f32 %v905, 0.0
      %v1312 = vmax.f32 %v1129, 0.0
      %v1313 = vmax.f32 %v908, 0.0
      %v1314 = vmax.f32 %v1132, 0.0
      %v1315 = vmax.f32 %v910, 0.0
      %v1316 = vmax.f32 %v1134, 0.0
      %v1317 = vmax.f32 %v913, 0.0
      %v1318 = vmax.f32 %v1137, 0.0
      %v1319 = vmax.f32 %v915, 0.0
      %v1320 = vmax.f32 %v1139, 0.0
      %v1321 = vmax.f32 %v918, 0.0
      %v1322 = vmax.f32 %v1142, 0.0
      %v1323 = vmax.f32 %v920, 0.0
      %v1324 = vmax.f32 %v1144, 0.0
      %v1325 = vmax.f32 %v923, 0.0
      %v1326 = vmax.f32 %v1147, 0.0
      %v1327 = vmax.f32 %v925, 0.0
      %v1328 = vmax.f32 %v1149, 0.0
      %v1329 = vmax.f32 %v928, 0.0
      %v1330 = vmax.f32 %v1152, 0.0
      %v1331 = vmax.f32 %v930, 0.0
      %v1332 = vmax.f32 %v1154, 0.0
      %v1333 = vmax.f32 %v933, 0.0
      %v1334 = vmax.f32 %v1157, 0.0
      %v1335 = vmax.f32 %v935, 0.0
      %v1336 = vmax.f32 %v1159, 0.0
      %v1337 = vmax.f32 %v938, 0.0
      %v1338 = vmax.f32 %v1162, 0.0
      %v1339 = vmax.f32 %v940, 0.0
      %v1340 = vmax.f32 %v1164, 0.0
      %v1341 = vmax.f32 %v943, 0.0
      %v1342 = vmax.f32 %v1167, 0.0
      %v1343 = vmax.f32 %v945, 0.0
      %v1344 = vmax.f32 %v1169, 0.0
      %v1345 = vmax.f32 %v948, 0.0
      %v1346 = vmax.f32 %v1172, 0.0
      %v1347 = vmax.f32 %v950, 0.0
      %v1348 = vmax.f32 %v1174, 0.0
      %v1349 = vmax.f32 %v953, 0.0
      %v1350 = vmax.f32 %v1177, 0.0
      %v1351 = vmax.f32 %v955, 0.0
      %v1352 = vmax.f32 %v1179, 0.0
      %v1353 = vpack.c.bf16 %v1183, %v1181
      %v1354 = vpack.c.bf16 %v1184, %v1182
      %v1355 = vpack.c.bf16 %v1187, %v1185
      %v1356 = vpack.c.bf16 %v1188, %v1186
      %v1357 = vpack.c.bf16 %v1191, %v1189
      %v1358 = vpack.c.bf16 %v1192, %v1190
      %v1359 = vpack.c.bf16 %v1195, %v1193
      %v1360 = vpack.c.bf16 %v1196, %v1194
      %v1361 = vpack.c.bf16 %v1199, %v1197
      %v1362 = vpack.c.bf16 %v1200, %v1198
      %v1363 = vpack.c.bf16 %v1203, %v1201
      %v1364 = vpack.c.bf16 %v1204, %v1202
      %v1365 = vpack.c.bf16 %v1207, %v1205
      %v1366 = vpack.c.bf16 %v1208, %v1206
      %v1367 = vpack.c.bf16 %v1211, %v1209
      %v1368 = vpack.c.bf16 %v1212, %v1210
      %v1369 = vpack.c.bf16 %v1215, %v1213
      %v1370 = vpack.c.bf16 %v1216, %v1214
      %v1371 = vpack.c.bf16 %v1219, %v1217
      %v1372 = vpack.c.bf16 %v1220, %v1218
      %v1373 = vpack.c.bf16 %v1223, %v1221
      %v1374 = vpack.c.bf16 %v1224, %v1222
      %v1375 = vpack.c.bf16 %v1227, %v1225
      %v1376 = vpack.c.bf16 %v1228, %v1226
      %v1377 = vpack.c.bf16 %v1231, %v1229
      %v1378 = vpack.c.bf16 %v1232, %v1230
      %v1379 = vpack.c.bf16 %v1235, %v1233
      %v1380 = vpack.c.bf16 %v1236, %v1234
      %v1381 = vpack.c.bf16 %v1239, %v1237
      %v1382 = vpack.c.bf16 %v1240, %v1238
      %v1383 = vpack.c.bf16 %v1243, %v1241
      %v1384 = vpack.c.bf16 %v1244, %v1242
      %v1385 = vpack.c.bf16 %v1247, %v1245
      %v1386 = vpack.c.bf16 %v1248, %v1246
      %v1387 = vpack.c.bf16 %v1251, %v1249
      %v1388 = vpack.c.bf16 %v1252, %v1250
      %v1389 = vpack.c.bf16 %v1255, %v1253
      %v1390 = vpack.c.bf16 %v1256, %v1254
      %v1391 = vpack.c.bf16 %v1259, %v1257
      %v1392 = vpack.c.bf16 %v1260, %v1258
      %v1393 = vpack.c.bf16 %v1263, %v1261
      %v1394 = vpack.c.bf16 %v1264, %v1262
      %v1395 = vpack.c.bf16 %v1267, %v1265
      %v1396 = vpack.c.bf16 %v1268, %v1266
      %v1397 = vpack.c.bf16 %v1271, %v1269
      %v1398 = vpack.c.bf16 %v1272, %v1270
      %v1399 = vpack.c.bf16 %v1275, %v1273
      %v1400 = vpack.c.bf16 %v1276, %v1274
      %v1401 = vpack.c.bf16 %v1279, %v1277
      %v1402 = vpack.c.bf16 %v1280, %v1278
      %v1403 = vpack.c.bf16 %v1283, %v1281
      %v1404 = vpack.c.bf16 %v1284, %v1282
      %v1405 = vpack.c.bf16 %v1287, %v1285
      %v1406 = vpack.c.bf16 %v1288, %v1286
      %v1407 = vpack.c.bf16 %v1291, %v1289
      %v1408 = vpack.c.bf16 %v1292, %v1290
      %v1409 = vpack.c.bf16 %v1295, %v1293
      %v1410 = vpack.c.bf16 %v1296, %v1294
      %v1411 = vpack.c.bf16 %v1299, %v1297
      %v1412 = vpack.c.bf16 %v1300, %v1298
      %v1413 = vpack.c.bf16 %v1303, %v1301
      %v1414 = vpack.c.bf16 %v1304, %v1302
      %v1415 = vpack.c.bf16 %v1307, %v1305
      %v1416 = vpack.c.bf16 %v1308, %v1306
      %v1417 = vpack.c.bf16 %v1311, %v1309
      %v1418 = vpack.c.bf16 %v1312, %v1310
      %v1419 = vpack.c.bf16 %v1315, %v1313
      %v1420 = vpack.c.bf16 %v1316, %v1314
      %v1421 = vpack.c.bf16 %v1319, %v1317
      %v1422 = vpack.c.bf16 %v1320, %v1318
      %v1423 = vpack.c.bf16 %v1323, %v1321
      %v1424 = vpack.c.bf16 %v1324, %v1322
      %v1425 = vpack.c.bf16 %v1327, %v1325
      %v1426 = vpack.c.bf16 %v1328, %v1326
      %v1427 = vpack.c.bf16 %v1331, %v1329
      %v1428 = vpack.c.bf16 %v1332, %v1330
      %v1429 = vpack.c.bf16 %v1335, %v1333
      %v1430 = vpack.c.bf16 %v1336, %v1334
      %v1431 = vpack.c.bf16 %v1339, %v1337
      %v1432 = vpack.c.bf16 %v1340, %v1338
      %v1433 = vpack.c.bf16 %v1343, %v1341
      %v1434 = vpack.c.bf16 %v1344, %v1342
      %v1435 = vpack.c.bf16 %v1347, %v1345
      %v1436 = vpack.c.bf16 %v1348, %v1346
      %v1437 = vpack.c.bf16 %v1351, %v1349
      %v1438 = vpack.c.bf16 %v1352, %v1350
      %v1439 = vld [vmem:[%s3] sm:$0xff]
      %v1440 = vld [vmem:[%s3 + $0x8] sm:$0xff]
      %v1441 = vld [vmem:[%s3 + $0x10] sm:$0xff]
      %v1442 = vld [vmem:[%s3 + $0x18] sm:$0xff]
      %v1443 = vld [vmem:[%s3 + $0x20] sm:$0xff]
      %v1444 = vld [vmem:[%s3 + $0x28] sm:$0xff]
      %v1445 = vld [vmem:[%s3 + $0x30] sm:$0xff]
      %v1446 = vld [vmem:[%s3 + $0x38] sm:$0xff]
      %v1447 = vld [vmem:[%s3 + $0x40] sm:$0xff]
      %v1448 = vld [vmem:[%s3 + $0x48] sm:$0xff]
      %v1449 = vld [vmem:[%s3 + $0x50] sm:$0xff]
      %v1450 = vld [vmem:[%s3 + $0x58] sm:$0xff]
      %v1451 = vld [vmem:[%s3 + $0x60] sm:$0xff]
      %v1452 = vld [vmem:[%s3 + $0x68] sm:$0xff]
      %v1453 = vld [vmem:[%s3 + $0x70] sm:$0xff]
      %v1454 = vld [vmem:[%s3 + $0x78] sm:$0xff]
      %v1455 = vld [vmem:[%s3 + $0x80] sm:$0xff]
      %v1456 = vld [vmem:[%s3 + $0x88] sm:$0xff]
      %v1457 = vld [vmem:[%s3 + $0x90] sm:$0xff]
      %v1458 = vld [vmem:[%s3 + $0x98] sm:$0xff]
      %v1459 = vld [vmem:[%s3 + $0xa0] sm:$0xff]
      %v1460 = vld [vmem:[%s3 + $0xa8] sm:$0xff]
      %v1461 = vld [vmem:[%s3 + $0xb0] sm:$0xff]
      %v1462 = vld [vmem:[%s3 + $0xb8] sm:$0xff]
      %v1463 = vld [vmem:[%s3 + $0xc0] sm:$0xff]
      %v1464 = vld [vmem:[%s3 + $0xc8] sm:$0xff]
      %v1465 = vld [vmem:[%s3 + $0xd0] sm:$0xff]
      %v1466 = vld [vmem:[%s3 + $0xd8] sm:$0xff]
      %v1467 = vld [vmem:[%s3 + $0xe0] sm:$0xff]
      %v1468 = vld [vmem:[%s3 + $0xe8] sm:$0xff]
      %v1469 = vld [vmem:[%s3 + $0xf0] sm:$0xff]
      %v1470 = vld [vmem:[%s3 + $0xf8] sm:$0xff]
      %v1471 = vld [vmem:[%s3 + $0x100] sm:$0xff]
      %v1472 = vld [vmem:[%s3 + $0x108] sm:$0xff]
      %v1473 = vld [vmem:[%s3 + $0x110] sm:$0xff]
      %v1474 = vld [vmem:[%s3 + $0x118] sm:$0xff]
      %v1475 = vld [vmem:[%s3 + $0x120] sm:$0xff]
      %v1476 = vld [vmem:[%s3 + $0x128] sm:$0xff]
      %v1477 = vld [vmem:[%s3 + $0x130] sm:$0xff]
      %v1478 = vld [vmem:[%s3 + $0x138] sm:$0xff]
      %v1479 = vld [vmem:[%s3 + $0x140] sm:$0xff]
      %v1480 = vld [vmem:[%s3 + $0x148] sm:$0xff]
      %v1481 = vld [vmem:[%s3 + $0x150] sm:$0xff]
      %v1482 = vld [vmem:[%s3 + $0x158] sm:$0xff]
      %v1483 = vld [vmem:[%s3 + $0x160] sm:$0xff]
      %v1484 = vld [vmem:[%s3 + $0x168] sm:$0xff]
      %v1485 = vld [vmem:[%s3 + $0x170] sm:$0xff]
      %v1486 = vld [vmem:[%s3 + $0x178] sm:$0xff]
      %v1487 = vld [vmem:[%s3 + $0x180] sm:$0xff]
      %v1488 = vld [vmem:[%s3 + $0x188] sm:$0xff]
      %v1489 = vld [vmem:[%s3 + $0x190] sm:$0xff]
      %v1490 = vld [vmem:[%s3 + $0x198] sm:$0xff]
      %v1491 = vld [vmem:[%s3 + $0x1a0] sm:$0xff]
      %v1492 = vld [vmem:[%s3 + $0x1a8] sm:$0xff]
      %v1493 = vld [vmem:[%s3 + $0x1b0] sm:$0xff]
      %v1494 = vld [vmem:[%s3 + $0x1b8] sm:$0xff]
      %v1495 = vld [vmem:[%s3 + $0x1c0] sm:$0xff]
      %v1496 = vld [vmem:[%s3 + $0x1c8] sm:$0xff]
      %v1497 = vld [vmem:[%s3 + $0x1d0] sm:$0xff]
      %v1498 = vld [vmem:[%s3 + $0x1d8] sm:$0xff]
      %v1499 = vld [vmem:[%s3 + $0x1e0] sm:$0xff]
      %v1500 = vld [vmem:[%s3 + $0x1e8] sm:$0xff]
      %v1501 = vld [vmem:[%s3 + $0x1f0] sm:$0xff]
      %v1502 = vld [vmem:[%s3 + $0x1f8] sm:$0xff]
      %v1503 = vld [vmem:[%s4] sm:$0xf]
      %v1505 = vperm.slane %v1503, 0
      %v1506 = vperm.slane %v1503, 1
      %v1507 = vperm.slane %v1503, 2
      %v1508 = vperm.slane %v1503, 3
      %v1577 = vunpack.c.l.b16 %v1439
      %v1578 = vunpack.c.h.b16 %v1439
      %v1579 = vunpack.c.l.b16 %v1440
      %v1580 = vunpack.c.h.b16 %v1440
      %v1581 = vunpack.c.l.b16 %v1441
      %v1582 = vunpack.c.h.b16 %v1441
      %v1583 = vunpack.c.l.b16 %v1442
      %v1584 = vunpack.c.h.b16 %v1442
      %v1585 = vunpack.c.l.b16 %v1443
      %v1586 = vunpack.c.h.b16 %v1443
      %v1587 = vunpack.c.l.b16 %v1444
      %v1588 = vunpack.c.h.b16 %v1444
      %v1589 = vunpack.c.l.b16 %v1445
      %v1590 = vunpack.c.h.b16 %v1445
      %v1591 = vunpack.c.l.b16 %v1446
      %v1592 = vunpack.c.h.b16 %v1446
      %v1593 = vunpack.c.l.b16 %v1447
      %v1594 = vunpack.c.h.b16 %v1447
      %v1595 = vunpack.c.l.b16 %v1448
      %v1596 = vunpack.c.h.b16 %v1448
      %v1597 = vunpack.c.l.b16 %v1449
      %v1598 = vunpack.c.h.b16 %v1449
      %v1599 = vunpack.c.l.b16 %v1450
      %v1600 = vunpack.c.h.b16 %v1450
      %v1601 = vunpack.c.l.b16 %v1451
      %v1602 = vunpack.c.h.b16 %v1451
      %v1603 = vunpack.c.l.b16 %v1452
      %v1604 = vunpack.c.h.b16 %v1452
      %v1605 = vunpack.c.l.b16 %v1453
      %v1606 = vunpack.c.h.b16 %v1453
      %v1607 = vunpack.c.l.b16 %v1454
      %v1608 = vunpack.c.h.b16 %v1454
      %v1609 = vunpack.c.l.b16 %v1455
      %v1610 = vunpack.c.h.b16 %v1455
      %v1611 = vunpack.c.l.b16 %v1456
      %v1612 = vunpack.c.h.b16 %v1456
      %v1613 = vunpack.c.l.b16 %v1457
      %v1614 = vunpack.c.h.b16 %v1457
      %v1615 = vunpack.c.l.b16 %v1458
      %v1616 = vunpack.c.h.b16 %v1458
      %v1617 = vunpack.c.l.b16 %v1459
      %v1618 = vunpack.c.h.b16 %v1459
      %v1619 = vunpack.c.l.b16 %v1460
      %v1620 = vunpack.c.h.b16 %v1460
      %v1621 = vunpack.c.l.b16 %v1461
      %v1622 = vunpack.c.h.b16 %v1461
      %v1623 = vunpack.c.l.b16 %v1462
      %v1624 = vunpack.c.h.b16 %v1462
      %v1625 = vunpack.c.l.b16 %v1463
      %v1626 = vunpack.c.h.b16 %v1463
      %v1627 = vunpack.c.l.b16 %v1464
      %v1628 = vunpack.c.h.b16 %v1464
      %v1629 = vunpack.c.l.b16 %v1465
      %v1630 = vunpack.c.h.b16 %v1465
      %v1631 = vunpack.c.l.b16 %v1466
      %v1632 = vunpack.c.h.b16 %v1466
      %v1633 = vunpack.c.l.b16 %v1467
      %v1634 = vunpack.c.h.b16 %v1467
      %v1635 = vunpack.c.l.b16 %v1468
      %v1636 = vunpack.c.h.b16 %v1468
      %v1637 = vunpack.c.l.b16 %v1469
      %v1638 = vunpack.c.h.b16 %v1469
      %v1639 = vunpack.c.l.b16 %v1470
      %v1640 = vunpack.c.h.b16 %v1470
      %v1641 = vunpack.c.l.b16 %v1471
      %v1642 = vunpack.c.h.b16 %v1471
      %v1643 = vunpack.c.l.b16 %v1472
      %v1644 = vunpack.c.h.b16 %v1472
      %v1645 = vunpack.c.l.b16 %v1473
      %v1646 = vunpack.c.h.b16 %v1473
      %v1647 = vunpack.c.l.b16 %v1474
      %v1648 = vunpack.c.h.b16 %v1474
      %v1649 = vunpack.c.l.b16 %v1475
      %v1650 = vunpack.c.h.b16 %v1475
      %v1651 = vunpack.c.l.b16 %v1476
      %v1652 = vunpack.c.h.b16 %v1476
      %v1653 = vunpack.c.l.b16 %v1477
      %v1654 = vunpack.c.h.b16 %v1477
      %v1655 = vunpack.c.l.b16 %v1478
      %v1656 = vunpack.c.h.b16 %v1478
      %v1657 = vunpack.c.l.b16 %v1479
      %v1658 = vunpack.c.h.b16 %v1479
      %v1659 = vunpack.c.l.b16 %v1480
      %v1660 = vunpack.c.h.b16 %v1480
      %v1661 = vunpack.c.l.b16 %v1481
      %v1662 = vunpack.c.h.b16 %v1481
      %v1663 = vunpack.c.l.b16 %v1482
      %v1664 = vunpack.c.h.b16 %v1482
      %v1665 = vunpack.c.l.b16 %v1483
      %v1666 = vunpack.c.h.b16 %v1483
      %v1667 = vunpack.c.l.b16 %v1484
      %v1668 = vunpack.c.h.b16 %v1484
      %v1669 = vunpack.c.l.b16 %v1485
      %v1670 = vunpack.c.h.b16 %v1485
      %v1671 = vunpack.c.l.b16 %v1486
      %v1672 = vunpack.c.h.b16 %v1486
      %v1673 = vunpack.c.l.b16 %v1487
      %v1674 = vunpack.c.h.b16 %v1487
      %v1675 = vunpack.c.l.b16 %v1488
      %v1676 = vunpack.c.h.b16 %v1488
      %v1677 = vunpack.c.l.b16 %v1489
      %v1678 = vunpack.c.h.b16 %v1489
      %v1679 = vunpack.c.l.b16 %v1490
      %v1680 = vunpack.c.h.b16 %v1490
      %v1681 = vunpack.c.l.b16 %v1491
      %v1682 = vunpack.c.h.b16 %v1491
      %v1683 = vunpack.c.l.b16 %v1492
      %v1684 = vunpack.c.h.b16 %v1492
      %v1685 = vunpack.c.l.b16 %v1493
      %v1686 = vunpack.c.h.b16 %v1493
      %v1687 = vunpack.c.l.b16 %v1494
      %v1688 = vunpack.c.h.b16 %v1494
      %v1689 = vunpack.c.l.b16 %v1495
      %v1690 = vunpack.c.h.b16 %v1495
      %v1691 = vunpack.c.l.b16 %v1496
      %v1692 = vunpack.c.h.b16 %v1496
      %v1693 = vunpack.c.l.b16 %v1497
      %v1694 = vunpack.c.h.b16 %v1497
      %v1695 = vunpack.c.l.b16 %v1498
      %v1696 = vunpack.c.h.b16 %v1498
      %v1697 = vunpack.c.l.b16 %v1499
      %v1698 = vunpack.c.h.b16 %v1499
      %v1699 = vunpack.c.l.b16 %v1500
      %v1700 = vunpack.c.h.b16 %v1500
      %v1701 = vunpack.c.l.b16 %v1501
      %v1702 = vunpack.c.h.b16 %v1501
      %v1703 = vunpack.c.l.b16 %v1502
      %v1704 = vunpack.c.h.b16 %v1502
      %v1705 = vpack.c.b16 %v1581, %v1577
      %v1706 = vpack.c.b16 %v1582, %v1578
      %v1707 = vpack.c.b16 %v1583, %v1579
      %v1708 = vpack.c.b16 %v1584, %v1580
      %v1709 = vpack.c.b16 %v1589, %v1585
      %v1710 = vpack.c.b16 %v1590, %v1586
      %v1711 = vpack.c.b16 %v1591, %v1587
      %v1712 = vpack.c.b16 %v1592, %v1588
      %v1713 = vpack.c.b16 %v1597, %v1593
      %v1714 = vpack.c.b16 %v1598, %v1594
      %v1715 = vpack.c.b16 %v1599, %v1595
      %v1716 = vpack.c.b16 %v1600, %v1596
      %v1717 = vpack.c.b16 %v1605, %v1601
      %v1718 = vpack.c.b16 %v1606, %v1602
      %v1719 = vpack.c.b16 %v1607, %v1603
      %v1720 = vpack.c.b16 %v1608, %v1604
      %v1721 = vpack.c.b16 %v1613, %v1609
      %v1722 = vpack.c.b16 %v1614, %v1610
      %v1723 = vpack.c.b16 %v1615, %v1611
      %v1724 = vpack.c.b16 %v1616, %v1612
      %v1725 = vpack.c.b16 %v1621, %v1617
      %v1726 = vpack.c.b16 %v1622, %v1618
      %v1727 = vpack.c.b16 %v1623, %v1619
      %v1728 = vpack.c.b16 %v1624, %v1620
      %v1729 = vpack.c.b16 %v1629, %v1625
      %v1730 = vpack.c.b16 %v1630, %v1626
      %v1731 = vpack.c.b16 %v1631, %v1627
      %v1732 = vpack.c.b16 %v1632, %v1628
      %v1733 = vpack.c.b16 %v1637, %v1633
      %v1734 = vpack.c.b16 %v1638, %v1634
      %v1735 = vpack.c.b16 %v1639, %v1635
      %v1736 = vpack.c.b16 %v1640, %v1636
      %v1737 = vpack.c.b16 %v1645, %v1641
      %v1738 = vpack.c.b16 %v1646, %v1642
      %v1739 = vpack.c.b16 %v1647, %v1643
      %v1740 = vpack.c.b16 %v1648, %v1644
      %v1741 = vpack.c.b16 %v1653, %v1649
      %v1742 = vpack.c.b16 %v1654, %v1650
      %v1743 = vpack.c.b16 %v1655, %v1651
      %v1744 = vpack.c.b16 %v1656, %v1652
      %v1745 = vpack.c.b16 %v1661, %v1657
      %v1746 = vpack.c.b16 %v1662, %v1658
      %v1747 = vpack.c.b16 %v1663, %v1659
      %v1748 = vpack.c.b16 %v1664, %v1660
      %v1749 = vpack.c.b16 %v1669, %v1665
      %v1750 = vpack.c.b16 %v1670, %v1666
      %v1751 = vpack.c.b16 %v1671, %v1667
      %v1752 = vpack.c.b16 %v1672, %v1668
      %v1753 = vpack.c.b16 %v1677, %v1673
      %v1754 = vpack.c.b16 %v1678, %v1674
      %v1755 = vpack.c.b16 %v1679, %v1675
      %v1756 = vpack.c.b16 %v1680, %v1676
      %v1757 = vpack.c.b16 %v1685, %v1681
      %v1758 = vpack.c.b16 %v1686, %v1682
      %v1759 = vpack.c.b16 %v1687, %v1683
      %v1760 = vpack.c.b16 %v1688, %v1684
      %v1761 = vpack.c.b16 %v1693, %v1689
      %v1762 = vpack.c.b16 %v1694, %v1690
      %v1763 = vpack.c.b16 %v1695, %v1691
      %v1764 = vpack.c.b16 %v1696, %v1692
      %v1765 = vpack.c.b16 %v1701, %v1697
      %v1766 = vpack.c.b16 %v1702, %v1698
      %v1767 = vpack.c.b16 %v1703, %v1699
      %v1768 = vpack.c.b16 %v1704, %v1700
      %1833 = vmatpush.bf16.msra.mxu0 %v1733
      %1834 = vmatpush.bf16.msra.mxu0 %v1729
      %1835 = vmatpush.bf16.msra.mxu0 %v1725
      %1836 = vmatpush.bf16.msra.mxu0 %v1721
      %1837 = vmatpush.bf16.msra.mxu0 %v1717
      %1838 = vmatpush.bf16.msra.mxu0 %v1713
      %1839 = vmatpush.bf16.msra.mxu0 %v1709
      %1840 = vmatpush.bf16.msra.mxu0 %v1705
      %1841 = vmatmul.bf16.gmra.mxu0 %v1353
      %v1842 = vpop.f32.mrf.mxu0
      %v1843 = vadd.f32 %v1505, %v1842
      %v1844 = vpop.f32.mrf.mxu0
      %v1845 = vadd.f32 %v1505, %v1844
      %1846 = vmatmul.bf16.gmra.mxu0 %v1355
      %v1847 = vpop.f32.mrf.mxu0
      %v1848 = vadd.f32 %v1505, %v1847
      %v1849 = vpop.f32.mrf.mxu0
      %v1850 = vadd.f32 %v1505, %v1849
      %1851 = vmatmul.bf16.gmra.mxu0 %v1357
      %v1852 = vpop.f32.mrf.mxu0
      %v1853 = vadd.f32 %v1505, %v1852
      %v1854 = vpop.f32.mrf.mxu0
      %v1855 = vadd.f32 %v1505, %v1854
      %1856 = vmatmul.bf16.gmra.mxu0 %v1359
      %v1857 = vpop.f32.mrf.mxu0
      %v1858 = vadd.f32 %v1505, %v1857
      %v1859 = vpop.f32.mrf.mxu0
      %v1860 = vadd.f32 %v1505, %v1859
      %1861 = vmatmul.bf16.gmra.mxu0 %v1361
      %v1862 = vpop.f32.mrf.mxu0
      %v1863 = vadd.f32 %v1505, %v1862
      %v1864 = vpop.f32.mrf.mxu0
      %v1865 = vadd.f32 %v1505, %v1864
      %1866 = vmatmul.bf16.gmra.mxu0 %v1363
      %v1867 = vpop.f32.mrf.mxu0
      %v1868 = vadd.f32 %v1505, %v1867
      %v1869 = vpop.f32.mrf.mxu0
      %v1870 = vadd.f32 %v1505, %v1869
      %1871 = vmatmul.bf16.gmra.mxu0 %v1365
      %v1872 = vpop.f32.mrf.mxu0
      %v1873 = vadd.f32 %v1505, %v1872
      %v1874 = vpop.f32.mrf.mxu0
      %v1875 = vadd.f32 %v1505, %v1874
      %1876 = vmatmul.bf16.gmra.mxu0 %v1367
      %v1877 = vpop.f32.mrf.mxu0
      %v1878 = vadd.f32 %v1505, %v1877
      %v1879 = vpop.f32.mrf.mxu0
      %v1880 = vadd.f32 %v1505, %v1879
      %1881 = vmatmul.bf16.gmra.mxu0 %v1369
      %v1882 = vpop.f32.mrf.mxu0
      %v1883 = vadd.f32 %v1505, %v1882
      %v1884 = vpop.f32.mrf.mxu0
      %v1885 = vadd.f32 %v1505, %v1884
      %1886 = vmatmul.bf16.gmra.mxu0 %v1371
      %v1887 = vpop.f32.mrf.mxu0
      %v1888 = vadd.f32 %v1505, %v1887
      %v1889 = vpop.f32.mrf.mxu0
      %v1890 = vadd.f32 %v1505, %v1889
      %1891 = vmatmul.bf16.gmra.mxu0 %v1373
      %v1892 = vpop.f32.mrf.mxu0
      %v1893 = vadd.f32 %v1505, %v1892
      %v1894 = vpop.f32.mrf.mxu0
      %v1895 = vadd.f32 %v1505, %v1894
      %1896 = vmatmul.bf16.gmra.mxu0 %v1375
      %v1897 = vpop.f32.mrf.mxu0
      %v1898 = vadd.f32 %v1505, %v1897
      %v1899 = vpop.f32.mrf.mxu0
      %v1900 = vadd.f32 %v1505, %v1899
      %1901 = vmatmul.bf16.gmra.mxu0 %v1377
      %v1902 = vpop.f32.mrf.mxu0
      %v1903 = vadd.f32 %v1505, %v1902
      %v1904 = vpop.f32.mrf.mxu0
      %v1905 = vadd.f32 %v1505, %v1904
      %1906 = vmatmul.bf16.gmra.mxu0 %v1379
      %v1907 = vpop.f32.mrf.mxu0
      %v1908 = vadd.f32 %v1505, %v1907
      %v1909 = vpop.f32.mrf.mxu0
      %v1910 = vadd.f32 %v1505, %v1909
      %1911 = vmatmul.bf16.gmra.mxu0 %v1381
      %v1912 = vpop.f32.mrf.mxu0
      %v1913 = vadd.f32 %v1505, %v1912
      %v1914 = vpop.f32.mrf.mxu0
      %v1915 = vadd.f32 %v1505, %v1914
      %1916 = vmatmul.bf16.gmra.mxu0 %v1383
      %v1917 = vpop.f32.mrf.mxu0
      %v1918 = vadd.f32 %v1505, %v1917
      %v1919 = vpop.f32.mrf.mxu0
      %v1920 = vadd.f32 %v1505, %v1919
      %1921 = vmatmul.bf16.gmra.mxu0 %v1385
      %v1922 = vpop.f32.mrf.mxu0
      %v1923 = vadd.f32 %v1505, %v1922
      %v1924 = vpop.f32.mrf.mxu0
      %v1925 = vadd.f32 %v1505, %v1924
      %1926 = vmatmul.bf16.gmra.mxu0 %v1387
      %v1927 = vpop.f32.mrf.mxu0
      %v1928 = vadd.f32 %v1505, %v1927
      %v1929 = vpop.f32.mrf.mxu0
      %v1930 = vadd.f32 %v1505, %v1929
      %1931 = vmatmul.bf16.gmra.mxu0 %v1389
      %v1932 = vpop.f32.mrf.mxu0
      %v1933 = vadd.f32 %v1505, %v1932
      %v1934 = vpop.f32.mrf.mxu0
      %v1935 = vadd.f32 %v1505, %v1934
      %1936 = vmatmul.bf16.gmra.mxu0 %v1391
      %v1937 = vpop.f32.mrf.mxu0
      %v1938 = vadd.f32 %v1505, %v1937
      %v1939 = vpop.f32.mrf.mxu0
      %v1940 = vadd.f32 %v1505, %v1939
      %1941 = vmatmul.bf16.gmra.mxu0 %v1393
      %v1942 = vpop.f32.mrf.mxu0
      %v1943 = vadd.f32 %v1505, %v1942
      %v1944 = vpop.f32.mrf.mxu0
      %v1945 = vadd.f32 %v1505, %v1944
      %1946 = vmatmul.bf16.gmra.mxu0 %v1395
      %v1947 = vpop.f32.mrf.mxu0
      %v1948 = vadd.f32 %v1505, %v1947
      %v1949 = vpop.f32.mrf.mxu0
      %v1950 = vadd.f32 %v1505, %v1949
      %1951 = vmatmul.bf16.gmra.mxu0 %v1397
      %v1952 = vpop.f32.mrf.mxu0
      %v1953 = vadd.f32 %v1505, %v1952
      %v1954 = vpop.f32.mrf.mxu0
      %v1955 = vadd.f32 %v1505, %v1954
      %1956 = vmatmul.bf16.gmra.mxu0 %v1399
      %v1957 = vpop.f32.mrf.mxu0
      %v1958 = vadd.f32 %v1505, %v1957
      %v1959 = vpop.f32.mrf.mxu0
      %v1960 = vadd.f32 %v1505, %v1959
      %1961 = vmatmul.bf16.gmra.mxu0 %v1401
      %v1962 = vpop.f32.mrf.mxu0
      %v1963 = vadd.f32 %v1505, %v1962
      %v1964 = vpop.f32.mrf.mxu0
      %v1965 = vadd.f32 %v1505, %v1964
      %1966 = vmatmul.bf16.gmra.mxu0 %v1403
      %v1967 = vpop.f32.mrf.mxu0
      %v1968 = vadd.f32 %v1505, %v1967
      %v1969 = vpop.f32.mrf.mxu0
      %v1970 = vadd.f32 %v1505, %v1969
      %1971 = vmatmul.bf16.gmra.mxu0 %v1405
      %v1972 = vpop.f32.mrf.mxu0
      %v1973 = vadd.f32 %v1505, %v1972
      %v1974 = vpop.f32.mrf.mxu0
      %v1975 = vadd.f32 %v1505, %v1974
      %1976 = vmatmul.bf16.gmra.mxu0 %v1407
      %v1977 = vpop.f32.mrf.mxu0
      %v1978 = vadd.f32 %v1505, %v1977
      %v1979 = vpop.f32.mrf.mxu0
      %v1980 = vadd.f32 %v1505, %v1979
      %1981 = vmatmul.bf16.gmra.mxu0 %v1409
      %v1982 = vpop.f32.mrf.mxu0
      %v1983 = vadd.f32 %v1505, %v1982
      %v1984 = vpop.f32.mrf.mxu0
      %v1985 = vadd.f32 %v1505, %v1984
      %1986 = vmatmul.bf16.gmra.mxu0 %v1411
      %v1987 = vpop.f32.mrf.mxu0
      %v1988 = vadd.f32 %v1505, %v1987
      %v1989 = vpop.f32.mrf.mxu0
      %v1990 = vadd.f32 %v1505, %v1989
      %1991 = vmatmul.bf16.gmra.mxu0 %v1413
      %v1992 = vpop.f32.mrf.mxu0
      %v1993 = vadd.f32 %v1505, %v1992
      %v1994 = vpop.f32.mrf.mxu0
      %v1995 = vadd.f32 %v1505, %v1994
      %1996 = vmatmul.bf16.gmra.mxu0 %v1415
      %v1997 = vpop.f32.mrf.mxu0
      %v1998 = vadd.f32 %v1505, %v1997
      %v1999 = vpop.f32.mrf.mxu0
      %v2000 = vadd.f32 %v1505, %v1999
      %2001 = vmatmul.bf16.gmra.mxu0 %v1417
      %v2002 = vpop.f32.mrf.mxu0
      %v2003 = vadd.f32 %v1505, %v2002
      %v2004 = vpop.f32.mrf.mxu0
      %v2005 = vadd.f32 %v1505, %v2004
      %2006 = vmatmul.bf16.gmra.mxu0 %v1419
      %v2007 = vpop.f32.mrf.mxu0
      %v2008 = vadd.f32 %v1505, %v2007
      %v2009 = vpop.f32.mrf.mxu0
      %v2010 = vadd.f32 %v1505, %v2009
      %2011 = vmatmul.bf16.gmra.mxu0 %v1421
      %v2012 = vpop.f32.mrf.mxu0
      %v2013 = vadd.f32 %v1505, %v2012
      %v2014 = vpop.f32.mrf.mxu0
      %v2015 = vadd.f32 %v1505, %v2014
      %2016 = vmatmul.bf16.gmra.mxu0 %v1423
      %v2017 = vpop.f32.mrf.mxu0
      %v2018 = vadd.f32 %v1505, %v2017
      %v2019 = vpop.f32.mrf.mxu0
      %v2020 = vadd.f32 %v1505, %v2019
      %2021 = vmatmul.bf16.gmra.mxu0 %v1425
      %v2022 = vpop.f32.mrf.mxu0
      %v2023 = vadd.f32 %v1505, %v2022
      %v2024 = vpop.f32.mrf.mxu0
      %v2025 = vadd.f32 %v1505, %v2024
      %2026 = vmatmul.bf16.gmra.mxu0 %v1427
      %v2027 = vpop.f32.mrf.mxu0
      %v2028 = vadd.f32 %v1505, %v2027
      %v2029 = vpop.f32.mrf.mxu0
      %v2030 = vadd.f32 %v1505, %v2029
      %2031 = vmatmul.bf16.gmra.mxu0 %v1429
      %v2032 = vpop.f32.mrf.mxu0
      %v2033 = vadd.f32 %v1505, %v2032
      %v2034 = vpop.f32.mrf.mxu0
      %v2035 = vadd.f32 %v1505, %v2034
      %2036 = vmatmul.bf16.gmra.mxu0 %v1431
      %v2037 = vpop.f32.mrf.mxu0
      %v2038 = vadd.f32 %v1505, %v2037
      %v2039 = vpop.f32.mrf.mxu0
      %v2040 = vadd.f32 %v1505, %v2039
      %2041 = vmatmul.bf16.gmra.mxu0 %v1433
      %v2042 = vpop.f32.mrf.mxu0
      %v2043 = vadd.f32 %v1505, %v2042
      %v2044 = vpop.f32.mrf.mxu0
      %v2045 = vadd.f32 %v1505, %v2044
      %2046 = vmatmul.bf16.gmra.mxu0 %v1435
      %v2047 = vpop.f32.mrf.mxu0
      %v2048 = vadd.f32 %v1505, %v2047
      %v2049 = vpop.f32.mrf.mxu0
      %v2050 = vadd.f32 %v1505, %v2049
      %2051 = vmatmul.bf16.gmra.mxu0 %v1437
      %v2052 = vpop.f32.mrf.mxu0
      %v2053 = vadd.f32 %v1505, %v2052
      %v2054 = vpop.f32.mrf.mxu0
      %v2055 = vadd.f32 %v1505, %v2054
      %2056 = vdwg.mxu0
      %2057 = vmatpush.bf16.msra.mxu0 %v1765
      %2058 = vmatpush.bf16.msra.mxu0 %v1761
      %2059 = vmatpush.bf16.msra.mxu0 %v1757
      %2060 = vmatpush.bf16.msra.mxu0 %v1753
      %2061 = vmatpush.bf16.msra.mxu0 %v1749
      %2062 = vmatpush.bf16.msra.mxu0 %v1745
      %2063 = vmatpush.bf16.msra.mxu0 %v1741
      %2064 = vmatpush.bf16.msra.mxu0 %v1737
      %2065 = vmatmul.bf16.gmra.mxu0 %v1354
      %v2066 = vpop.f32.mrf.mxu0
      %v2067 = vadd.f32 %v1843, %v2066
      %v2068 = vpop.f32.mrf.mxu0
      %v2069 = vadd.f32 %v1845, %v2068
      %2070 = vmatmul.bf16.gmra.mxu0 %v1356
      %v2071 = vpop.f32.mrf.mxu0
      %v2072 = vadd.f32 %v1848, %v2071
      %v2073 = vpop.f32.mrf.mxu0
      %v2074 = vadd.f32 %v1850, %v2073
      %2075 = vmatmul.bf16.gmra.mxu0 %v1358
      %v2076 = vpop.f32.mrf.mxu0
      %v2077 = vadd.f32 %v1853, %v2076
      %v2078 = vpop.f32.mrf.mxu0
      %v2079 = vadd.f32 %v1855, %v2078
      %2080 = vmatmul.bf16.gmra.mxu0 %v1360
      %v2081 = vpop.f32.mrf.mxu0
      %v2082 = vadd.f32 %v1858, %v2081
      %v2083 = vpop.f32.mrf.mxu0
      %v2084 = vadd.f32 %v1860, %v2083
      %2085 = vmatmul.bf16.gmra.mxu0 %v1362
      %v2086 = vpop.f32.mrf.mxu0
      %v2087 = vadd.f32 %v1863, %v2086
      %v2088 = vpop.f32.mrf.mxu0
      %v2089 = vadd.f32 %v1865, %v2088
      %2090 = vmatmul.bf16.gmra.mxu0 %v1364
      %v2091 = vpop.f32.mrf.mxu0
      %v2092 = vadd.f32 %v1868, %v2091
      %v2093 = vpop.f32.mrf.mxu0
      %v2094 = vadd.f32 %v1870, %v2093
      %2095 = vmatmul.bf16.gmra.mxu0 %v1366
      %v2096 = vpop.f32.mrf.mxu0
      %v2097 = vadd.f32 %v1873, %v2096
      %v2098 = vpop.f32.mrf.mxu0
      %v2099 = vadd.f32 %v1875, %v2098
      %2100 = vmatmul.bf16.gmra.mxu0 %v1368
      %v2101 = vpop.f32.mrf.mxu0
      %v2102 = vadd.f32 %v1878, %v2101
      %v2103 = vpop.f32.mrf.mxu0
      %v2104 = vadd.f32 %v1880, %v2103
      %2105 = vmatmul.bf16.gmra.mxu0 %v1370
      %v2106 = vpop.f32.mrf.mxu0
      %v2107 = vadd.f32 %v1883, %v2106
      %v2108 = vpop.f32.mrf.mxu0
      %v2109 = vadd.f32 %v1885, %v2108
      %2110 = vmatmul.bf16.gmra.mxu0 %v1372
      %v2111 = vpop.f32.mrf.mxu0
      %v2112 = vadd.f32 %v1888, %v2111
      %v2113 = vpop.f32.mrf.mxu0
      %v2114 = vadd.f32 %v1890, %v2113
      %2115 = vmatmul.bf16.gmra.mxu0 %v1374
      %v2116 = vpop.f32.mrf.mxu0
      %v2117 = vadd.f32 %v1893, %v2116
      %v2118 = vpop.f32.mrf.mxu0
      %v2119 = vadd.f32 %v1895, %v2118
      %2120 = vmatmul.bf16.gmra.mxu0 %v1376
      %v2121 = vpop.f32.mrf.mxu0
      %v2122 = vadd.f32 %v1898, %v2121
      %v2123 = vpop.f32.mrf.mxu0
      %v2124 = vadd.f32 %v1900, %v2123
      %2125 = vmatmul.bf16.gmra.mxu0 %v1378
      %v2126 = vpop.f32.mrf.mxu0
      %v2127 = vadd.f32 %v1903, %v2126
      %v2128 = vpop.f32.mrf.mxu0
      %v2129 = vadd.f32 %v1905, %v2128
      %2130 = vmatmul.bf16.gmra.mxu0 %v1380
      %v2131 = vpop.f32.mrf.mxu0
      %v2132 = vadd.f32 %v1908, %v2131
      %v2133 = vpop.f32.mrf.mxu0
      %v2134 = vadd.f32 %v1910, %v2133
      %2135 = vmatmul.bf16.gmra.mxu0 %v1382
      %v2136 = vpop.f32.mrf.mxu0
      %v2137 = vadd.f32 %v1913, %v2136
      %v2138 = vpop.f32.mrf.mxu0
      %v2139 = vadd.f32 %v1915, %v2138
      %2140 = vmatmul.bf16.gmra.mxu0 %v1384
      %v2141 = vpop.f32.mrf.mxu0
      %v2142 = vadd.f32 %v1918, %v2141
      %v2143 = vpop.f32.mrf.mxu0
      %v2144 = vadd.f32 %v1920, %v2143
      %2145 = vmatmul.bf16.gmra.mxu0 %v1386
      %v2146 = vpop.f32.mrf.mxu0
      %v2147 = vadd.f32 %v1923, %v2146
      %v2148 = vpop.f32.mrf.mxu0
      %v2149 = vadd.f32 %v1925, %v2148
      %2150 = vmatmul.bf16.gmra.mxu0 %v1388
      %v2151 = vpop.f32.mrf.mxu0
      %v2152 = vadd.f32 %v1928, %v2151
      %v2153 = vpop.f32.mrf.mxu0
      %v2154 = vadd.f32 %v1930, %v2153
      %2155 = vmatmul.bf16.gmra.mxu0 %v1390
      %v2156 = vpop.f32.mrf.mxu0
      %v2157 = vadd.f32 %v1933, %v2156
      %v2158 = vpop.f32.mrf.mxu0
      %v2159 = vadd.f32 %v1935, %v2158
      %2160 = vmatmul.bf16.gmra.mxu0 %v1392
      %v2161 = vpop.f32.mrf.mxu0
      %v2162 = vadd.f32 %v1938, %v2161
      %v2163 = vpop.f32.mrf.mxu0
      %v2164 = vadd.f32 %v1940, %v2163
      %2165 = vmatmul.bf16.gmra.mxu0 %v1394
      %v2166 = vpop.f32.mrf.mxu0
      %v2167 = vadd.f32 %v1943, %v2166
      %v2168 = vpop.f32.mrf.mxu0
      %v2169 = vadd.f32 %v1945, %v2168
      %2170 = vmatmul.bf16.gmra.mxu0 %v1396
      %v2171 = vpop.f32.mrf.mxu0
      %v2172 = vadd.f32 %v1948, %v2171
      %v2173 = vpop.f32.mrf.mxu0
      %v2174 = vadd.f32 %v1950, %v2173
      %2175 = vmatmul.bf16.gmra.mxu0 %v1398
      %v2176 = vpop.f32.mrf.mxu0
      %v2177 = vadd.f32 %v1953, %v2176
      %v2178 = vpop.f32.mrf.mxu0
      %v2179 = vadd.f32 %v1955, %v2178
      %2180 = vmatmul.bf16.gmra.mxu0 %v1400
      %v2181 = vpop.f32.mrf.mxu0
      %v2182 = vadd.f32 %v1958, %v2181
      %v2183 = vpop.f32.mrf.mxu0
      %v2184 = vadd.f32 %v1960, %v2183
      %2185 = vmatmul.bf16.gmra.mxu0 %v1402
      %v2186 = vpop.f32.mrf.mxu0
      %v2187 = vadd.f32 %v1963, %v2186
      %v2188 = vpop.f32.mrf.mxu0
      %v2189 = vadd.f32 %v1965, %v2188
      %2190 = vmatmul.bf16.gmra.mxu0 %v1404
      %v2191 = vpop.f32.mrf.mxu0
      %v2192 = vadd.f32 %v1968, %v2191
      %v2193 = vpop.f32.mrf.mxu0
      %v2194 = vadd.f32 %v1970, %v2193
      %2195 = vmatmul.bf16.gmra.mxu0 %v1406
      %v2196 = vpop.f32.mrf.mxu0
      %v2197 = vadd.f32 %v1973, %v2196
      %v2198 = vpop.f32.mrf.mxu0
      %v2199 = vadd.f32 %v1975, %v2198
      %2200 = vmatmul.bf16.gmra.mxu0 %v1408
      %v2201 = vpop.f32.mrf.mxu0
      %v2202 = vadd.f32 %v1978, %v2201
      %v2203 = vpop.f32.mrf.mxu0
      %v2204 = vadd.f32 %v1980, %v2203
      %2205 = vmatmul.bf16.gmra.mxu0 %v1410
      %v2206 = vpop.f32.mrf.mxu0
      %v2207 = vadd.f32 %v1983, %v2206
      %v2208 = vpop.f32.mrf.mxu0
      %v2209 = vadd.f32 %v1985, %v2208
      %2210 = vmatmul.bf16.gmra.mxu0 %v1412
      %v2211 = vpop.f32.mrf.mxu0
      %v2212 = vadd.f32 %v1988, %v2211
      %v2213 = vpop.f32.mrf.mxu0
      %v2214 = vadd.f32 %v1990, %v2213
      %2215 = vmatmul.bf16.gmra.mxu0 %v1414
      %v2216 = vpop.f32.mrf.mxu0
      %v2217 = vadd.f32 %v1993, %v2216
      %v2218 = vpop.f32.mrf.mxu0
      %v2219 = vadd.f32 %v1995, %v2218
      %2220 = vmatmul.bf16.gmra.mxu0 %v1416
      %v2221 = vpop.f32.mrf.mxu0
      %v2222 = vadd.f32 %v1998, %v2221
      %v2223 = vpop.f32.mrf.mxu0
      %v2224 = vadd.f32 %v2000, %v2223
      %2225 = vmatmul.bf16.gmra.mxu0 %v1418
      %v2226 = vpop.f32.mrf.mxu0
      %v2227 = vadd.f32 %v2003, %v2226
      %v2228 = vpop.f32.mrf.mxu0
      %v2229 = vadd.f32 %v2005, %v2228
      %2230 = vmatmul.bf16.gmra.mxu0 %v1420
      %v2231 = vpop.f32.mrf.mxu0
      %v2232 = vadd.f32 %v2008, %v2231
      %v2233 = vpop.f32.mrf.mxu0
      %v2234 = vadd.f32 %v2010, %v2233
      %2235 = vmatmul.bf16.gmra.mxu0 %v1422
      %v2236 = vpop.f32.mrf.mxu0
      %v2237 = vadd.f32 %v2013, %v2236
      %v2238 = vpop.f32.mrf.mxu0
      %v2239 = vadd.f32 %v2015, %v2238
      %2240 = vmatmul.bf16.gmra.mxu0 %v1424
      %v2241 = vpop.f32.mrf.mxu0
      %v2242 = vadd.f32 %v2018, %v2241
      %v2243 = vpop.f32.mrf.mxu0
      %v2244 = vadd.f32 %v2020, %v2243
      %2245 = vmatmul.bf16.gmra.mxu0 %v1426
      %v2246 = vpop.f32.mrf.mxu0
      %v2247 = vadd.f32 %v2023, %v2246
      %v2248 = vpop.f32.mrf.mxu0
      %v2249 = vadd.f32 %v2025, %v2248
      %2250 = vmatmul.bf16.gmra.mxu0 %v1428
      %v2251 = vpop.f32.mrf.mxu0
      %v2252 = vadd.f32 %v2028, %v2251
      %v2253 = vpop.f32.mrf.mxu0
      %v2254 = vadd.f32 %v2030, %v2253
      %2255 = vmatmul.bf16.gmra.mxu0 %v1430
      %v2256 = vpop.f32.mrf.mxu0
      %v2257 = vadd.f32 %v2033, %v2256
      %v2258 = vpop.f32.mrf.mxu0
      %v2259 = vadd.f32 %v2035, %v2258
      %2260 = vmatmul.bf16.gmra.mxu0 %v1432
      %v2261 = vpop.f32.mrf.mxu0
      %v2262 = vadd.f32 %v2038, %v2261
      %v2263 = vpop.f32.mrf.mxu0
      %v2264 = vadd.f32 %v2040, %v2263
      %2265 = vmatmul.bf16.gmra.mxu0 %v1434
      %v2266 = vpop.f32.mrf.mxu0
      %v2267 = vadd.f32 %v2043, %v2266
      %v2268 = vpop.f32.mrf.mxu0
      %v2269 = vadd.f32 %v2045, %v2268
      %2270 = vmatmul.bf16.gmra.mxu0 %v1436
      %v2271 = vpop.f32.mrf.mxu0
      %v2272 = vadd.f32 %v2048, %v2271
      %v2273 = vpop.f32.mrf.mxu0
      %v2274 = vadd.f32 %v2050, %v2273
      %2275 = vmatmul.bf16.gmra.mxu0 %v1438
      %v2276 = vpop.f32.mrf.mxu0
      %v2277 = vadd.f32 %v2053, %v2276
      %v2278 = vpop.f32.mrf.mxu0
      %v2279 = vadd.f32 %v2055, %v2278
      %2280 = vdwg.mxu0
      %2281 = vmatpush.bf16.msra.mxu0 %v1734
      %2282 = vmatpush.bf16.msra.mxu0 %v1730
      %2283 = vmatpush.bf16.msra.mxu0 %v1726
      %2284 = vmatpush.bf16.msra.mxu0 %v1722
      %2285 = vmatpush.bf16.msra.mxu0 %v1718
      %2286 = vmatpush.bf16.msra.mxu0 %v1714
      %2287 = vmatpush.bf16.msra.mxu0 %v1710
      %2288 = vmatpush.bf16.msra.mxu0 %v1706
      %2289 = vmatmul.bf16.gmra.mxu0 %v1353
      %v2290 = vpop.f32.mrf.mxu0
      %v2291 = vadd.f32 %v1506, %v2290
      %v2292 = vpop.f32.mrf.mxu0
      %v2293 = vadd.f32 %v1506, %v2292
      %2294 = vmatmul.bf16.gmra.mxu0 %v1355
      %v2295 = vpop.f32.mrf.mxu0
      %v2296 = vadd.f32 %v1506, %v2295
      %v2297 = vpop.f32.mrf.mxu0
      %v2298 = vadd.f32 %v1506, %v2297
      %2299 = vmatmul.bf16.gmra.mxu0 %v1357
      %v2300 = vpop.f32.mrf.mxu0
      %v2301 = vadd.f32 %v1506, %v2300
      %v2302 = vpop.f32.mrf.mxu0
      %v2303 = vadd.f32 %v1506, %v2302
      %2304 = vmatmul.bf16.gmra.mxu0 %v1359
      %v2305 = vpop.f32.mrf.mxu0
      %v2306 = vadd.f32 %v1506, %v2305
      %v2307 = vpop.f32.mrf.mxu0
      %v2308 = vadd.f32 %v1506, %v2307
      %2309 = vmatmul.bf16.gmra.mxu0 %v1361
      %v2310 = vpop.f32.mrf.mxu0
      %v2311 = vadd.f32 %v1506, %v2310
      %v2312 = vpop.f32.mrf.mxu0
      %v2313 = vadd.f32 %v1506, %v2312
      %2314 = vmatmul.bf16.gmra.mxu0 %v1363
      %v2315 = vpop.f32.mrf.mxu0
      %v2316 = vadd.f32 %v1506, %v2315
      %v2317 = vpop.f32.mrf.mxu0
      %v2318 = vadd.f32 %v1506, %v2317
      %2319 = vmatmul.bf16.gmra.mxu0 %v1365
      %v2320 = vpop.f32.mrf.mxu0
      %v2321 = vadd.f32 %v1506, %v2320
      %v2322 = vpop.f32.mrf.mxu0
      %v2323 = vadd.f32 %v1506, %v2322
      %2324 = vmatmul.bf16.gmra.mxu0 %v1367
      %v2325 = vpop.f32.mrf.mxu0
      %v2326 = vadd.f32 %v1506, %v2325
      %v2327 = vpop.f32.mrf.mxu0
      %v2328 = vadd.f32 %v1506, %v2327
      %2329 = vmatmul.bf16.gmra.mxu0 %v1369
      %v2330 = vpop.f32.mrf.mxu0
      %v2331 = vadd.f32 %v1506, %v2330
      %v2332 = vpop.f32.mrf.mxu0
      %v2333 = vadd.f32 %v1506, %v2332
      %2334 = vmatmul.bf16.gmra.mxu0 %v1371
      %v2335 = vpop.f32.mrf.mxu0
      %v2336 = vadd.f32 %v1506, %v2335
      %v2337 = vpop.f32.mrf.mxu0
      %v2338 = vadd.f32 %v1506, %v2337
      %2339 = vmatmul.bf16.gmra.mxu0 %v1373
      %v2340 = vpop.f32.mrf.mxu0
      %v2341 = vadd.f32 %v1506, %v2340
      %v2342 = vpop.f32.mrf.mxu0
      %v2343 = vadd.f32 %v1506, %v2342
      %2344 = vmatmul.bf16.gmra.mxu0 %v1375
      %v2345 = vpop.f32.mrf.mxu0
      %v2346 = vadd.f32 %v1506, %v2345
      %v2347 = vpop.f32.mrf.mxu0
      %v2348 = vadd.f32 %v1506, %v2347
      %2349 = vmatmul.bf16.gmra.mxu0 %v1377
      %v2350 = vpop.f32.mrf.mxu0
      %v2351 = vadd.f32 %v1506, %v2350
      %v2352 = vpop.f32.mrf.mxu0
      %v2353 = vadd.f32 %v1506, %v2352
      %2354 = vmatmul.bf16.gmra.mxu0 %v1379
      %v2355 = vpop.f32.mrf.mxu0
      %v2356 = vadd.f32 %v1506, %v2355
      %v2357 = vpop.f32.mrf.mxu0
      %v2358 = vadd.f32 %v1506, %v2357
      %2359 = vmatmul.bf16.gmra.mxu0 %v1381
      %v2360 = vpop.f32.mrf.mxu0
      %v2361 = vadd.f32 %v1506, %v2360
      %v2362 = vpop.f32.mrf.mxu0
      %v2363 = vadd.f32 %v1506, %v2362
      %2364 = vmatmul.bf16.gmra.mxu0 %v1383
      %v2365 = vpop.f32.mrf.mxu0
      %v2366 = vadd.f32 %v1506, %v2365
      %v2367 = vpop.f32.mrf.mxu0
      %v2368 = vadd.f32 %v1506, %v2367
      %2369 = vmatmul.bf16.gmra.mxu0 %v1385
      %v2370 = vpop.f32.mrf.mxu0
      %v2371 = vadd.f32 %v1506, %v2370
      %v2372 = vpop.f32.mrf.mxu0
      %v2373 = vadd.f32 %v1506, %v2372
      %2374 = vmatmul.bf16.gmra.mxu0 %v1387
      %v2375 = vpop.f32.mrf.mxu0
      %v2376 = vadd.f32 %v1506, %v2375
      %v2377 = vpop.f32.mrf.mxu0
      %v2378 = vadd.f32 %v1506, %v2377
      %2379 = vmatmul.bf16.gmra.mxu0 %v1389
      %v2380 = vpop.f32.mrf.mxu0
      %v2381 = vadd.f32 %v1506, %v2380
      %v2382 = vpop.f32.mrf.mxu0
      %v2383 = vadd.f32 %v1506, %v2382
      %2384 = vmatmul.bf16.gmra.mxu0 %v1391
      %v2385 = vpop.f32.mrf.mxu0
      %v2386 = vadd.f32 %v1506, %v2385
      %v2387 = vpop.f32.mrf.mxu0
      %v2388 = vadd.f32 %v1506, %v2387
      %2389 = vmatmul.bf16.gmra.mxu0 %v1393
      %v2390 = vpop.f32.mrf.mxu0
      %v2391 = vadd.f32 %v1506, %v2390
      %v2392 = vpop.f32.mrf.mxu0
      %v2393 = vadd.f32 %v1506, %v2392
      %2394 = vmatmul.bf16.gmra.mxu0 %v1395
      %v2395 = vpop.f32.mrf.mxu0
      %v2396 = vadd.f32 %v1506, %v2395
      %v2397 = vpop.f32.mrf.mxu0
      %v2398 = vadd.f32 %v1506, %v2397
      %2399 = vmatmul.bf16.gmra.mxu0 %v1397
      %v2400 = vpop.f32.mrf.mxu0
      %v2401 = vadd.f32 %v1506, %v2400
      %v2402 = vpop.f32.mrf.mxu0
      %v2403 = vadd.f32 %v1506, %v2402
      %2404 = vmatmul.bf16.gmra.mxu0 %v1399
      %v2405 = vpop.f32.mrf.mxu0
      %v2406 = vadd.f32 %v1506, %v2405
      %v2407 = vpop.f32.mrf.mxu0
      %v2408 = vadd.f32 %v1506, %v2407
      %2409 = vmatmul.bf16.gmra.mxu0 %v1401
      %v2410 = vpop.f32.mrf.mxu0
      %v2411 = vadd.f32 %v1506, %v2410
      %v2412 = vpop.f32.mrf.mxu0
      %v2413 = vadd.f32 %v1506, %v2412
      %2414 = vmatmul.bf16.gmra.mxu0 %v1403
      %v2415 = vpop.f32.mrf.mxu0
      %v2416 = vadd.f32 %v1506, %v2415
      %v2417 = vpop.f32.mrf.mxu0
      %v2418 = vadd.f32 %v1506, %v2417
      %2419 = vmatmul.bf16.gmra.mxu0 %v1405
      %v2420 = vpop.f32.mrf.mxu0
      %v2421 = vadd.f32 %v1506, %v2420
      %v2422 = vpop.f32.mrf.mxu0
      %v2423 = vadd.f32 %v1506, %v2422
      %2424 = vmatmul.bf16.gmra.mxu0 %v1407
      %v2425 = vpop.f32.mrf.mxu0
      %v2426 = vadd.f32 %v1506, %v2425
      %v2427 = vpop.f32.mrf.mxu0
      %v2428 = vadd.f32 %v1506, %v2427
      %2429 = vmatmul.bf16.gmra.mxu0 %v1409
      %v2430 = vpop.f32.mrf.mxu0
      %v2431 = vadd.f32 %v1506, %v2430
      %v2432 = vpop.f32.mrf.mxu0
      %v2433 = vadd.f32 %v1506, %v2432
      %2434 = vmatmul.bf16.gmra.mxu0 %v1411
      %v2435 = vpop.f32.mrf.mxu0
      %v2436 = vadd.f32 %v1506, %v2435
      %v2437 = vpop.f32.mrf.mxu0
      %v2438 = vadd.f32 %v1506, %v2437
      %2439 = vmatmul.bf16.gmra.mxu0 %v1413
      %v2440 = vpop.f32.mrf.mxu0
      %v2441 = vadd.f32 %v1506, %v2440
      %v2442 = vpop.f32.mrf.mxu0
      %v2443 = vadd.f32 %v1506, %v2442
      %2444 = vmatmul.bf16.gmra.mxu0 %v1415
      %v2445 = vpop.f32.mrf.mxu0
      %v2446 = vadd.f32 %v1506, %v2445
      %v2447 = vpop.f32.mrf.mxu0
      %v2448 = vadd.f32 %v1506, %v2447
      %2449 = vmatmul.bf16.gmra.mxu0 %v1417
      %v2450 = vpop.f32.mrf.mxu0
      %v2451 = vadd.f32 %v1506, %v2450
      %v2452 = vpop.f32.mrf.mxu0
      %v2453 = vadd.f32 %v1506, %v2452
      %2454 = vmatmul.bf16.gmra.mxu0 %v1419
      %v2455 = vpop.f32.mrf.mxu0
      %v2456 = vadd.f32 %v1506, %v2455
      %v2457 = vpop.f32.mrf.mxu0
      %v2458 = vadd.f32 %v1506, %v2457
      %2459 = vmatmul.bf16.gmra.mxu0 %v1421
      %v2460 = vpop.f32.mrf.mxu0
      %v2461 = vadd.f32 %v1506, %v2460
      %v2462 = vpop.f32.mrf.mxu0
      %v2463 = vadd.f32 %v1506, %v2462
      %2464 = vmatmul.bf16.gmra.mxu0 %v1423
      %v2465 = vpop.f32.mrf.mxu0
      %v2466 = vadd.f32 %v1506, %v2465
      %v2467 = vpop.f32.mrf.mxu0
      %v2468 = vadd.f32 %v1506, %v2467
      %2469 = vmatmul.bf16.gmra.mxu0 %v1425
      %v2470 = vpop.f32.mrf.mxu0
      %v2471 = vadd.f32 %v1506, %v2470
      %v2472 = vpop.f32.mrf.mxu0
      %v2473 = vadd.f32 %v1506, %v2472
      %2474 = vmatmul.bf16.gmra.mxu0 %v1427
      %v2475 = vpop.f32.mrf.mxu0
      %v2476 = vadd.f32 %v1506, %v2475
      %v2477 = vpop.f32.mrf.mxu0
      %v2478 = vadd.f32 %v1506, %v2477
      %2479 = vmatmul.bf16.gmra.mxu0 %v1429
      %v2480 = vpop.f32.mrf.mxu0
      %v2481 = vadd.f32 %v1506, %v2480
      %v2482 = vpop.f32.mrf.mxu0
      %v2483 = vadd.f32 %v1506, %v2482
      %2484 = vmatmul.bf16.gmra.mxu0 %v1431
      %v2485 = vpop.f32.mrf.mxu0
      %v2486 = vadd.f32 %v1506, %v2485
      %v2487 = vpop.f32.mrf.mxu0
      %v2488 = vadd.f32 %v1506, %v2487
      %2489 = vmatmul.bf16.gmra.mxu0 %v1433
      %v2490 = vpop.f32.mrf.mxu0
      %v2491 = vadd.f32 %v1506, %v2490
      %v2492 = vpop.f32.mrf.mxu0
      %v2493 = vadd.f32 %v1506, %v2492
      %2494 = vmatmul.bf16.gmra.mxu0 %v1435
      %v2495 = vpop.f32.mrf.mxu0
      %v2496 = vadd.f32 %v1506, %v2495
      %v2497 = vpop.f32.mrf.mxu0
      %v2498 = vadd.f32 %v1506, %v2497
      %2499 = vmatmul.bf16.gmra.mxu0 %v1437
      %v2500 = vpop.f32.mrf.mxu0
      %v2501 = vadd.f32 %v1506, %v2500
      %v2502 = vpop.f32.mrf.mxu0
      %v2503 = vadd.f32 %v1506, %v2502
      %2504 = vdwg.mxu0
      %2505 = vmatpush.bf16.msra.mxu0 %v1766
      %2506 = vmatpush.bf16.msra.mxu0 %v1762
      %2507 = vmatpush.bf16.msra.mxu0 %v1758
      %2508 = vmatpush.bf16.msra.mxu0 %v1754
      %2509 = vmatpush.bf16.msra.mxu0 %v1750
      %2510 = vmatpush.bf16.msra.mxu0 %v1746
      %2511 = vmatpush.bf16.msra.mxu0 %v1742
      %2512 = vmatpush.bf16.msra.mxu0 %v1738
      %2513 = vmatmul.bf16.gmra.mxu0 %v1354
      %v2514 = vpop.f32.mrf.mxu0
      %v2515 = vadd.f32 %v2291, %v2514
      %v2516 = vpop.f32.mrf.mxu0
      %v2517 = vadd.f32 %v2293, %v2516
      %2518 = vmatmul.bf16.gmra.mxu0 %v1356
      %v2519 = vpop.f32.mrf.mxu0
      %v2520 = vadd.f32 %v2296, %v2519
      %v2521 = vpop.f32.mrf.mxu0
      %v2522 = vadd.f32 %v2298, %v2521
      %2523 = vmatmul.bf16.gmra.mxu0 %v1358
      %v2524 = vpop.f32.mrf.mxu0
      %v2525 = vadd.f32 %v2301, %v2524
      %v2526 = vpop.f32.mrf.mxu0
      %v2527 = vadd.f32 %v2303, %v2526
      %2528 = vmatmul.bf16.gmra.mxu0 %v1360
      %v2529 = vpop.f32.mrf.mxu0
      %v2530 = vadd.f32 %v2306, %v2529
      %v2531 = vpop.f32.mrf.mxu0
      %v2532 = vadd.f32 %v2308, %v2531
      %2533 = vmatmul.bf16.gmra.mxu0 %v1362
      %v2534 = vpop.f32.mrf.mxu0
      %v2535 = vadd.f32 %v2311, %v2534
      %v2536 = vpop.f32.mrf.mxu0
      %v2537 = vadd.f32 %v2313, %v2536
      %2538 = vmatmul.bf16.gmra.mxu0 %v1364
      %v2539 = vpop.f32.mrf.mxu0
      %v2540 = vadd.f32 %v2316, %v2539
      %v2541 = vpop.f32.mrf.mxu0
      %v2542 = vadd.f32 %v2318, %v2541
      %2543 = vmatmul.bf16.gmra.mxu0 %v1366
      %v2544 = vpop.f32.mrf.mxu0
      %v2545 = vadd.f32 %v2321, %v2544
      %v2546 = vpop.f32.mrf.mxu0
      %v2547 = vadd.f32 %v2323, %v2546
      %2548 = vmatmul.bf16.gmra.mxu0 %v1368
      %v2549 = vpop.f32.mrf.mxu0
      %v2550 = vadd.f32 %v2326, %v2549
      %v2551 = vpop.f32.mrf.mxu0
      %v2552 = vadd.f32 %v2328, %v2551
      %2553 = vmatmul.bf16.gmra.mxu0 %v1370
      %v2554 = vpop.f32.mrf.mxu0
      %v2555 = vadd.f32 %v2331, %v2554
      %v2556 = vpop.f32.mrf.mxu0
      %v2557 = vadd.f32 %v2333, %v2556
      %2558 = vmatmul.bf16.gmra.mxu0 %v1372
      %v2559 = vpop.f32.mrf.mxu0
      %v2560 = vadd.f32 %v2336, %v2559
      %v2561 = vpop.f32.mrf.mxu0
      %v2562 = vadd.f32 %v2338, %v2561
      %2563 = vmatmul.bf16.gmra.mxu0 %v1374
      %v2564 = vpop.f32.mrf.mxu0
      %v2565 = vadd.f32 %v2341, %v2564
      %v2566 = vpop.f32.mrf.mxu0
      %v2567 = vadd.f32 %v2343, %v2566
      %2568 = vmatmul.bf16.gmra.mxu0 %v1376
      %v2569 = vpop.f32.mrf.mxu0
      %v2570 = vadd.f32 %v2346, %v2569
      %v2571 = vpop.f32.mrf.mxu0
      %v2572 = vadd.f32 %v2348, %v2571
      %2573 = vmatmul.bf16.gmra.mxu0 %v1378
      %v2574 = vpop.f32.mrf.mxu0
      %v2575 = vadd.f32 %v2351, %v2574
      %v2576 = vpop.f32.mrf.mxu0
      %v2577 = vadd.f32 %v2353, %v2576
      %2578 = vmatmul.bf16.gmra.mxu0 %v1380
      %v2579 = vpop.f32.mrf.mxu0
      %v2580 = vadd.f32 %v2356, %v2579
      %v2581 = vpop.f32.mrf.mxu0
      %v2582 = vadd.f32 %v2358, %v2581
      %2583 = vmatmul.bf16.gmra.mxu0 %v1382
      %v2584 = vpop.f32.mrf.mxu0
      %v2585 = vadd.f32 %v2361, %v2584
      %v2586 = vpop.f32.mrf.mxu0
      %v2587 = vadd.f32 %v2363, %v2586
      %2588 = vmatmul.bf16.gmra.mxu0 %v1384
      %v2589 = vpop.f32.mrf.mxu0
      %v2590 = vadd.f32 %v2366, %v2589
      %v2591 = vpop.f32.mrf.mxu0
      %v2592 = vadd.f32 %v2368, %v2591
      %2593 = vmatmul.bf16.gmra.mxu0 %v1386
      %v2594 = vpop.f32.mrf.mxu0
      %v2595 = vadd.f32 %v2371, %v2594
      %v2596 = vpop.f32.mrf.mxu0
      %v2597 = vadd.f32 %v2373, %v2596
      %2598 = vmatmul.bf16.gmra.mxu0 %v1388
      %v2599 = vpop.f32.mrf.mxu0
      %v2600 = vadd.f32 %v2376, %v2599
      %v2601 = vpop.f32.mrf.mxu0
      %v2602 = vadd.f32 %v2378, %v2601
      %2603 = vmatmul.bf16.gmra.mxu0 %v1390
      %v2604 = vpop.f32.mrf.mxu0
      %v2605 = vadd.f32 %v2381, %v2604
      %v2606 = vpop.f32.mrf.mxu0
      %v2607 = vadd.f32 %v2383, %v2606
      %2608 = vmatmul.bf16.gmra.mxu0 %v1392
      %v2609 = vpop.f32.mrf.mxu0
      %v2610 = vadd.f32 %v2386, %v2609
      %v2611 = vpop.f32.mrf.mxu0
      %v2612 = vadd.f32 %v2388, %v2611
      %2613 = vmatmul.bf16.gmra.mxu0 %v1394
      %v2614 = vpop.f32.mrf.mxu0
      %v2615 = vadd.f32 %v2391, %v2614
      %v2616 = vpop.f32.mrf.mxu0
      %v2617 = vadd.f32 %v2393, %v2616
      %2618 = vmatmul.bf16.gmra.mxu0 %v1396
      %v2619 = vpop.f32.mrf.mxu0
      %v2620 = vadd.f32 %v2396, %v2619
      %v2621 = vpop.f32.mrf.mxu0
      %v2622 = vadd.f32 %v2398, %v2621
      %2623 = vmatmul.bf16.gmra.mxu0 %v1398
      %v2624 = vpop.f32.mrf.mxu0
      %v2625 = vadd.f32 %v2401, %v2624
      %v2626 = vpop.f32.mrf.mxu0
      %v2627 = vadd.f32 %v2403, %v2626
      %2628 = vmatmul.bf16.gmra.mxu0 %v1400
      %v2629 = vpop.f32.mrf.mxu0
      %v2630 = vadd.f32 %v2406, %v2629
      %v2631 = vpop.f32.mrf.mxu0
      %v2632 = vadd.f32 %v2408, %v2631
      %2633 = vmatmul.bf16.gmra.mxu0 %v1402
      %v2634 = vpop.f32.mrf.mxu0
      %v2635 = vadd.f32 %v2411, %v2634
      %v2636 = vpop.f32.mrf.mxu0
      %v2637 = vadd.f32 %v2413, %v2636
      %2638 = vmatmul.bf16.gmra.mxu0 %v1404
      %v2639 = vpop.f32.mrf.mxu0
      %v2640 = vadd.f32 %v2416, %v2639
      %v2641 = vpop.f32.mrf.mxu0
      %v2642 = vadd.f32 %v2418, %v2641
      %2643 = vmatmul.bf16.gmra.mxu0 %v1406
      %v2644 = vpop.f32.mrf.mxu0
      %v2645 = vadd.f32 %v2421, %v2644
      %v2646 = vpop.f32.mrf.mxu0
      %v2647 = vadd.f32 %v2423, %v2646
      %2648 = vmatmul.bf16.gmra.mxu0 %v1408
      %v2649 = vpop.f32.mrf.mxu0
      %v2650 = vadd.f32 %v2426, %v2649
      %v2651 = vpop.f32.mrf.mxu0
      %v2652 = vadd.f32 %v2428, %v2651
      %2653 = vmatmul.bf16.gmra.mxu0 %v1410
      %v2654 = vpop.f32.mrf.mxu0
      %v2655 = vadd.f32 %v2431, %v2654
      %v2656 = vpop.f32.mrf.mxu0
      %v2657 = vadd.f32 %v2433, %v2656
      %2658 = vmatmul.bf16.gmra.mxu0 %v1412
      %v2659 = vpop.f32.mrf.mxu0
      %v2660 = vadd.f32 %v2436, %v2659
      %v2661 = vpop.f32.mrf.mxu0
      %v2662 = vadd.f32 %v2438, %v2661
      %2663 = vmatmul.bf16.gmra.mxu0 %v1414
      %v2664 = vpop.f32.mrf.mxu0
      %v2665 = vadd.f32 %v2441, %v2664
      %v2666 = vpop.f32.mrf.mxu0
      %v2667 = vadd.f32 %v2443, %v2666
      %2668 = vmatmul.bf16.gmra.mxu0 %v1416
      %v2669 = vpop.f32.mrf.mxu0
      %v2670 = vadd.f32 %v2446, %v2669
      %v2671 = vpop.f32.mrf.mxu0
      %v2672 = vadd.f32 %v2448, %v2671
      %2673 = vmatmul.bf16.gmra.mxu0 %v1418
      %v2674 = vpop.f32.mrf.mxu0
      %v2675 = vadd.f32 %v2451, %v2674
      %v2676 = vpop.f32.mrf.mxu0
      %v2677 = vadd.f32 %v2453, %v2676
      %2678 = vmatmul.bf16.gmra.mxu0 %v1420
      %v2679 = vpop.f32.mrf.mxu0
      %v2680 = vadd.f32 %v2456, %v2679
      %v2681 = vpop.f32.mrf.mxu0
      %v2682 = vadd.f32 %v2458, %v2681
      %2683 = vmatmul.bf16.gmra.mxu0 %v1422
      %v2684 = vpop.f32.mrf.mxu0
      %v2685 = vadd.f32 %v2461, %v2684
      %v2686 = vpop.f32.mrf.mxu0
      %v2687 = vadd.f32 %v2463, %v2686
      %2688 = vmatmul.bf16.gmra.mxu0 %v1424
      %v2689 = vpop.f32.mrf.mxu0
      %v2690 = vadd.f32 %v2466, %v2689
      %v2691 = vpop.f32.mrf.mxu0
      %v2692 = vadd.f32 %v2468, %v2691
      %2693 = vmatmul.bf16.gmra.mxu0 %v1426
      %v2694 = vpop.f32.mrf.mxu0
      %v2695 = vadd.f32 %v2471, %v2694
      %v2696 = vpop.f32.mrf.mxu0
      %v2697 = vadd.f32 %v2473, %v2696
      %2698 = vmatmul.bf16.gmra.mxu0 %v1428
      %v2699 = vpop.f32.mrf.mxu0
      %v2700 = vadd.f32 %v2476, %v2699
      %v2701 = vpop.f32.mrf.mxu0
      %v2702 = vadd.f32 %v2478, %v2701
      %2703 = vmatmul.bf16.gmra.mxu0 %v1430
      %v2704 = vpop.f32.mrf.mxu0
      %v2705 = vadd.f32 %v2481, %v2704
      %v2706 = vpop.f32.mrf.mxu0
      %v2707 = vadd.f32 %v2483, %v2706
      %2708 = vmatmul.bf16.gmra.mxu0 %v1432
      %v2709 = vpop.f32.mrf.mxu0
      %v2710 = vadd.f32 %v2486, %v2709
      %v2711 = vpop.f32.mrf.mxu0
      %v2712 = vadd.f32 %v2488, %v2711
      %2713 = vmatmul.bf16.gmra.mxu0 %v1434
      %v2714 = vpop.f32.mrf.mxu0
      %v2715 = vadd.f32 %v2491, %v2714
      %v2716 = vpop.f32.mrf.mxu0
      %v2717 = vadd.f32 %v2493, %v2716
      %2718 = vmatmul.bf16.gmra.mxu0 %v1436
      %v2719 = vpop.f32.mrf.mxu0
      %v2720 = vadd.f32 %v2496, %v2719
      %v2721 = vpop.f32.mrf.mxu0
      %v2722 = vadd.f32 %v2498, %v2721
      %2723 = vmatmul.bf16.gmra.mxu0 %v1438
      %v2724 = vpop.f32.mrf.mxu0
      %v2725 = vadd.f32 %v2501, %v2724
      %v2726 = vpop.f32.mrf.mxu0
      %v2727 = vadd.f32 %v2503, %v2726
      %2728 = vdwg.mxu0
      %2729 = vmatpush.bf16.msra.mxu0 %v1735
      %2730 = vmatpush.bf16.msra.mxu0 %v1731
      %2731 = vmatpush.bf16.msra.mxu0 %v1727
      %2732 = vmatpush.bf16.msra.mxu0 %v1723
      %2733 = vmatpush.bf16.msra.mxu0 %v1719
      %2734 = vmatpush.bf16.msra.mxu0 %v1715
      %2735 = vmatpush.bf16.msra.mxu0 %v1711
      %2736 = vmatpush.bf16.msra.mxu0 %v1707
      %2737 = vmatmul.bf16.gmra.mxu0 %v1353
      %v2738 = vpop.f32.mrf.mxu0
      %v2739 = vadd.f32 %v1507, %v2738
      %v2740 = vpop.f32.mrf.mxu0
      %v2741 = vadd.f32 %v1507, %v2740
      %2742 = vmatmul.bf16.gmra.mxu0 %v1355
      %v2743 = vpop.f32.mrf.mxu0
      %v2744 = vadd.f32 %v1507, %v2743
      %v2745 = vpop.f32.mrf.mxu0
      %v2746 = vadd.f32 %v1507, %v2745
      %2747 = vmatmul.bf16.gmra.mxu0 %v1357
      %v2748 = vpop.f32.mrf.mxu0
      %v2749 = vadd.f32 %v1507, %v2748
      %v2750 = vpop.f32.mrf.mxu0
      %v2751 = vadd.f32 %v1507, %v2750
      %2752 = vmatmul.bf16.gmra.mxu0 %v1359
      %v2753 = vpop.f32.mrf.mxu0
      %v2754 = vadd.f32 %v1507, %v2753
      %v2755 = vpop.f32.mrf.mxu0
      %v2756 = vadd.f32 %v1507, %v2755
      %2757 = vmatmul.bf16.gmra.mxu0 %v1361
      %v2758 = vpop.f32.mrf.mxu0
      %v2759 = vadd.f32 %v1507, %v2758
      %v2760 = vpop.f32.mrf.mxu0
      %v2761 = vadd.f32 %v1507, %v2760
      %2762 = vmatmul.bf16.gmra.mxu0 %v1363
      %v2763 = vpop.f32.mrf.mxu0
      %v2764 = vadd.f32 %v1507, %v2763
      %v2765 = vpop.f32.mrf.mxu0
      %v2766 = vadd.f32 %v1507, %v2765
      %2767 = vmatmul.bf16.gmra.mxu0 %v1365
      %v2768 = vpop.f32.mrf.mxu0
      %v2769 = vadd.f32 %v1507, %v2768
      %v2770 = vpop.f32.mrf.mxu0
      %v2771 = vadd.f32 %v1507, %v2770
      %2772 = vmatmul.bf16.gmra.mxu0 %v1367
      %v2773 = vpop.f32.mrf.mxu0
      %v2774 = vadd.f32 %v1507, %v2773
      %v2775 = vpop.f32.mrf.mxu0
      %v2776 = vadd.f32 %v1507, %v2775
      %2777 = vmatmul.bf16.gmra.mxu0 %v1369
      %v2778 = vpop.f32.mrf.mxu0
      %v2779 = vadd.f32 %v1507, %v2778
      %v2780 = vpop.f32.mrf.mxu0
      %v2781 = vadd.f32 %v1507, %v2780
      %2782 = vmatmul.bf16.gmra.mxu0 %v1371
      %v2783 = vpop.f32.mrf.mxu0
      %v2784 = vadd.f32 %v1507, %v2783
      %v2785 = vpop.f32.mrf.mxu0
      %v2786 = vadd.f32 %v1507, %v2785
      %2787 = vmatmul.bf16.gmra.mxu0 %v1373
      %v2788 = vpop.f32.mrf.mxu0
      %v2789 = vadd.f32 %v1507, %v2788
      %v2790 = vpop.f32.mrf.mxu0
      %v2791 = vadd.f32 %v1507, %v2790
      %2792 = vmatmul.bf16.gmra.mxu0 %v1375
      %v2793 = vpop.f32.mrf.mxu0
      %v2794 = vadd.f32 %v1507, %v2793
      %v2795 = vpop.f32.mrf.mxu0
      %v2796 = vadd.f32 %v1507, %v2795
      %2797 = vmatmul.bf16.gmra.mxu0 %v1377
      %v2798 = vpop.f32.mrf.mxu0
      %v2799 = vadd.f32 %v1507, %v2798
      %v2800 = vpop.f32.mrf.mxu0
      %v2801 = vadd.f32 %v1507, %v2800
      %2802 = vmatmul.bf16.gmra.mxu0 %v1379
      %v2803 = vpop.f32.mrf.mxu0
      %v2804 = vadd.f32 %v1507, %v2803
      %v2805 = vpop.f32.mrf.mxu0
      %v2806 = vadd.f32 %v1507, %v2805
      %2807 = vmatmul.bf16.gmra.mxu0 %v1381
      %v2808 = vpop.f32.mrf.mxu0
      %v2809 = vadd.f32 %v1507, %v2808
      %v2810 = vpop.f32.mrf.mxu0
      %v2811 = vadd.f32 %v1507, %v2810
      %2812 = vmatmul.bf16.gmra.mxu0 %v1383
      %v2813 = vpop.f32.mrf.mxu0
      %v2814 = vadd.f32 %v1507, %v2813
      %v2815 = vpop.f32.mrf.mxu0
      %v2816 = vadd.f32 %v1507, %v2815
      %2817 = vmatmul.bf16.gmra.mxu0 %v1385
      %v2818 = vpop.f32.mrf.mxu0
      %v2819 = vadd.f32 %v1507, %v2818
      %v2820 = vpop.f32.mrf.mxu0
      %v2821 = vadd.f32 %v1507, %v2820
      %2822 = vmatmul.bf16.gmra.mxu0 %v1387
      %v2823 = vpop.f32.mrf.mxu0
      %v2824 = vadd.f32 %v1507, %v2823
      %v2825 = vpop.f32.mrf.mxu0
      %v2826 = vadd.f32 %v1507, %v2825
      %2827 = vmatmul.bf16.gmra.mxu0 %v1389
      %v2828 = vpop.f32.mrf.mxu0
      %v2829 = vadd.f32 %v1507, %v2828
      %v2830 = vpop.f32.mrf.mxu0
      %v2831 = vadd.f32 %v1507, %v2830
      %2832 = vmatmul.bf16.gmra.mxu0 %v1391
      %v2833 = vpop.f32.mrf.mxu0
      %v2834 = vadd.f32 %v1507, %v2833
      %v2835 = vpop.f32.mrf.mxu0
      %v2836 = vadd.f32 %v1507, %v2835
      %2837 = vmatmul.bf16.gmra.mxu0 %v1393
      %v2838 = vpop.f32.mrf.mxu0
      %v2839 = vadd.f32 %v1507, %v2838
      %v2840 = vpop.f32.mrf.mxu0
      %v2841 = vadd.f32 %v1507, %v2840
      %2842 = vmatmul.bf16.gmra.mxu0 %v1395
      %v2843 = vpop.f32.mrf.mxu0
      %v2844 = vadd.f32 %v1507, %v2843
      %v2845 = vpop.f32.mrf.mxu0
      %v2846 = vadd.f32 %v1507, %v2845
      %2847 = vmatmul.bf16.gmra.mxu0 %v1397
      %v2848 = vpop.f32.mrf.mxu0
      %v2849 = vadd.f32 %v1507, %v2848
      %v2850 = vpop.f32.mrf.mxu0
      %v2851 = vadd.f32 %v1507, %v2850
      %2852 = vmatmul.bf16.gmra.mxu0 %v1399
      %v2853 = vpop.f32.mrf.mxu0
      %v2854 = vadd.f32 %v1507, %v2853
      %v2855 = vpop.f32.mrf.mxu0
      %v2856 = vadd.f32 %v1507, %v2855
      %2857 = vmatmul.bf16.gmra.mxu0 %v1401
      %v2858 = vpop.f32.mrf.mxu0
      %v2859 = vadd.f32 %v1507, %v2858
      %v2860 = vpop.f32.mrf.mxu0
      %v2861 = vadd.f32 %v1507, %v2860
      %2862 = vmatmul.bf16.gmra.mxu0 %v1403
      %v2863 = vpop.f32.mrf.mxu0
      %v2864 = vadd.f32 %v1507, %v2863
      %v2865 = vpop.f32.mrf.mxu0
      %v2866 = vadd.f32 %v1507, %v2865
      %2867 = vmatmul.bf16.gmra.mxu0 %v1405
      %v2868 = vpop.f32.mrf.mxu0
      %v2869 = vadd.f32 %v1507, %v2868
      %v2870 = vpop.f32.mrf.mxu0
      %v2871 = vadd.f32 %v1507, %v2870
      %2872 = vmatmul.bf16.gmra.mxu0 %v1407
      %v2873 = vpop.f32.mrf.mxu0
      %v2874 = vadd.f32 %v1507, %v2873
      %v2875 = vpop.f32.mrf.mxu0
      %v2876 = vadd.f32 %v1507, %v2875
      %2877 = vmatmul.bf16.gmra.mxu0 %v1409
      %v2878 = vpop.f32.mrf.mxu0
      %v2879 = vadd.f32 %v1507, %v2878
      %v2880 = vpop.f32.mrf.mxu0
      %v2881 = vadd.f32 %v1507, %v2880
      %2882 = vmatmul.bf16.gmra.mxu0 %v1411
      %v2883 = vpop.f32.mrf.mxu0
      %v2884 = vadd.f32 %v1507, %v2883
      %v2885 = vpop.f32.mrf.mxu0
      %v2886 = vadd.f32 %v1507, %v2885
      %2887 = vmatmul.bf16.gmra.mxu0 %v1413
      %v2888 = vpop.f32.mrf.mxu0
      %v2889 = vadd.f32 %v1507, %v2888
      %v2890 = vpop.f32.mrf.mxu0
      %v2891 = vadd.f32 %v1507, %v2890
      %2892 = vmatmul.bf16.gmra.mxu0 %v1415
      %v2893 = vpop.f32.mrf.mxu0
      %v2894 = vadd.f32 %v1507, %v2893
      %v2895 = vpop.f32.mrf.mxu0
      %v2896 = vadd.f32 %v1507, %v2895
      %2897 = vmatmul.bf16.gmra.mxu0 %v1417
      %v2898 = vpop.f32.mrf.mxu0
      %v2899 = vadd.f32 %v1507, %v2898
      %v2900 = vpop.f32.mrf.mxu0
      %v2901 = vadd.f32 %v1507, %v2900
      %2902 = vmatmul.bf16.gmra.mxu0 %v1419
      %v2903 = vpop.f32.mrf.mxu0
      %v2904 = vadd.f32 %v1507, %v2903
      %v2905 = vpop.f32.mrf.mxu0
      %v2906 = vadd.f32 %v1507, %v2905
      %2907 = vmatmul.bf16.gmra.mxu0 %v1421
      %v2908 = vpop.f32.mrf.mxu0
      %v2909 = vadd.f32 %v1507, %v2908
      %v2910 = vpop.f32.mrf.mxu0
      %v2911 = vadd.f32 %v1507, %v2910
      %2912 = vmatmul.bf16.gmra.mxu0 %v1423
      %v2913 = vpop.f32.mrf.mxu0
      %v2914 = vadd.f32 %v1507, %v2913
      %v2915 = vpop.f32.mrf.mxu0
      %v2916 = vadd.f32 %v1507, %v2915
      %2917 = vmatmul.bf16.gmra.mxu0 %v1425
      %v2918 = vpop.f32.mrf.mxu0
      %v2919 = vadd.f32 %v1507, %v2918
      %v2920 = vpop.f32.mrf.mxu0
      %v2921 = vadd.f32 %v1507, %v2920
      %2922 = vmatmul.bf16.gmra.mxu0 %v1427
      %v2923 = vpop.f32.mrf.mxu0
      %v2924 = vadd.f32 %v1507, %v2923
      %v2925 = vpop.f32.mrf.mxu0
      %v2926 = vadd.f32 %v1507, %v2925
      %2927 = vmatmul.bf16.gmra.mxu0 %v1429
      %v2928 = vpop.f32.mrf.mxu0
      %v2929 = vadd.f32 %v1507, %v2928
      %v2930 = vpop.f32.mrf.mxu0
      %v2931 = vadd.f32 %v1507, %v2930
      %2932 = vmatmul.bf16.gmra.mxu0 %v1431
      %v2933 = vpop.f32.mrf.mxu0
      %v2934 = vadd.f32 %v1507, %v2933
      %v2935 = vpop.f32.mrf.mxu0
      %v2936 = vadd.f32 %v1507, %v2935
      %2937 = vmatmul.bf16.gmra.mxu0 %v1433
      %v2938 = vpop.f32.mrf.mxu0
      %v2939 = vadd.f32 %v1507, %v2938
      %v2940 = vpop.f32.mrf.mxu0
      %v2941 = vadd.f32 %v1507, %v2940
      %2942 = vmatmul.bf16.gmra.mxu0 %v1435
      %v2943 = vpop.f32.mrf.mxu0
      %v2944 = vadd.f32 %v1507, %v2943
      %v2945 = vpop.f32.mrf.mxu0
      %v2946 = vadd.f32 %v1507, %v2945
      %2947 = vmatmul.bf16.gmra.mxu0 %v1437
      %v2948 = vpop.f32.mrf.mxu0
      %v2949 = vadd.f32 %v1507, %v2948
      %v2950 = vpop.f32.mrf.mxu0
      %v2951 = vadd.f32 %v1507, %v2950
      %2952 = vdwg.mxu0
      %2953 = vmatpush.bf16.msra.mxu0 %v1767
      %2954 = vmatpush.bf16.msra.mxu0 %v1763
      %2955 = vmatpush.bf16.msra.mxu0 %v1759
      %2956 = vmatpush.bf16.msra.mxu0 %v1755
      %2957 = vmatpush.bf16.msra.mxu0 %v1751
      %2958 = vmatpush.bf16.msra.mxu0 %v1747
      %2959 = vmatpush.bf16.msra.mxu0 %v1743
      %2960 = vmatpush.bf16.msra.mxu0 %v1739
      %2961 = vmatmul.bf16.gmra.mxu0 %v1354
      %v2962 = vpop.f32.mrf.mxu0
      %v2963 = vadd.f32 %v2739, %v2962
      %v2964 = vpop.f32.mrf.mxu0
      %v2965 = vadd.f32 %v2741, %v2964
      %2966 = vmatmul.bf16.gmra.mxu0 %v1356
      %v2967 = vpop.f32.mrf.mxu0
      %v2968 = vadd.f32 %v2744, %v2967
      %v2969 = vpop.f32.mrf.mxu0
      %v2970 = vadd.f32 %v2746, %v2969
      %2971 = vmatmul.bf16.gmra.mxu0 %v1358
      %v2972 = vpop.f32.mrf.mxu0
      %v2973 = vadd.f32 %v2749, %v2972
      %v2974 = vpop.f32.mrf.mxu0
      %v2975 = vadd.f32 %v2751, %v2974
      %2976 = vmatmul.bf16.gmra.mxu0 %v1360
      %v2977 = vpop.f32.mrf.mxu0
      %v2978 = vadd.f32 %v2754, %v2977
      %v2979 = vpop.f32.mrf.mxu0
      %v2980 = vadd.f32 %v2756, %v2979
      %2981 = vmatmul.bf16.gmra.mxu0 %v1362
      %v2982 = vpop.f32.mrf.mxu0
      %v2983 = vadd.f32 %v2759, %v2982
      %v2984 = vpop.f32.mrf.mxu0
      %v2985 = vadd.f32 %v2761, %v2984
      %2986 = vmatmul.bf16.gmra.mxu0 %v1364
      %v2987 = vpop.f32.mrf.mxu0
      %v2988 = vadd.f32 %v2764, %v2987
      %v2989 = vpop.f32.mrf.mxu0
      %v2990 = vadd.f32 %v2766, %v2989
      %2991 = vmatmul.bf16.gmra.mxu0 %v1366
      %v2992 = vpop.f32.mrf.mxu0
      %v2993 = vadd.f32 %v2769, %v2992
      %v2994 = vpop.f32.mrf.mxu0
      %v2995 = vadd.f32 %v2771, %v2994
      %2996 = vmatmul.bf16.gmra.mxu0 %v1368
      %v2997 = vpop.f32.mrf.mxu0
      %v2998 = vadd.f32 %v2774, %v2997
      %v2999 = vpop.f32.mrf.mxu0
      %v3000 = vadd.f32 %v2776, %v2999
      %3001 = vmatmul.bf16.gmra.mxu0 %v1370
      %v3002 = vpop.f32.mrf.mxu0
      %v3003 = vadd.f32 %v2779, %v3002
      %v3004 = vpop.f32.mrf.mxu0
      %v3005 = vadd.f32 %v2781, %v3004
      %3006 = vmatmul.bf16.gmra.mxu0 %v1372
      %v3007 = vpop.f32.mrf.mxu0
      %v3008 = vadd.f32 %v2784, %v3007
      %v3009 = vpop.f32.mrf.mxu0
      %v3010 = vadd.f32 %v2786, %v3009
      %3011 = vmatmul.bf16.gmra.mxu0 %v1374
      %v3012 = vpop.f32.mrf.mxu0
      %v3013 = vadd.f32 %v2789, %v3012
      %v3014 = vpop.f32.mrf.mxu0
      %v3015 = vadd.f32 %v2791, %v3014
      %3016 = vmatmul.bf16.gmra.mxu0 %v1376
      %v3017 = vpop.f32.mrf.mxu0
      %v3018 = vadd.f32 %v2794, %v3017
      %v3019 = vpop.f32.mrf.mxu0
      %v3020 = vadd.f32 %v2796, %v3019
      %3021 = vmatmul.bf16.gmra.mxu0 %v1378
      %v3022 = vpop.f32.mrf.mxu0
      %v3023 = vadd.f32 %v2799, %v3022
      %v3024 = vpop.f32.mrf.mxu0
      %v3025 = vadd.f32 %v2801, %v3024
      %3026 = vmatmul.bf16.gmra.mxu0 %v1380
      %v3027 = vpop.f32.mrf.mxu0
      %v3028 = vadd.f32 %v2804, %v3027
      %v3029 = vpop.f32.mrf.mxu0
      %v3030 = vadd.f32 %v2806, %v3029
      %3031 = vmatmul.bf16.gmra.mxu0 %v1382
      %v3032 = vpop.f32.mrf.mxu0
      %v3033 = vadd.f32 %v2809, %v3032
      %v3034 = vpop.f32.mrf.mxu0
      %v3035 = vadd.f32 %v2811, %v3034
      %3036 = vmatmul.bf16.gmra.mxu0 %v1384
      %v3037 = vpop.f32.mrf.mxu0
      %v3038 = vadd.f32 %v2814, %v3037
      %v3039 = vpop.f32.mrf.mxu0
      %v3040 = vadd.f32 %v2816, %v3039
      %3041 = vmatmul.bf16.gmra.mxu0 %v1386
      %v3042 = vpop.f32.mrf.mxu0
      %v3043 = vadd.f32 %v2819, %v3042
      %v3044 = vpop.f32.mrf.mxu0
      %v3045 = vadd.f32 %v2821, %v3044
      %3046 = vmatmul.bf16.gmra.mxu0 %v1388
      %v3047 = vpop.f32.mrf.mxu0
      %v3048 = vadd.f32 %v2824, %v3047
      %v3049 = vpop.f32.mrf.mxu0
      %v3050 = vadd.f32 %v2826, %v3049
      %3051 = vmatmul.bf16.gmra.mxu0 %v1390
      %v3052 = vpop.f32.mrf.mxu0
      %v3053 = vadd.f32 %v2829, %v3052
      %v3054 = vpop.f32.mrf.mxu0
      %v3055 = vadd.f32 %v2831, %v3054
      %3056 = vmatmul.bf16.gmra.mxu0 %v1392
      %v3057 = vpop.f32.mrf.mxu0
      %v3058 = vadd.f32 %v2834, %v3057
      %v3059 = vpop.f32.mrf.mxu0
      %v3060 = vadd.f32 %v2836, %v3059
      %3061 = vmatmul.bf16.gmra.mxu0 %v1394
      %v3062 = vpop.f32.mrf.mxu0
      %v3063 = vadd.f32 %v2839, %v3062
      %v3064 = vpop.f32.mrf.mxu0
      %v3065 = vadd.f32 %v2841, %v3064
      %3066 = vmatmul.bf16.gmra.mxu0 %v1396
      %v3067 = vpop.f32.mrf.mxu0
      %v3068 = vadd.f32 %v2844, %v3067
      %v3069 = vpop.f32.mrf.mxu0
      %v3070 = vadd.f32 %v2846, %v3069
      %3071 = vmatmul.bf16.gmra.mxu0 %v1398
      %v3072 = vpop.f32.mrf.mxu0
      %v3073 = vadd.f32 %v2849, %v3072
      %v3074 = vpop.f32.mrf.mxu0
      %v3075 = vadd.f32 %v2851, %v3074
      %3076 = vmatmul.bf16.gmra.mxu0 %v1400
      %v3077 = vpop.f32.mrf.mxu0
      %v3078 = vadd.f32 %v2854, %v3077
      %v3079 = vpop.f32.mrf.mxu0
      %v3080 = vadd.f32 %v2856, %v3079
      %3081 = vmatmul.bf16.gmra.mxu0 %v1402
      %v3082 = vpop.f32.mrf.mxu0
      %v3083 = vadd.f32 %v2859, %v3082
      %v3084 = vpop.f32.mrf.mxu0
      %v3085 = vadd.f32 %v2861, %v3084
      %3086 = vmatmul.bf16.gmra.mxu0 %v1404
      %v3087 = vpop.f32.mrf.mxu0
      %v3088 = vadd.f32 %v2864, %v3087
      %v3089 = vpop.f32.mrf.mxu0
      %v3090 = vadd.f32 %v2866, %v3089
      %3091 = vmatmul.bf16.gmra.mxu0 %v1406
      %v3092 = vpop.f32.mrf.mxu0
      %v3093 = vadd.f32 %v2869, %v3092
      %v3094 = vpop.f32.mrf.mxu0
      %v3095 = vadd.f32 %v2871, %v3094
      %3096 = vmatmul.bf16.gmra.mxu0 %v1408
      %v3097 = vpop.f32.mrf.mxu0
      %v3098 = vadd.f32 %v2874, %v3097
      %v3099 = vpop.f32.mrf.mxu0
      %v3100 = vadd.f32 %v2876, %v3099
      %3101 = vmatmul.bf16.gmra.mxu0 %v1410
      %v3102 = vpop.f32.mrf.mxu0
      %v3103 = vadd.f32 %v2879, %v3102
      %v3104 = vpop.f32.mrf.mxu0
      %v3105 = vadd.f32 %v2881, %v3104
      %3106 = vmatmul.bf16.gmra.mxu0 %v1412
      %v3107 = vpop.f32.mrf.mxu0
      %v3108 = vadd.f32 %v2884, %v3107
      %v3109 = vpop.f32.mrf.mxu0
      %v3110 = vadd.f32 %v2886, %v3109
      %3111 = vmatmul.bf16.gmra.mxu0 %v1414
      %v3112 = vpop.f32.mrf.mxu0
      %v3113 = vadd.f32 %v2889, %v3112
      %v3114 = vpop.f32.mrf.mxu0
      %v3115 = vadd.f32 %v2891, %v3114
      %3116 = vmatmul.bf16.gmra.mxu0 %v1416
      %v3117 = vpop.f32.mrf.mxu0
      %v3118 = vadd.f32 %v2894, %v3117
      %v3119 = vpop.f32.mrf.mxu0
      %v3120 = vadd.f32 %v2896, %v3119
      %3121 = vmatmul.bf16.gmra.mxu0 %v1418
      %v3122 = vpop.f32.mrf.mxu0
      %v3123 = vadd.f32 %v2899, %v3122
      %v3124 = vpop.f32.mrf.mxu0
      %v3125 = vadd.f32 %v2901, %v3124
      %3126 = vmatmul.bf16.gmra.mxu0 %v1420
      %v3127 = vpop.f32.mrf.mxu0
      %v3128 = vadd.f32 %v2904, %v3127
      %v3129 = vpop.f32.mrf.mxu0
      %v3130 = vadd.f32 %v2906, %v3129
      %3131 = vmatmul.bf16.gmra.mxu0 %v1422
      %v3132 = vpop.f32.mrf.mxu0
      %v3133 = vadd.f32 %v2909, %v3132
      %v3134 = vpop.f32.mrf.mxu0
      %v3135 = vadd.f32 %v2911, %v3134
      %3136 = vmatmul.bf16.gmra.mxu0 %v1424
      %v3137 = vpop.f32.mrf.mxu0
      %v3138 = vadd.f32 %v2914, %v3137
      %v3139 = vpop.f32.mrf.mxu0
      %v3140 = vadd.f32 %v2916, %v3139
      %3141 = vmatmul.bf16.gmra.mxu0 %v1426
      %v3142 = vpop.f32.mrf.mxu0
      %v3143 = vadd.f32 %v2919, %v3142
      %v3144 = vpop.f32.mrf.mxu0
      %v3145 = vadd.f32 %v2921, %v3144
      %3146 = vmatmul.bf16.gmra.mxu0 %v1428
      %v3147 = vpop.f32.mrf.mxu0
      %v3148 = vadd.f32 %v2924, %v3147
      %v3149 = vpop.f32.mrf.mxu0
      %v3150 = vadd.f32 %v2926, %v3149
      %3151 = vmatmul.bf16.gmra.mxu0 %v1430
      %v3152 = vpop.f32.mrf.mxu0
      %v3153 = vadd.f32 %v2929, %v3152
      %v3154 = vpop.f32.mrf.mxu0
      %v3155 = vadd.f32 %v2931, %v3154
      %3156 = vmatmul.bf16.gmra.mxu0 %v1432
      %v3157 = vpop.f32.mrf.mxu0
      %v3158 = vadd.f32 %v2934, %v3157
      %v3159 = vpop.f32.mrf.mxu0
      %v3160 = vadd.f32 %v2936, %v3159
      %3161 = vmatmul.bf16.gmra.mxu0 %v1434
      %v3162 = vpop.f32.mrf.mxu0
      %v3163 = vadd.f32 %v2939, %v3162
      %v3164 = vpop.f32.mrf.mxu0
      %v3165 = vadd.f32 %v2941, %v3164
      %3166 = vmatmul.bf16.gmra.mxu0 %v1436
      %v3167 = vpop.f32.mrf.mxu0
      %v3168 = vadd.f32 %v2944, %v3167
      %v3169 = vpop.f32.mrf.mxu0
      %v3170 = vadd.f32 %v2946, %v3169
      %3171 = vmatmul.bf16.gmra.mxu0 %v1438
      %v3172 = vpop.f32.mrf.mxu0
      %v3173 = vadd.f32 %v2949, %v3172
      %v3174 = vpop.f32.mrf.mxu0
      %v3175 = vadd.f32 %v2951, %v3174
      %3176 = vdwg.mxu0
      %3177 = vmatpush.bf16.msra.mxu0 %v1736
      %3178 = vmatpush.bf16.msra.mxu0 %v1732
      %3179 = vmatpush.bf16.msra.mxu0 %v1728
      %3180 = vmatpush.bf16.msra.mxu0 %v1724
      %3181 = vmatpush.bf16.msra.mxu0 %v1720
      %3182 = vmatpush.bf16.msra.mxu0 %v1716
      %3183 = vmatpush.bf16.msra.mxu0 %v1712
      %3184 = vmatpush.bf16.msra.mxu0 %v1708
      %3185 = vmatmul.bf16.gmra.mxu0 %v1353
      %v3186 = vpop.f32.mrf.mxu0
      %v3187 = vadd.f32 %v1508, %v3186
      %v3188 = vpop.f32.mrf.mxu0
      %v3189 = vadd.f32 %v1508, %v3188
      %3190 = vmatmul.bf16.gmra.mxu0 %v1355
      %v3191 = vpop.f32.mrf.mxu0
      %v3192 = vadd.f32 %v1508, %v3191
      %v3193 = vpop.f32.mrf.mxu0
      %v3194 = vadd.f32 %v1508, %v3193
      %3195 = vmatmul.bf16.gmra.mxu0 %v1357
      %v3196 = vpop.f32.mrf.mxu0
      %v3197 = vadd.f32 %v1508, %v3196
      %v3198 = vpop.f32.mrf.mxu0
      %v3199 = vadd.f32 %v1508, %v3198
      %3200 = vmatmul.bf16.gmra.mxu0 %v1359
      %v3201 = vpop.f32.mrf.mxu0
      %v3202 = vadd.f32 %v1508, %v3201
      %v3203 = vpop.f32.mrf.mxu0
      %v3204 = vadd.f32 %v1508, %v3203
      %3205 = vmatmul.bf16.gmra.mxu0 %v1361
      %v3206 = vpop.f32.mrf.mxu0
      %v3207 = vadd.f32 %v1508, %v3206
      %v3208 = vpop.f32.mrf.mxu0
      %v3209 = vadd.f32 %v1508, %v3208
      %3210 = vmatmul.bf16.gmra.mxu0 %v1363
      %v3211 = vpop.f32.mrf.mxu0
      %v3212 = vadd.f32 %v1508, %v3211
      %v3213 = vpop.f32.mrf.mxu0
      %v3214 = vadd.f32 %v1508, %v3213
      %3215 = vmatmul.bf16.gmra.mxu0 %v1365
      %v3216 = vpop.f32.mrf.mxu0
      %v3217 = vadd.f32 %v1508, %v3216
      %v3218 = vpop.f32.mrf.mxu0
      %v3219 = vadd.f32 %v1508, %v3218
      %3220 = vmatmul.bf16.gmra.mxu0 %v1367
      %v3221 = vpop.f32.mrf.mxu0
      %v3222 = vadd.f32 %v1508, %v3221
      %v3223 = vpop.f32.mrf.mxu0
      %v3224 = vadd.f32 %v1508, %v3223
      %3225 = vmatmul.bf16.gmra.mxu0 %v1369
      %v3226 = vpop.f32.mrf.mxu0
      %v3227 = vadd.f32 %v1508, %v3226
      %v3228 = vpop.f32.mrf.mxu0
      %v3229 = vadd.f32 %v1508, %v3228
      %3230 = vmatmul.bf16.gmra.mxu0 %v1371
      %v3231 = vpop.f32.mrf.mxu0
      %v3232 = vadd.f32 %v1508, %v3231
      %v3233 = vpop.f32.mrf.mxu0
      %v3234 = vadd.f32 %v1508, %v3233
      %3235 = vmatmul.bf16.gmra.mxu0 %v1373
      %v3236 = vpop.f32.mrf.mxu0
      %v3237 = vadd.f32 %v1508, %v3236
      %v3238 = vpop.f32.mrf.mxu0
      %v3239 = vadd.f32 %v1508, %v3238
      %3240 = vmatmul.bf16.gmra.mxu0 %v1375
      %v3241 = vpop.f32.mrf.mxu0
      %v3242 = vadd.f32 %v1508, %v3241
      %v3243 = vpop.f32.mrf.mxu0
      %v3244 = vadd.f32 %v1508, %v3243
      %3245 = vmatmul.bf16.gmra.mxu0 %v1377
      %v3246 = vpop.f32.mrf.mxu0
      %v3247 = vadd.f32 %v1508, %v3246
      %v3248 = vpop.f32.mrf.mxu0
      %v3249 = vadd.f32 %v1508, %v3248
      %3250 = vmatmul.bf16.gmra.mxu0 %v1379
      %v3251 = vpop.f32.mrf.mxu0
      %v3252 = vadd.f32 %v1508, %v3251
      %v3253 = vpop.f32.mrf.mxu0
      %v3254 = vadd.f32 %v1508, %v3253
      %3255 = vmatmul.bf16.gmra.mxu0 %v1381
      %v3256 = vpop.f32.mrf.mxu0
      %v3257 = vadd.f32 %v1508, %v3256
      %v3258 = vpop.f32.mrf.mxu0
      %v3259 = vadd.f32 %v1508, %v3258
      %3260 = vmatmul.bf16.gmra.mxu0 %v1383
      %v3261 = vpop.f32.mrf.mxu0
      %v3262 = vadd.f32 %v1508, %v3261
      %v3263 = vpop.f32.mrf.mxu0
      %v3264 = vadd.f32 %v1508, %v3263
      %3265 = vmatmul.bf16.gmra.mxu0 %v1385
      %v3266 = vpop.f32.mrf.mxu0
      %v3267 = vadd.f32 %v1508, %v3266
      %v3268 = vpop.f32.mrf.mxu0
      %v3269 = vadd.f32 %v1508, %v3268
      %3270 = vmatmul.bf16.gmra.mxu0 %v1387
      %v3271 = vpop.f32.mrf.mxu0
      %v3272 = vadd.f32 %v1508, %v3271
      %v3273 = vpop.f32.mrf.mxu0
      %v3274 = vadd.f32 %v1508, %v3273
      %3275 = vmatmul.bf16.gmra.mxu0 %v1389
      %v3276 = vpop.f32.mrf.mxu0
      %v3277 = vadd.f32 %v1508, %v3276
      %v3278 = vpop.f32.mrf.mxu0
      %v3279 = vadd.f32 %v1508, %v3278
      %3280 = vmatmul.bf16.gmra.mxu0 %v1391
      %v3281 = vpop.f32.mrf.mxu0
      %v3282 = vadd.f32 %v1508, %v3281
      %v3283 = vpop.f32.mrf.mxu0
      %v3284 = vadd.f32 %v1508, %v3283
      %3285 = vmatmul.bf16.gmra.mxu0 %v1393
      %v3286 = vpop.f32.mrf.mxu0
      %v3287 = vadd.f32 %v1508, %v3286
      %v3288 = vpop.f32.mrf.mxu0
      %v3289 = vadd.f32 %v1508, %v3288
      %3290 = vmatmul.bf16.gmra.mxu0 %v1395
      %v3291 = vpop.f32.mrf.mxu0
      %v3292 = vadd.f32 %v1508, %v3291
      %v3293 = vpop.f32.mrf.mxu0
      %v3294 = vadd.f32 %v1508, %v3293
      %3295 = vmatmul.bf16.gmra.mxu0 %v1397
      %v3296 = vpop.f32.mrf.mxu0
      %v3297 = vadd.f32 %v1508, %v3296
      %v3298 = vpop.f32.mrf.mxu0
      %v3299 = vadd.f32 %v1508, %v3298
      %3300 = vmatmul.bf16.gmra.mxu0 %v1399
      %v3301 = vpop.f32.mrf.mxu0
      %v3302 = vadd.f32 %v1508, %v3301
      %v3303 = vpop.f32.mrf.mxu0
      %v3304 = vadd.f32 %v1508, %v3303
      %3305 = vmatmul.bf16.gmra.mxu0 %v1401
      %v3306 = vpop.f32.mrf.mxu0
      %v3307 = vadd.f32 %v1508, %v3306
      %v3308 = vpop.f32.mrf.mxu0
      %v3309 = vadd.f32 %v1508, %v3308
      %3310 = vmatmul.bf16.gmra.mxu0 %v1403
      %v3311 = vpop.f32.mrf.mxu0
      %v3312 = vadd.f32 %v1508, %v3311
      %v3313 = vpop.f32.mrf.mxu0
      %v3314 = vadd.f32 %v1508, %v3313
      %3315 = vmatmul.bf16.gmra.mxu0 %v1405
      %v3316 = vpop.f32.mrf.mxu0
      %v3317 = vadd.f32 %v1508, %v3316
      %v3318 = vpop.f32.mrf.mxu0
      %v3319 = vadd.f32 %v1508, %v3318
      %3320 = vmatmul.bf16.gmra.mxu0 %v1407
      %v3321 = vpop.f32.mrf.mxu0
      %v3322 = vadd.f32 %v1508, %v3321
      %v3323 = vpop.f32.mrf.mxu0
      %v3324 = vadd.f32 %v1508, %v3323
      %3325 = vmatmul.bf16.gmra.mxu0 %v1409
      %v3326 = vpop.f32.mrf.mxu0
      %v3327 = vadd.f32 %v1508, %v3326
      %v3328 = vpop.f32.mrf.mxu0
      %v3329 = vadd.f32 %v1508, %v3328
      %3330 = vmatmul.bf16.gmra.mxu0 %v1411
      %v3331 = vpop.f32.mrf.mxu0
      %v3332 = vadd.f32 %v1508, %v3331
      %v3333 = vpop.f32.mrf.mxu0
      %v3334 = vadd.f32 %v1508, %v3333
      %3335 = vmatmul.bf16.gmra.mxu0 %v1413
      %v3336 = vpop.f32.mrf.mxu0
      %v3337 = vadd.f32 %v1508, %v3336
      %v3338 = vpop.f32.mrf.mxu0
      %v3339 = vadd.f32 %v1508, %v3338
      %3340 = vmatmul.bf16.gmra.mxu0 %v1415
      %v3341 = vpop.f32.mrf.mxu0
      %v3342 = vadd.f32 %v1508, %v3341
      %v3343 = vpop.f32.mrf.mxu0
      %v3344 = vadd.f32 %v1508, %v3343
      %3345 = vmatmul.bf16.gmra.mxu0 %v1417
      %v3346 = vpop.f32.mrf.mxu0
      %v3347 = vadd.f32 %v1508, %v3346
      %v3348 = vpop.f32.mrf.mxu0
      %v3349 = vadd.f32 %v1508, %v3348
      %3350 = vmatmul.bf16.gmra.mxu0 %v1419
      %v3351 = vpop.f32.mrf.mxu0
      %v3352 = vadd.f32 %v1508, %v3351
      %v3353 = vpop.f32.mrf.mxu0
      %v3354 = vadd.f32 %v1508, %v3353
      %3355 = vmatmul.bf16.gmra.mxu0 %v1421
      %v3356 = vpop.f32.mrf.mxu0
      %v3357 = vadd.f32 %v1508, %v3356
      %v3358 = vpop.f32.mrf.mxu0
      %v3359 = vadd.f32 %v1508, %v3358
      %3360 = vmatmul.bf16.gmra.mxu0 %v1423
      %v3361 = vpop.f32.mrf.mxu0
      %v3362 = vadd.f32 %v1508, %v3361
      %v3363 = vpop.f32.mrf.mxu0
      %v3364 = vadd.f32 %v1508, %v3363
      %3365 = vmatmul.bf16.gmra.mxu0 %v1425
      %v3366 = vpop.f32.mrf.mxu0
      %v3367 = vadd.f32 %v1508, %v3366
      %v3368 = vpop.f32.mrf.mxu0
      %v3369 = vadd.f32 %v1508, %v3368
      %3370 = vmatmul.bf16.gmra.mxu0 %v1427
      %v3371 = vpop.f32.mrf.mxu0
      %v3372 = vadd.f32 %v1508, %v3371
      %v3373 = vpop.f32.mrf.mxu0
      %v3374 = vadd.f32 %v1508, %v3373
      %3375 = vmatmul.bf16.gmra.mxu0 %v1429
      %v3376 = vpop.f32.mrf.mxu0
      %v3377 = vadd.f32 %v1508, %v3376
      %v3378 = vpop.f32.mrf.mxu0
      %v3379 = vadd.f32 %v1508, %v3378
      %3380 = vmatmul.bf16.gmra.mxu0 %v1431
      %v3381 = vpop.f32.mrf.mxu0
      %v3382 = vadd.f32 %v1508, %v3381
      %v3383 = vpop.f32.mrf.mxu0
      %v3384 = vadd.f32 %v1508, %v3383
      %3385 = vmatmul.bf16.gmra.mxu0 %v1433
      %v3386 = vpop.f32.mrf.mxu0
      %v3387 = vadd.f32 %v1508, %v3386
      %v3388 = vpop.f32.mrf.mxu0
      %v3389 = vadd.f32 %v1508, %v3388
      %3390 = vmatmul.bf16.gmra.mxu0 %v1435
      %v3391 = vpop.f32.mrf.mxu0
      %v3392 = vadd.f32 %v1508, %v3391
      %v3393 = vpop.f32.mrf.mxu0
      %v3394 = vadd.f32 %v1508, %v3393
      %3395 = vmatmul.bf16.gmra.mxu0 %v1437
      %v3396 = vpop.f32.mrf.mxu0
      %v3397 = vadd.f32 %v1508, %v3396
      %v3398 = vpop.f32.mrf.mxu0
      %v3399 = vadd.f32 %v1508, %v3398
      %3400 = vdwg.mxu0
      %3401 = vmatpush.bf16.msra.mxu0 %v1768
      %3402 = vmatpush.bf16.msra.mxu0 %v1764
      %3403 = vmatpush.bf16.msra.mxu0 %v1760
      %3404 = vmatpush.bf16.msra.mxu0 %v1756
      %3405 = vmatpush.bf16.msra.mxu0 %v1752
      %3406 = vmatpush.bf16.msra.mxu0 %v1748
      %3407 = vmatpush.bf16.msra.mxu0 %v1744
      %3408 = vmatpush.bf16.msra.mxu0 %v1740
      %3409 = vmatmul.bf16.gmra.mxu0 %v1354
      %v3410 = vpop.f32.mrf.mxu0
      %v3411 = vadd.f32 %v3187, %v3410
      %v3412 = vpop.f32.mrf.mxu0
      %v3413 = vadd.f32 %v3189, %v3412
      %3414 = vmatmul.bf16.gmra.mxu0 %v1356
      %v3415 = vpop.f32.mrf.mxu0
      %v3416 = vadd.f32 %v3192, %v3415
      %v3417 = vpop.f32.mrf.mxu0
      %v3418 = vadd.f32 %v3194, %v3417
      %3419 = vmatmul.bf16.gmra.mxu0 %v1358
      %v3420 = vpop.f32.mrf.mxu0
      %v3421 = vadd.f32 %v3197, %v3420
      %v3422 = vpop.f32.mrf.mxu0
      %v3423 = vadd.f32 %v3199, %v3422
      %3424 = vmatmul.bf16.gmra.mxu0 %v1360
      %v3425 = vpop.f32.mrf.mxu0
      %v3426 = vadd.f32 %v3202, %v3425
      %v3427 = vpop.f32.mrf.mxu0
      %v3428 = vadd.f32 %v3204, %v3427
      %3429 = vmatmul.bf16.gmra.mxu0 %v1362
      %v3430 = vpop.f32.mrf.mxu0
      %v3431 = vadd.f32 %v3207, %v3430
      %v3432 = vpop.f32.mrf.mxu0
      %v3433 = vadd.f32 %v3209, %v3432
      %3434 = vmatmul.bf16.gmra.mxu0 %v1364
      %v3435 = vpop.f32.mrf.mxu0
      %v3436 = vadd.f32 %v3212, %v3435
      %v3437 = vpop.f32.mrf.mxu0
      %v3438 = vadd.f32 %v3214, %v3437
      %3439 = vmatmul.bf16.gmra.mxu0 %v1366
      %v3440 = vpop.f32.mrf.mxu0
      %v3441 = vadd.f32 %v3217, %v3440
      %v3442 = vpop.f32.mrf.mxu0
      %v3443 = vadd.f32 %v3219, %v3442
      %3444 = vmatmul.bf16.gmra.mxu0 %v1368
      %v3445 = vpop.f32.mrf.mxu0
      %v3446 = vadd.f32 %v3222, %v3445
      %v3447 = vpop.f32.mrf.mxu0
      %v3448 = vadd.f32 %v3224, %v3447
      %3449 = vmatmul.bf16.gmra.mxu0 %v1370
      %v3450 = vpop.f32.mrf.mxu0
      %v3451 = vadd.f32 %v3227, %v3450
      %v3452 = vpop.f32.mrf.mxu0
      %v3453 = vadd.f32 %v3229, %v3452
      %3454 = vmatmul.bf16.gmra.mxu0 %v1372
      %v3455 = vpop.f32.mrf.mxu0
      %v3456 = vadd.f32 %v3232, %v3455
      %v3457 = vpop.f32.mrf.mxu0
      %v3458 = vadd.f32 %v3234, %v3457
      %3459 = vmatmul.bf16.gmra.mxu0 %v1374
      %v3460 = vpop.f32.mrf.mxu0
      %v3461 = vadd.f32 %v3237, %v3460
      %v3462 = vpop.f32.mrf.mxu0
      %v3463 = vadd.f32 %v3239, %v3462
      %3464 = vmatmul.bf16.gmra.mxu0 %v1376
      %v3465 = vpop.f32.mrf.mxu0
      %v3466 = vadd.f32 %v3242, %v3465
      %v3467 = vpop.f32.mrf.mxu0
      %v3468 = vadd.f32 %v3244, %v3467
      %3469 = vmatmul.bf16.gmra.mxu0 %v1378
      %v3470 = vpop.f32.mrf.mxu0
      %v3471 = vadd.f32 %v3247, %v3470
      %v3472 = vpop.f32.mrf.mxu0
      %v3473 = vadd.f32 %v3249, %v3472
      %3474 = vmatmul.bf16.gmra.mxu0 %v1380
      %v3475 = vpop.f32.mrf.mxu0
      %v3476 = vadd.f32 %v3252, %v3475
      %v3477 = vpop.f32.mrf.mxu0
      %v3478 = vadd.f32 %v3254, %v3477
      %3479 = vmatmul.bf16.gmra.mxu0 %v1382
      %v3480 = vpop.f32.mrf.mxu0
      %v3481 = vadd.f32 %v3257, %v3480
      %v3482 = vpop.f32.mrf.mxu0
      %v3483 = vadd.f32 %v3259, %v3482
      %3484 = vmatmul.bf16.gmra.mxu0 %v1384
      %v3485 = vpop.f32.mrf.mxu0
      %v3486 = vadd.f32 %v3262, %v3485
      %v3487 = vpop.f32.mrf.mxu0
      %v3488 = vadd.f32 %v3264, %v3487
      %3489 = vmatmul.bf16.gmra.mxu0 %v1386
      %v3490 = vpop.f32.mrf.mxu0
      %v3491 = vadd.f32 %v3267, %v3490
      %v3492 = vpop.f32.mrf.mxu0
      %v3493 = vadd.f32 %v3269, %v3492
      %3494 = vmatmul.bf16.gmra.mxu0 %v1388
      %v3495 = vpop.f32.mrf.mxu0
      %v3496 = vadd.f32 %v3272, %v3495
      %v3497 = vpop.f32.mrf.mxu0
      %v3498 = vadd.f32 %v3274, %v3497
      %3499 = vmatmul.bf16.gmra.mxu0 %v1390
      %v3500 = vpop.f32.mrf.mxu0
      %v3501 = vadd.f32 %v3277, %v3500
      %v3502 = vpop.f32.mrf.mxu0
      %v3503 = vadd.f32 %v3279, %v3502
      %3504 = vmatmul.bf16.gmra.mxu0 %v1392
      %v3505 = vpop.f32.mrf.mxu0
      %v3506 = vadd.f32 %v3282, %v3505
      %v3507 = vpop.f32.mrf.mxu0
      %v3508 = vadd.f32 %v3284, %v3507
      %3509 = vmatmul.bf16.gmra.mxu0 %v1394
      %v3510 = vpop.f32.mrf.mxu0
      %v3511 = vadd.f32 %v3287, %v3510
      %v3512 = vpop.f32.mrf.mxu0
      %v3513 = vadd.f32 %v3289, %v3512
      %3514 = vmatmul.bf16.gmra.mxu0 %v1396
      %v3515 = vpop.f32.mrf.mxu0
      %v3516 = vadd.f32 %v3292, %v3515
      %v3517 = vpop.f32.mrf.mxu0
      %v3518 = vadd.f32 %v3294, %v3517
      %3519 = vmatmul.bf16.gmra.mxu0 %v1398
      %v3520 = vpop.f32.mrf.mxu0
      %v3521 = vadd.f32 %v3297, %v3520
      %v3522 = vpop.f32.mrf.mxu0
      %v3523 = vadd.f32 %v3299, %v3522
      %3524 = vmatmul.bf16.gmra.mxu0 %v1400
      %v3525 = vpop.f32.mrf.mxu0
      %v3526 = vadd.f32 %v3302, %v3525
      %v3527 = vpop.f32.mrf.mxu0
      %v3528 = vadd.f32 %v3304, %v3527
      %3529 = vmatmul.bf16.gmra.mxu0 %v1402
      %v3530 = vpop.f32.mrf.mxu0
      %v3531 = vadd.f32 %v3307, %v3530
      %v3532 = vpop.f32.mrf.mxu0
      %v3533 = vadd.f32 %v3309, %v3532
      %3534 = vmatmul.bf16.gmra.mxu0 %v1404
      %v3535 = vpop.f32.mrf.mxu0
      %v3536 = vadd.f32 %v3312, %v3535
      %v3537 = vpop.f32.mrf.mxu0
      %v3538 = vadd.f32 %v3314, %v3537
      %3539 = vmatmul.bf16.gmra.mxu0 %v1406
      %v3540 = vpop.f32.mrf.mxu0
      %v3541 = vadd.f32 %v3317, %v3540
      %v3542 = vpop.f32.mrf.mxu0
      %v3543 = vadd.f32 %v3319, %v3542
      %3544 = vmatmul.bf16.gmra.mxu0 %v1408
      %v3545 = vpop.f32.mrf.mxu0
      %v3546 = vadd.f32 %v3322, %v3545
      %v3547 = vpop.f32.mrf.mxu0
      %v3548 = vadd.f32 %v3324, %v3547
      %3549 = vmatmul.bf16.gmra.mxu0 %v1410
      %v3550 = vpop.f32.mrf.mxu0
      %v3551 = vadd.f32 %v3327, %v3550
      %v3552 = vpop.f32.mrf.mxu0
      %v3553 = vadd.f32 %v3329, %v3552
      %3554 = vmatmul.bf16.gmra.mxu0 %v1412
      %v3555 = vpop.f32.mrf.mxu0
      %v3556 = vadd.f32 %v3332, %v3555
      %v3557 = vpop.f32.mrf.mxu0
      %v3558 = vadd.f32 %v3334, %v3557
      %3559 = vmatmul.bf16.gmra.mxu0 %v1414
      %v3560 = vpop.f32.mrf.mxu0
      %v3561 = vadd.f32 %v3337, %v3560
      %v3562 = vpop.f32.mrf.mxu0
      %v3563 = vadd.f32 %v3339, %v3562
      %3564 = vmatmul.bf16.gmra.mxu0 %v1416
      %v3565 = vpop.f32.mrf.mxu0
      %v3566 = vadd.f32 %v3342, %v3565
      %v3567 = vpop.f32.mrf.mxu0
      %v3568 = vadd.f32 %v3344, %v3567
      %3569 = vmatmul.bf16.gmra.mxu0 %v1418
      %v3570 = vpop.f32.mrf.mxu0
      %v3571 = vadd.f32 %v3347, %v3570
      %v3572 = vpop.f32.mrf.mxu0
      %v3573 = vadd.f32 %v3349, %v3572
      %3574 = vmatmul.bf16.gmra.mxu0 %v1420
      %v3575 = vpop.f32.mrf.mxu0
      %v3576 = vadd.f32 %v3352, %v3575
      %v3577 = vpop.f32.mrf.mxu0
      %v3578 = vadd.f32 %v3354, %v3577
      %3579 = vmatmul.bf16.gmra.mxu0 %v1422
      %v3580 = vpop.f32.mrf.mxu0
      %v3581 = vadd.f32 %v3357, %v3580
      %v3582 = vpop.f32.mrf.mxu0
      %v3583 = vadd.f32 %v3359, %v3582
      %3584 = vmatmul.bf16.gmra.mxu0 %v1424
      %v3585 = vpop.f32.mrf.mxu0
      %v3586 = vadd.f32 %v3362, %v3585
      %v3587 = vpop.f32.mrf.mxu0
      %v3588 = vadd.f32 %v3364, %v3587
      %3589 = vmatmul.bf16.gmra.mxu0 %v1426
      %v3590 = vpop.f32.mrf.mxu0
      %v3591 = vadd.f32 %v3367, %v3590
      %v3592 = vpop.f32.mrf.mxu0
      %v3593 = vadd.f32 %v3369, %v3592
      %3594 = vmatmul.bf16.gmra.mxu0 %v1428
      %v3595 = vpop.f32.mrf.mxu0
      %v3596 = vadd.f32 %v3372, %v3595
      %v3597 = vpop.f32.mrf.mxu0
      %v3598 = vadd.f32 %v3374, %v3597
      %3599 = vmatmul.bf16.gmra.mxu0 %v1430
      %v3600 = vpop.f32.mrf.mxu0
      %v3601 = vadd.f32 %v3377, %v3600
      %v3602 = vpop.f32.mrf.mxu0
      %v3603 = vadd.f32 %v3379, %v3602
      %3604 = vmatmul.bf16.gmra.mxu0 %v1432
      %v3605 = vpop.f32.mrf.mxu0
      %v3606 = vadd.f32 %v3382, %v3605
      %v3607 = vpop.f32.mrf.mxu0
      %v3608 = vadd.f32 %v3384, %v3607
      %3609 = vmatmul.bf16.gmra.mxu0 %v1434
      %v3610 = vpop.f32.mrf.mxu0
      %v3611 = vadd.f32 %v3387, %v3610
      %v3612 = vpop.f32.mrf.mxu0
      %v3613 = vadd.f32 %v3389, %v3612
      %3614 = vmatmul.bf16.gmra.mxu0 %v1436
      %v3615 = vpop.f32.mrf.mxu0
      %v3616 = vadd.f32 %v3392, %v3615
      %v3617 = vpop.f32.mrf.mxu0
      %v3618 = vadd.f32 %v3394, %v3617
      %3619 = vmatmul.bf16.gmra.mxu0 %v1438
      %v3620 = vpop.f32.mrf.mxu0
      %v3621 = vadd.f32 %v3397, %v3620
      %v3622 = vpop.f32.mrf.mxu0
      %v3623 = vadd.f32 %v3399, %v3622
      %3624 = vdwg.mxu0
      %v3625 = vmax.f32 %v2067, 0.0
      %v3626 = vmax.f32 %v2515, 0.0
      %v3627 = vmax.f32 %v2963, 0.0
      %v3628 = vmax.f32 %v3411, 0.0
      %v3629 = vmax.f32 %v2069, 0.0
      %v3630 = vmax.f32 %v2517, 0.0
      %v3631 = vmax.f32 %v2965, 0.0
      %v3632 = vmax.f32 %v3413, 0.0
      %v3633 = vmax.f32 %v2072, 0.0
      %v3634 = vmax.f32 %v2520, 0.0
      %v3635 = vmax.f32 %v2968, 0.0
      %v3636 = vmax.f32 %v3416, 0.0
      %v3637 = vmax.f32 %v2074, 0.0
      %v3638 = vmax.f32 %v2522, 0.0
      %v3639 = vmax.f32 %v2970, 0.0
      %v3640 = vmax.f32 %v3418, 0.0
      %v3641 = vmax.f32 %v2077, 0.0
      %v3642 = vmax.f32 %v2525, 0.0
      %v3643 = vmax.f32 %v2973, 0.0
      %v3644 = vmax.f32 %v3421, 0.0
      %v3645 = vmax.f32 %v2079, 0.0
      %v3646 = vmax.f32 %v2527, 0.0
      %v3647 = vmax.f32 %v2975, 0.0
      %v3648 = vmax.f32 %v3423, 0.0
      %v3649 = vmax.f32 %v2082, 0.0
      %v3650 = vmax.f32 %v2530, 0.0
      %v3651 = vmax.f32 %v2978, 0.0
      %v3652 = vmax.f32 %v3426, 0.0
      %v3653 = vmax.f32 %v2084, 0.0
      %v3654 = vmax.f32 %v2532, 0.0
      %v3655 = vmax.f32 %v2980, 0.0
      %v3656 = vmax.f32 %v3428, 0.0
      %v3657 = vmax.f32 %v2087, 0.0
      %v3658 = vmax.f32 %v2535, 0.0
      %v3659 = vmax.f32 %v2983, 0.0
      %v3660 = vmax.f32 %v3431, 0.0
      %v3661 = vmax.f32 %v2089, 0.0
      %v3662 = vmax.f32 %v2537, 0.0
      %v3663 = vmax.f32 %v2985, 0.0
      %v3664 = vmax.f32 %v3433, 0.0
      %v3665 = vmax.f32 %v2092, 0.0
      %v3666 = vmax.f32 %v2540, 0.0
      %v3667 = vmax.f32 %v2988, 0.0
      %v3668 = vmax.f32 %v3436, 0.0
      %v3669 = vmax.f32 %v2094, 0.0
      %v3670 = vmax.f32 %v2542, 0.0
      %v3671 = vmax.f32 %v2990, 0.0
      %v3672 = vmax.f32 %v3438, 0.0
      %v3673 = vmax.f32 %v2097, 0.0
      %v3674 = vmax.f32 %v2545, 0.0
      %v3675 = vmax.f32 %v2993, 0.0
      %v3676 = vmax.f32 %v3441, 0.0
      %v3677 = vmax.f32 %v2099, 0.0
      %v3678 = vmax.f32 %v2547, 0.0
      %v3679 = vmax.f32 %v2995, 0.0
      %v3680 = vmax.f32 %v3443, 0.0
      %v3681 = vmax.f32 %v2102, 0.0
      %v3682 = vmax.f32 %v2550, 0.0
      %v3683 = vmax.f32 %v2998, 0.0
      %v3684 = vmax.f32 %v3446, 0.0
      %v3685 = vmax.f32 %v2104, 0.0
      %v3686 = vmax.f32 %v2552, 0.0
      %v3687 = vmax.f32 %v3000, 0.0
      %v3688 = vmax.f32 %v3448, 0.0
      %v3689 = vmax.f32 %v2107, 0.0
      %v3690 = vmax.f32 %v2555, 0.0
      %v3691 = vmax.f32 %v3003, 0.0
      %v3692 = vmax.f32 %v3451, 0.0
      %v3693 = vmax.f32 %v2109, 0.0
      %v3694 = vmax.f32 %v2557, 0.0
      %v3695 = vmax.f32 %v3005, 0.0
      %v3696 = vmax.f32 %v3453, 0.0
      %v3697 = vmax.f32 %v2112, 0.0
      %v3698 = vmax.f32 %v2560, 0.0
      %v3699 = vmax.f32 %v3008, 0.0
      %v3700 = vmax.f32 %v3456, 0.0
      %v3701 = vmax.f32 %v2114, 0.0
      %v3702 = vmax.f32 %v2562, 0.0
      %v3703 = vmax.f32 %v3010, 0.0
      %v3704 = vmax.f32 %v3458, 0.0
      %v3705 = vmax.f32 %v2117, 0.0
      %v3706 = vmax.f32 %v2565, 0.0
      %v3707 = vmax.f32 %v3013, 0.0
      %v3708 = vmax.f32 %v3461, 0.0
      %v3709 = vmax.f32 %v2119, 0.0
      %v3710 = vmax.f32 %v2567, 0.0
      %v3711 = vmax.f32 %v3015, 0.0
      %v3712 = vmax.f32 %v3463, 0.0
      %v3713 = vmax.f32 %v2122, 0.0
      %v3714 = vmax.f32 %v2570, 0.0
      %v3715 = vmax.f32 %v3018, 0.0
      %v3716 = vmax.f32 %v3466, 0.0
      %v3717 = vmax.f32 %v2124, 0.0
      %v3718 = vmax.f32 %v2572, 0.0
      %v3719 = vmax.f32 %v3020, 0.0
      %v3720 = vmax.f32 %v3468, 0.0
      %v3721 = vmax.f32 %v2127, 0.0
      %v3722 = vmax.f32 %v2575, 0.0
      %v3723 = vmax.f32 %v3023, 0.0
      %v3724 = vmax.f32 %v3471, 0.0
      %v3725 = vmax.f32 %v2129, 0.0
      %v3726 = vmax.f32 %v2577, 0.0
      %v3727 = vmax.f32 %v3025, 0.0
      %v3728 = vmax.f32 %v3473, 0.0
      %v3729 = vmax.f32 %v2132, 0.0
      %v3730 = vmax.f32 %v2580, 0.0
      %v3731 = vmax.f32 %v3028, 0.0
      %v3732 = vmax.f32 %v3476, 0.0
      %v3733 = vmax.f32 %v2134, 0.0
      %v3734 = vmax.f32 %v2582, 0.0
      %v3735 = vmax.f32 %v3030, 0.0
      %v3736 = vmax.f32 %v3478, 0.0
      %v3737 = vmax.f32 %v2137, 0.0
      %v3738 = vmax.f32 %v2585, 0.0
      %v3739 = vmax.f32 %v3033, 0.0
      %v3740 = vmax.f32 %v3481, 0.0
      %v3741 = vmax.f32 %v2139, 0.0
      %v3742 = vmax.f32 %v2587, 0.0
      %v3743 = vmax.f32 %v3035, 0.0
      %v3744 = vmax.f32 %v3483, 0.0
      %v3745 = vmax.f32 %v2142, 0.0
      %v3746 = vmax.f32 %v2590, 0.0
      %v3747 = vmax.f32 %v3038, 0.0
      %v3748 = vmax.f32 %v3486, 0.0
      %v3749 = vmax.f32 %v2144, 0.0
      %v3750 = vmax.f32 %v2592, 0.0
      %v3751 = vmax.f32 %v3040, 0.0
      %v3752 = vmax.f32 %v3488, 0.0
      %v3753 = vmax.f32 %v2147, 0.0
      %v3754 = vmax.f32 %v2595, 0.0
      %v3755 = vmax.f32 %v3043, 0.0
      %v3756 = vmax.f32 %v3491, 0.0
      %v3757 = vmax.f32 %v2149, 0.0
      %v3758 = vmax.f32 %v2597, 0.0
      %v3759 = vmax.f32 %v3045, 0.0
      %v3760 = vmax.f32 %v3493, 0.0
      %v3761 = vmax.f32 %v2152, 0.0
      %v3762 = vmax.f32 %v2600, 0.0
      %v3763 = vmax.f32 %v3048, 0.0
      %v3764 = vmax.f32 %v3496, 0.0
      %v3765 = vmax.f32 %v2154, 0.0
      %v3766 = vmax.f32 %v2602, 0.0
      %v3767 = vmax.f32 %v3050, 0.0
      %v3768 = vmax.f32 %v3498, 0.0
      %v3769 = vmax.f32 %v2157, 0.0
      %v3770 = vmax.f32 %v2605, 0.0
      %v3771 = vmax.f32 %v3053, 0.0
      %v3772 = vmax.f32 %v3501, 0.0
      %v3773 = vmax.f32 %v2159, 0.0
      %v3774 = vmax.f32 %v2607, 0.0
      %v3775 = vmax.f32 %v3055, 0.0
      %v3776 = vmax.f32 %v3503, 0.0
      %v3777 = vmax.f32 %v2162, 0.0
      %v3778 = vmax.f32 %v2610, 0.0
      %v3779 = vmax.f32 %v3058, 0.0
      %v3780 = vmax.f32 %v3506, 0.0
      %v3781 = vmax.f32 %v2164, 0.0
      %v3782 = vmax.f32 %v2612, 0.0
      %v3783 = vmax.f32 %v3060, 0.0
      %v3784 = vmax.f32 %v3508, 0.0
      %v3785 = vmax.f32 %v2167, 0.0
      %v3786 = vmax.f32 %v2615, 0.0
      %v3787 = vmax.f32 %v3063, 0.0
      %v3788 = vmax.f32 %v3511, 0.0
      %v3789 = vmax.f32 %v2169, 0.0
      %v3790 = vmax.f32 %v2617, 0.0
      %v3791 = vmax.f32 %v3065, 0.0
      %v3792 = vmax.f32 %v3513, 0.0
      %v3793 = vmax.f32 %v2172, 0.0
      %v3794 = vmax.f32 %v2620, 0.0
      %v3795 = vmax.f32 %v3068, 0.0
      %v3796 = vmax.f32 %v3516, 0.0
      %v3797 = vmax.f32 %v2174, 0.0
      %v3798 = vmax.f32 %v2622, 0.0
      %v3799 = vmax.f32 %v3070, 0.0
      %v3800 = vmax.f32 %v3518, 0.0
      %v3801 = vmax.f32 %v2177, 0.0
      %v3802 = vmax.f32 %v2625, 0.0
      %v3803 = vmax.f32 %v3073, 0.0
      %v3804 = vmax.f32 %v3521, 0.0
      %v3805 = vmax.f32 %v2179, 0.0
      %v3806 = vmax.f32 %v2627, 0.0
      %v3807 = vmax.f32 %v3075, 0.0
      %v3808 = vmax.f32 %v3523, 0.0
      %v3809 = vmax.f32 %v2182, 0.0
      %v3810 = vmax.f32 %v2630, 0.0
      %v3811 = vmax.f32 %v3078, 0.0
      %v3812 = vmax.f32 %v3526, 0.0
      %v3813 = vmax.f32 %v2184, 0.0
      %v3814 = vmax.f32 %v2632, 0.0
      %v3815 = vmax.f32 %v3080, 0.0
      %v3816 = vmax.f32 %v3528, 0.0
      %v3817 = vmax.f32 %v2187, 0.0
      %v3818 = vmax.f32 %v2635, 0.0
      %v3819 = vmax.f32 %v3083, 0.0
      %v3820 = vmax.f32 %v3531, 0.0
      %v3821 = vmax.f32 %v2189, 0.0
      %v3822 = vmax.f32 %v2637, 0.0
      %v3823 = vmax.f32 %v3085, 0.0
      %v3824 = vmax.f32 %v3533, 0.0
      %v3825 = vmax.f32 %v2192, 0.0
      %v3826 = vmax.f32 %v2640, 0.0
      %v3827 = vmax.f32 %v3088, 0.0
      %v3828 = vmax.f32 %v3536, 0.0
      %v3829 = vmax.f32 %v2194, 0.0
      %v3830 = vmax.f32 %v2642, 0.0
      %v3831 = vmax.f32 %v3090, 0.0
      %v3832 = vmax.f32 %v3538, 0.0
      %v3833 = vmax.f32 %v2197, 0.0
      %v3834 = vmax.f32 %v2645, 0.0
      %v3835 = vmax.f32 %v3093, 0.0
      %v3836 = vmax.f32 %v3541, 0.0
      %v3837 = vmax.f32 %v2199, 0.0
      %v3838 = vmax.f32 %v2647, 0.0
      %v3839 = vmax.f32 %v3095, 0.0
      %v3840 = vmax.f32 %v3543, 0.0
      %v3841 = vmax.f32 %v2202, 0.0
      %v3842 = vmax.f32 %v2650, 0.0
      %v3843 = vmax.f32 %v3098, 0.0
      %v3844 = vmax.f32 %v3546, 0.0
      %v3845 = vmax.f32 %v2204, 0.0
      %v3846 = vmax.f32 %v2652, 0.0
      %v3847 = vmax.f32 %v3100, 0.0
      %v3848 = vmax.f32 %v3548, 0.0
      %v3849 = vmax.f32 %v2207, 0.0
      %v3850 = vmax.f32 %v2655, 0.0
      %v3851 = vmax.f32 %v3103, 0.0
      %v3852 = vmax.f32 %v3551, 0.0
      %v3853 = vmax.f32 %v2209, 0.0
      %v3854 = vmax.f32 %v2657, 0.0
      %v3855 = vmax.f32 %v3105, 0.0
      %v3856 = vmax.f32 %v3553, 0.0
      %v3857 = vmax.f32 %v2212, 0.0
      %v3858 = vmax.f32 %v2660, 0.0
      %v3859 = vmax.f32 %v3108, 0.0
      %v3860 = vmax.f32 %v3556, 0.0
      %v3861 = vmax.f32 %v2214, 0.0
      %v3862 = vmax.f32 %v2662, 0.0
      %v3863 = vmax.f32 %v3110, 0.0
      %v3864 = vmax.f32 %v3558, 0.0
      %v3865 = vmax.f32 %v2217, 0.0
      %v3866 = vmax.f32 %v2665, 0.0
      %v3867 = vmax.f32 %v3113, 0.0
      %v3868 = vmax.f32 %v3561, 0.0
      %v3869 = vmax.f32 %v2219, 0.0
      %v3870 = vmax.f32 %v2667, 0.0
      %v3871 = vmax.f32 %v3115, 0.0
      %v3872 = vmax.f32 %v3563, 0.0
      %v3873 = vmax.f32 %v2222, 0.0
      %v3874 = vmax.f32 %v2670, 0.0
      %v3875 = vmax.f32 %v3118, 0.0
      %v3876 = vmax.f32 %v3566, 0.0
      %v3877 = vmax.f32 %v2224, 0.0
      %v3878 = vmax.f32 %v2672, 0.0
      %v3879 = vmax.f32 %v3120, 0.0
      %v3880 = vmax.f32 %v3568, 0.0
      %v3881 = vmax.f32 %v2227, 0.0
      %v3882 = vmax.f32 %v2675, 0.0
      %v3883 = vmax.f32 %v3123, 0.0
      %v3884 = vmax.f32 %v3571, 0.0
      %v3885 = vmax.f32 %v2229, 0.0
      %v3886 = vmax.f32 %v2677, 0.0
      %v3887 = vmax.f32 %v3125, 0.0
      %v3888 = vmax.f32 %v3573, 0.0
      %v3889 = vmax.f32 %v2232, 0.0
      %v3890 = vmax.f32 %v2680, 0.0
      %v3891 = vmax.f32 %v3128, 0.0
      %v3892 = vmax.f32 %v3576, 0.0
      %v3893 = vmax.f32 %v2234, 0.0
      %v3894 = vmax.f32 %v2682, 0.0
      %v3895 = vmax.f32 %v3130, 0.0
      %v3896 = vmax.f32 %v3578, 0.0
      %v3897 = vmax.f32 %v2237, 0.0
      %v3898 = vmax.f32 %v2685, 0.0
      %v3899 = vmax.f32 %v3133, 0.0
      %v3900 = vmax.f32 %v3581, 0.0
      %v3901 = vmax.f32 %v2239, 0.0
      %v3902 = vmax.f32 %v2687, 0.0
      %v3903 = vmax.f32 %v3135, 0.0
      %v3904 = vmax.f32 %v3583, 0.0
      %v3905 = vmax.f32 %v2242, 0.0
      %v3906 = vmax.f32 %v2690, 0.0
      %v3907 = vmax.f32 %v3138, 0.0
      %v3908 = vmax.f32 %v3586, 0.0
      %v3909 = vmax.f32 %v2244, 0.0
      %v3910 = vmax.f32 %v2692, 0.0
      %v3911 = vmax.f32 %v3140, 0.0
      %v3912 = vmax.f32 %v3588, 0.0
      %v3913 = vmax.f32 %v2247, 0.0
      %v3914 = vmax.f32 %v2695, 0.0
      %v3915 = vmax.f32 %v3143, 0.0
      %v3916 = vmax.f32 %v3591, 0.0
      %v3917 = vmax.f32 %v2249, 0.0
      %v3918 = vmax.f32 %v2697, 0.0
      %v3919 = vmax.f32 %v3145, 0.0
      %v3920 = vmax.f32 %v3593, 0.0
      %v3921 = vmax.f32 %v2252, 0.0
      %v3922 = vmax.f32 %v2700, 0.0
      %v3923 = vmax.f32 %v3148, 0.0
      %v3924 = vmax.f32 %v3596, 0.0
      %v3925 = vmax.f32 %v2254, 0.0
      %v3926 = vmax.f32 %v2702, 0.0
      %v3927 = vmax.f32 %v3150, 0.0
      %v3928 = vmax.f32 %v3598, 0.0
      %v3929 = vmax.f32 %v2257, 0.0
      %v3930 = vmax.f32 %v2705, 0.0
      %v3931 = vmax.f32 %v3153, 0.0
      %v3932 = vmax.f32 %v3601, 0.0
      %v3933 = vmax.f32 %v2259, 0.0
      %v3934 = vmax.f32 %v2707, 0.0
      %v3935 = vmax.f32 %v3155, 0.0
      %v3936 = vmax.f32 %v3603, 0.0
      %v3937 = vmax.f32 %v2262, 0.0
      %v3938 = vmax.f32 %v2710, 0.0
      %v3939 = vmax.f32 %v3158, 0.0
      %v3940 = vmax.f32 %v3606, 0.0
      %v3941 = vmax.f32 %v2264, 0.0
      %v3942 = vmax.f32 %v2712, 0.0
      %v3943 = vmax.f32 %v3160, 0.0
      %v3944 = vmax.f32 %v3608, 0.0
      %v3945 = vmax.f32 %v2267, 0.0
      %v3946 = vmax.f32 %v2715, 0.0
      %v3947 = vmax.f32 %v3163, 0.0
      %v3948 = vmax.f32 %v3611, 0.0
      %v3949 = vmax.f32 %v2269, 0.0
      %v3950 = vmax.f32 %v2717, 0.0
      %v3951 = vmax.f32 %v3165, 0.0
      %v3952 = vmax.f32 %v3613, 0.0
      %v3953 = vmax.f32 %v2272, 0.0
      %v3954 = vmax.f32 %v2720, 0.0
      %v3955 = vmax.f32 %v3168, 0.0
      %v3956 = vmax.f32 %v3616, 0.0
      %v3957 = vmax.f32 %v2274, 0.0
      %v3958 = vmax.f32 %v2722, 0.0
      %v3959 = vmax.f32 %v3170, 0.0
      %v3960 = vmax.f32 %v3618, 0.0
      %v3961 = vmax.f32 %v2277, 0.0
      %v3962 = vmax.f32 %v2725, 0.0
      %v3963 = vmax.f32 %v3173, 0.0
      %v3964 = vmax.f32 %v3621, 0.0
      %v3965 = vmax.f32 %v2279, 0.0
      %v3966 = vmax.f32 %v2727, 0.0
      %v3967 = vmax.f32 %v3175, 0.0
      %v3968 = vmax.f32 %v3623, 0.0
      %v3969 = vpack.c.bf16 %v3629, %v3625
      %v3970 = vpack.c.bf16 %v3630, %v3626
      %v3971 = vpack.c.bf16 %v3631, %v3627
      %v3972 = vpack.c.bf16 %v3632, %v3628
      %v3973 = vpack.c.bf16 %v3637, %v3633
      %v3974 = vpack.c.bf16 %v3638, %v3634
      %v3975 = vpack.c.bf16 %v3639, %v3635
      %v3976 = vpack.c.bf16 %v3640, %v3636
      %v3977 = vpack.c.bf16 %v3645, %v3641
      %v3978 = vpack.c.bf16 %v3646, %v3642
      %v3979 = vpack.c.bf16 %v3647, %v3643
      %v3980 = vpack.c.bf16 %v3648, %v3644
      %v3981 = vpack.c.bf16 %v3653, %v3649
      %v3982 = vpack.c.bf16 %v3654, %v3650
      %v3983 = vpack.c.bf16 %v3655, %v3651
      %v3984 = vpack.c.bf16 %v3656, %v3652
      %v3985 = vpack.c.bf16 %v3661, %v3657
      %v3986 = vpack.c.bf16 %v3662, %v3658
      %v3987 = vpack.c.bf16 %v3663, %v3659
      %v3988 = vpack.c.bf16 %v3664, %v3660
      %v3989 = vpack.c.bf16 %v3669, %v3665
      %v3990 = vpack.c.bf16 %v3670, %v3666
      %v3991 = vpack.c.bf16 %v3671, %v3667
      %v3992 = vpack.c.bf16 %v3672, %v3668
      %v3993 = vpack.c.bf16 %v3677, %v3673
      %v3994 = vpack.c.bf16 %v3678, %v3674
      %v3995 = vpack.c.bf16 %v3679, %v3675
      %v3996 = vpack.c.bf16 %v3680, %v3676
      %v3997 = vpack.c.bf16 %v3685, %v3681
      %v3998 = vpack.c.bf16 %v3686, %v3682
      %v3999 = vpack.c.bf16 %v3687, %v3683
      %v4000 = vpack.c.bf16 %v3688, %v3684
      %v4001 = vpack.c.bf16 %v3693, %v3689
      %v4002 = vpack.c.bf16 %v3694, %v3690
      %v4003 = vpack.c.bf16 %v3695, %v3691
      %v4004 = vpack.c.bf16 %v3696, %v3692
      %v4005 = vpack.c.bf16 %v3701, %v3697
      %v4006 = vpack.c.bf16 %v3702, %v3698
      %v4007 = vpack.c.bf16 %v3703, %v3699
      %v4008 = vpack.c.bf16 %v3704, %v3700
      %v4009 = vpack.c.bf16 %v3709, %v3705
      %v4010 = vpack.c.bf16 %v3710, %v3706
      %v4011 = vpack.c.bf16 %v3711, %v3707
      %v4012 = vpack.c.bf16 %v3712, %v3708
      %v4013 = vpack.c.bf16 %v3717, %v3713
      %v4014 = vpack.c.bf16 %v3718, %v3714
      %v4015 = vpack.c.bf16 %v3719, %v3715
      %v4016 = vpack.c.bf16 %v3720, %v3716
      %v4017 = vpack.c.bf16 %v3725, %v3721
      %v4018 = vpack.c.bf16 %v3726, %v3722
      %v4019 = vpack.c.bf16 %v3727, %v3723
      %v4020 = vpack.c.bf16 %v3728, %v3724
      %v4021 = vpack.c.bf16 %v3733, %v3729
      %v4022 = vpack.c.bf16 %v3734, %v3730
      %v4023 = vpack.c.bf16 %v3735, %v3731
      %v4024 = vpack.c.bf16 %v3736, %v3732
      %v4025 = vpack.c.bf16 %v3741, %v3737
      %v4026 = vpack.c.bf16 %v3742, %v3738
      %v4027 = vpack.c.bf16 %v3743, %v3739
      %v4028 = vpack.c.bf16 %v3744, %v3740
      %v4029 = vpack.c.bf16 %v3749, %v3745
      %v4030 = vpack.c.bf16 %v3750, %v3746
      %v4031 = vpack.c.bf16 %v3751, %v3747
      %v4032 = vpack.c.bf16 %v3752, %v3748
      %v4033 = vpack.c.bf16 %v3757, %v3753
      %v4034 = vpack.c.bf16 %v3758, %v3754
      %v4035 = vpack.c.bf16 %v3759, %v3755
      %v4036 = vpack.c.bf16 %v3760, %v3756
      %v4037 = vpack.c.bf16 %v3765, %v3761
      %v4038 = vpack.c.bf16 %v3766, %v3762
      %v4039 = vpack.c.bf16 %v3767, %v3763
      %v4040 = vpack.c.bf16 %v3768, %v3764
      %v4041 = vpack.c.bf16 %v3773, %v3769
      %v4042 = vpack.c.bf16 %v3774, %v3770
      %v4043 = vpack.c.bf16 %v3775, %v3771
      %v4044 = vpack.c.bf16 %v3776, %v3772
      %v4045 = vpack.c.bf16 %v3781, %v3777
      %v4046 = vpack.c.bf16 %v3782, %v3778
      %v4047 = vpack.c.bf16 %v3783, %v3779
      %v4048 = vpack.c.bf16 %v3784, %v3780
      %v4049 = vpack.c.bf16 %v3789, %v3785
      %v4050 = vpack.c.bf16 %v3790, %v3786
      %v4051 = vpack.c.bf16 %v3791, %v3787
      %v4052 = vpack.c.bf16 %v3792, %v3788
      %v4053 = vpack.c.bf16 %v3797, %v3793
      %v4054 = vpack.c.bf16 %v3798, %v3794
      %v4055 = vpack.c.bf16 %v3799, %v3795
      %v4056 = vpack.c.bf16 %v3800, %v3796
      %v4057 = vpack.c.bf16 %v3805, %v3801
      %v4058 = vpack.c.bf16 %v3806, %v3802
      %v4059 = vpack.c.bf16 %v3807, %v3803
      %v4060 = vpack.c.bf16 %v3808, %v3804
      %v4061 = vpack.c.bf16 %v3813, %v3809
      %v4062 = vpack.c.bf16 %v3814, %v3810
      %v4063 = vpack.c.bf16 %v3815, %v3811
      %v4064 = vpack.c.bf16 %v3816, %v3812
      %v4065 = vpack.c.bf16 %v3821, %v3817
      %v4066 = vpack.c.bf16 %v3822, %v3818
      %v4067 = vpack.c.bf16 %v3823, %v3819
      %v4068 = vpack.c.bf16 %v3824, %v3820
      %v4069 = vpack.c.bf16 %v3829, %v3825
      %v4070 = vpack.c.bf16 %v3830, %v3826
      %v4071 = vpack.c.bf16 %v3831, %v3827
      %v4072 = vpack.c.bf16 %v3832, %v3828
      %v4073 = vpack.c.bf16 %v3837, %v3833
      %v4074 = vpack.c.bf16 %v3838, %v3834
      %v4075 = vpack.c.bf16 %v3839, %v3835
      %v4076 = vpack.c.bf16 %v3840, %v3836
      %v4077 = vpack.c.bf16 %v3845, %v3841
      %v4078 = vpack.c.bf16 %v3846, %v3842
      %v4079 = vpack.c.bf16 %v3847, %v3843
      %v4080 = vpack.c.bf16 %v3848, %v3844
      %v4081 = vpack.c.bf16 %v3853, %v3849
      %v4082 = vpack.c.bf16 %v3854, %v3850
      %v4083 = vpack.c.bf16 %v3855, %v3851
      %v4084 = vpack.c.bf16 %v3856, %v3852
      %v4085 = vpack.c.bf16 %v3861, %v3857
      %v4086 = vpack.c.bf16 %v3862, %v3858
      %v4087 = vpack.c.bf16 %v3863, %v3859
      %v4088 = vpack.c.bf16 %v3864, %v3860
      %v4089 = vpack.c.bf16 %v3869, %v3865
      %v4090 = vpack.c.bf16 %v3870, %v3866
      %v4091 = vpack.c.bf16 %v3871, %v3867
      %v4092 = vpack.c.bf16 %v3872, %v3868
      %v4093 = vpack.c.bf16 %v3877, %v3873
      %v4094 = vpack.c.bf16 %v3878, %v3874
      %v4095 = vpack.c.bf16 %v3879, %v3875
      %v4096 = vpack.c.bf16 %v3880, %v3876
      %v4097 = vpack.c.bf16 %v3885, %v3881
      %v4098 = vpack.c.bf16 %v3886, %v3882
      %v4099 = vpack.c.bf16 %v3887, %v3883
      %v4100 = vpack.c.bf16 %v3888, %v3884
      %v4101 = vpack.c.bf16 %v3893, %v3889
      %v4102 = vpack.c.bf16 %v3894, %v3890
      %v4103 = vpack.c.bf16 %v3895, %v3891
      %v4104 = vpack.c.bf16 %v3896, %v3892
      %v4105 = vpack.c.bf16 %v3901, %v3897
      %v4106 = vpack.c.bf16 %v3902, %v3898
      %v4107 = vpack.c.bf16 %v3903, %v3899
      %v4108 = vpack.c.bf16 %v3904, %v3900
      %v4109 = vpack.c.bf16 %v3909, %v3905
      %v4110 = vpack.c.bf16 %v3910, %v3906
      %v4111 = vpack.c.bf16 %v3911, %v3907
      %v4112 = vpack.c.bf16 %v3912, %v3908
      %v4113 = vpack.c.bf16 %v3917, %v3913
      %v4114 = vpack.c.bf16 %v3918, %v3914
      %v4115 = vpack.c.bf16 %v3919, %v3915
      %v4116 = vpack.c.bf16 %v3920, %v3916
      %v4117 = vpack.c.bf16 %v3925, %v3921
      %v4118 = vpack.c.bf16 %v3926, %v3922
      %v4119 = vpack.c.bf16 %v3927, %v3923
      %v4120 = vpack.c.bf16 %v3928, %v3924
      %v4121 = vpack.c.bf16 %v3933, %v3929
      %v4122 = vpack.c.bf16 %v3934, %v3930
      %v4123 = vpack.c.bf16 %v3935, %v3931
      %v4124 = vpack.c.bf16 %v3936, %v3932
      %v4125 = vpack.c.bf16 %v3941, %v3937
      %v4126 = vpack.c.bf16 %v3942, %v3938
      %v4127 = vpack.c.bf16 %v3943, %v3939
      %v4128 = vpack.c.bf16 %v3944, %v3940
      %v4129 = vpack.c.bf16 %v3949, %v3945
      %v4130 = vpack.c.bf16 %v3950, %v3946
      %v4131 = vpack.c.bf16 %v3951, %v3947
      %v4132 = vpack.c.bf16 %v3952, %v3948
      %v4133 = vpack.c.bf16 %v3957, %v3953
      %v4134 = vpack.c.bf16 %v3958, %v3954
      %v4135 = vpack.c.bf16 %v3959, %v3955
      %v4136 = vpack.c.bf16 %v3960, %v3956
      %v4137 = vpack.c.bf16 %v3965, %v3961
      %v4138 = vpack.c.bf16 %v3966, %v3962
      %v4139 = vpack.c.bf16 %v3967, %v3963
      %v4140 = vpack.c.bf16 %v3968, %v3964
      %v4141 = vld [vmem:[%s5] sm:$0xf]
      %v4142 = vld [vmem:[%s5 + $0x4] sm:$0xf]
      %v4143 = vld [vmem:[%s5 + $0x8] sm:$0xf]
      %v4144 = vld [vmem:[%s5 + $0xc] sm:$0xf]
      %v4145 = vld [vmem:[%s5 + $0x10] sm:$0xf]
      %v4146 = vld [vmem:[%s5 + $0x14] sm:$0xf]
      %v4147 = vld [vmem:[%s5 + $0x18] sm:$0xf]
      %v4148 = vld [vmem:[%s5 + $0x1c] sm:$0xf]
      %v4149 = vld [vmem:[%s5 + $0x20] sm:$0xf]
      %v4150 = vld [vmem:[%s5 + $0x24] sm:$0xf]
      %v4151 = vld [vmem:[%s5 + $0x28] sm:$0xf]
      %v4152 = vld [vmem:[%s5 + $0x2c] sm:$0xf]
      %v4153 = vld [vmem:[%s5 + $0x30] sm:$0xf]
      %v4154 = vld [vmem:[%s5 + $0x34] sm:$0xf]
      %v4155 = vld [vmem:[%s5 + $0x38] sm:$0xf]
      %v4156 = vld [vmem:[%s5 + $0x3c] sm:$0xf]
      %v4157 = vld [vmem:[%s5 + $0x40] sm:$0xf]
      %v4158 = vld [vmem:[%s5 + $0x44] sm:$0xf]
      %v4159 = vld [vmem:[%s5 + $0x48] sm:$0xf]
      %v4160 = vld [vmem:[%s5 + $0x4c] sm:$0xf]
      %v4161 = vld [vmem:[%s5 + $0x50] sm:$0xf]
      %v4162 = vld [vmem:[%s5 + $0x54] sm:$0xf]
      %v4163 = vld [vmem:[%s5 + $0x58] sm:$0xf]
      %v4164 = vld [vmem:[%s5 + $0x5c] sm:$0xf]
      %v4165 = vld [vmem:[%s5 + $0x60] sm:$0xf]
      %v4166 = vld [vmem:[%s5 + $0x64] sm:$0xf]
      %v4167 = vld [vmem:[%s5 + $0x68] sm:$0xf]
      %v4168 = vld [vmem:[%s5 + $0x6c] sm:$0xf]
      %v4169 = vld [vmem:[%s5 + $0x70] sm:$0xf]
      %v4170 = vld [vmem:[%s5 + $0x74] sm:$0xf]
      %v4171 = vld [vmem:[%s5 + $0x78] sm:$0xf]
      %v4172 = vld [vmem:[%s5 + $0x7c] sm:$0xf]
      %v4173 = vld [vmem:[%s5 + $0x80] sm:$0xf]
      %v4174 = vld [vmem:[%s5 + $0x84] sm:$0xf]
      %v4175 = vld [vmem:[%s5 + $0x88] sm:$0xf]
      %v4176 = vld [vmem:[%s5 + $0x8c] sm:$0xf]
      %v4177 = vld [vmem:[%s5 + $0x90] sm:$0xf]
      %v4178 = vld [vmem:[%s5 + $0x94] sm:$0xf]
      %v4179 = vld [vmem:[%s5 + $0x98] sm:$0xf]
      %v4180 = vld [vmem:[%s5 + $0x9c] sm:$0xf]
      %v4181 = vld [vmem:[%s5 + $0xa0] sm:$0xf]
      %v4182 = vld [vmem:[%s5 + $0xa4] sm:$0xf]
      %v4183 = vld [vmem:[%s5 + $0xa8] sm:$0xf]
      %v4184 = vld [vmem:[%s5 + $0xac] sm:$0xf]
      %v4185 = vld [vmem:[%s5 + $0xb0] sm:$0xf]
      %v4186 = vld [vmem:[%s5 + $0xb4] sm:$0xf]
      %v4187 = vld [vmem:[%s5 + $0xb8] sm:$0xf]
      %v4188 = vld [vmem:[%s5 + $0xbc] sm:$0xf]
      %v4189 = vld [vmem:[%s5 + $0xc0] sm:$0xf]
      %v4190 = vld [vmem:[%s5 + $0xc4] sm:$0xf]
      %v4191 = vld [vmem:[%s5 + $0xc8] sm:$0xf]
      %v4192 = vld [vmem:[%s5 + $0xcc] sm:$0xf]
      %v4193 = vld [vmem:[%s5 + $0xd0] sm:$0xf]
      %v4194 = vld [vmem:[%s5 + $0xd4] sm:$0xf]
      %v4195 = vld [vmem:[%s5 + $0xd8] sm:$0xf]
      %v4196 = vld [vmem:[%s5 + $0xdc] sm:$0xf]
      %v4197 = vld [vmem:[%s5 + $0xe0] sm:$0xf]
      %v4198 = vld [vmem:[%s5 + $0xe4] sm:$0xf]
      %v4199 = vld [vmem:[%s5 + $0xe8] sm:$0xf]
      %v4200 = vld [vmem:[%s5 + $0xec] sm:$0xf]
      %v4201 = vld [vmem:[%s5 + $0xf0] sm:$0xf]
      %v4202 = vld [vmem:[%s5 + $0xf4] sm:$0xf]
      %v4203 = vld [vmem:[%s5 + $0xf8] sm:$0xf]
      %v4204 = vld [vmem:[%s5 + $0xfc] sm:$0xf]
      %v4205 = vld [vmem:[%s6] sm:$0x1]
      %v4207 = vperm.slane %v4205, 0
      %v4273 = vunpack.c.l.b16 %v4141
      %v4274 = vunpack.c.l.b16 %v4142
      %v4275 = vunpack.c.l.b16 %v4143
      %v4276 = vunpack.c.l.b16 %v4144
      %v4277 = vunpack.c.l.b16 %v4145
      %v4278 = vunpack.c.l.b16 %v4146
      %v4279 = vunpack.c.l.b16 %v4147
      %v4280 = vunpack.c.l.b16 %v4148
      %v4281 = vunpack.c.l.b16 %v4149
      %v4282 = vunpack.c.l.b16 %v4150
      %v4283 = vunpack.c.l.b16 %v4151
      %v4284 = vunpack.c.l.b16 %v4152
      %v4285 = vunpack.c.l.b16 %v4153
      %v4286 = vunpack.c.l.b16 %v4154
      %v4287 = vunpack.c.l.b16 %v4155
      %v4288 = vunpack.c.l.b16 %v4156
      %v4289 = vunpack.c.l.b16 %v4157
      %v4290 = vunpack.c.l.b16 %v4158
      %v4291 = vunpack.c.l.b16 %v4159
      %v4292 = vunpack.c.l.b16 %v4160
      %v4293 = vunpack.c.l.b16 %v4161
      %v4294 = vunpack.c.l.b16 %v4162
      %v4295 = vunpack.c.l.b16 %v4163
      %v4296 = vunpack.c.l.b16 %v4164
      %v4297 = vunpack.c.l.b16 %v4165
      %v4298 = vunpack.c.l.b16 %v4166
      %v4299 = vunpack.c.l.b16 %v4167
      %v4300 = vunpack.c.l.b16 %v4168
      %v4301 = vunpack.c.l.b16 %v4169
      %v4302 = vunpack.c.l.b16 %v4170
      %v4303 = vunpack.c.l.b16 %v4171
      %v4304 = vunpack.c.l.b16 %v4172
      %v4305 = vunpack.c.l.b16 %v4173
      %v4306 = vunpack.c.l.b16 %v4174
      %v4307 = vunpack.c.l.b16 %v4175
      %v4308 = vunpack.c.l.b16 %v4176
      %v4309 = vunpack.c.l.b16 %v4177
      %v4310 = vunpack.c.l.b16 %v4178
      %v4311 = vunpack.c.l.b16 %v4179
      %v4312 = vunpack.c.l.b16 %v4180
      %v4313 = vunpack.c.l.b16 %v4181
      %v4314 = vunpack.c.l.b16 %v4182
      %v4315 = vunpack.c.l.b16 %v4183
      %v4316 = vunpack.c.l.b16 %v4184
      %v4317 = vunpack.c.l.b16 %v4185
      %v4318 = vunpack.c.l.b16 %v4186
      %v4319 = vunpack.c.l.b16 %v4187
      %v4320 = vunpack.c.l.b16 %v4188
      %v4321 = vunpack.c.l.b16 %v4189
      %v4322 = vunpack.c.l.b16 %v4190
      %v4323 = vunpack.c.l.b16 %v4191
      %v4324 = vunpack.c.l.b16 %v4192
      %v4325 = vunpack.c.l.b16 %v4193
      %v4326 = vunpack.c.l.b16 %v4194
      %v4327 = vunpack.c.l.b16 %v4195
      %v4328 = vunpack.c.l.b16 %v4196
      %v4329 = vunpack.c.l.b16 %v4197
      %v4330 = vunpack.c.l.b16 %v4198
      %v4331 = vunpack.c.l.b16 %v4199
      %v4332 = vunpack.c.l.b16 %v4200
      %v4333 = vunpack.c.l.b16 %v4201
      %v4334 = vunpack.c.l.b16 %v4202
      %v4335 = vunpack.c.l.b16 %v4203
      %v4336 = vunpack.c.l.b16 %v4204
      %v4337 = vpack.c.b16 %v4274, %v4273
      %v4338 = vpack.c.b16 %v4276, %v4275
      %v4339 = vpack.c.b16 %v4278, %v4277
      %v4340 = vpack.c.b16 %v4280, %v4279
      %v4341 = vpack.c.b16 %v4282, %v4281
      %v4342 = vpack.c.b16 %v4284, %v4283
      %v4343 = vpack.c.b16 %v4286, %v4285
      %v4344 = vpack.c.b16 %v4288, %v4287
      %v4345 = vpack.c.b16 %v4290, %v4289
      %v4346 = vpack.c.b16 %v4292, %v4291
      %v4347 = vpack.c.b16 %v4294, %v4293
      %v4348 = vpack.c.b16 %v4296, %v4295
      %v4349 = vpack.c.b16 %v4298, %v4297
      %v4350 = vpack.c.b16 %v4300, %v4299
      %v4351 = vpack.c.b16 %v4302, %v4301
      %v4352 = vpack.c.b16 %v4304, %v4303
      %v4353 = vpack.c.b16 %v4306, %v4305
      %v4354 = vpack.c.b16 %v4308, %v4307
      %v4355 = vpack.c.b16 %v4310, %v4309
      %v4356 = vpack.c.b16 %v4312, %v4311
      %v4357 = vpack.c.b16 %v4314, %v4313
      %v4358 = vpack.c.b16 %v4316, %v4315
      %v4359 = vpack.c.b16 %v4318, %v4317
      %v4360 = vpack.c.b16 %v4320, %v4319
      %v4361 = vpack.c.b16 %v4322, %v4321
      %v4362 = vpack.c.b16 %v4324, %v4323
      %v4363 = vpack.c.b16 %v4326, %v4325
      %v4364 = vpack.c.b16 %v4328, %v4327
      %v4365 = vpack.c.b16 %v4330, %v4329
      %v4366 = vpack.c.b16 %v4332, %v4331
      %v4367 = vpack.c.b16 %v4334, %v4333
      %v4368 = vpack.c.b16 %v4336, %v4335
      %4401 = vmatpush.bf16.msra.mxu0 %v4344
      %4402 = vmatpush.bf16.msra.mxu0 %v4343
      %4403 = vmatpush.bf16.msra.mxu0 %v4342
      %4404 = vmatpush.bf16.msra.mxu0 %v4341
      %4405 = vmatpush.bf16.msra.mxu0 %v4340
      %4406 = vmatpush.bf16.msra.mxu0 %v4339
      %4407 = vmatpush.bf16.msra.mxu0 %v4338
      %4408 = vmatpush.bf16.msra.mxu0 %v4337
      %4409 = vmatmul.bf16.gmra.mxu0 %v3969
      %v4410 = vpop.f32.mrf.mxu0
      %v4411 = vadd.f32 %v4207, %v4410
      %v4412 = vpop.f32.mrf.mxu0
      %v4413 = vadd.f32 %v4207, %v4412
      %4414 = vmatmul.bf16.gmra.mxu0 %v3973
      %v4415 = vpop.f32.mrf.mxu0
      %v4416 = vadd.f32 %v4207, %v4415
      %v4417 = vpop.f32.mrf.mxu0
      %v4418 = vadd.f32 %v4207, %v4417
      %4419 = vmatmul.bf16.gmra.mxu0 %v3977
      %v4420 = vpop.f32.mrf.mxu0
      %v4421 = vadd.f32 %v4207, %v4420
      %v4422 = vpop.f32.mrf.mxu0
      %v4423 = vadd.f32 %v4207, %v4422
      %4424 = vmatmul.bf16.gmra.mxu0 %v3981
      %v4425 = vpop.f32.mrf.mxu0
      %v4426 = vadd.f32 %v4207, %v4425
      %v4427 = vpop.f32.mrf.mxu0
      %v4428 = vadd.f32 %v4207, %v4427
      %4429 = vmatmul.bf16.gmra.mxu0 %v3985
      %v4430 = vpop.f32.mrf.mxu0
      %v4431 = vadd.f32 %v4207, %v4430
      %v4432 = vpop.f32.mrf.mxu0
      %v4433 = vadd.f32 %v4207, %v4432
      %4434 = vmatmul.bf16.gmra.mxu0 %v3989
      %v4435 = vpop.f32.mrf.mxu0
      %v4436 = vadd.f32 %v4207, %v4435
      %v4437 = vpop.f32.mrf.mxu0
      %v4438 = vadd.f32 %v4207, %v4437
      %4439 = vmatmul.bf16.gmra.mxu0 %v3993
      %v4440 = vpop.f32.mrf.mxu0
      %v4441 = vadd.f32 %v4207, %v4440
      %v4442 = vpop.f32.mrf.mxu0
      %v4443 = vadd.f32 %v4207, %v4442
      %4444 = vmatmul.bf16.gmra.mxu0 %v3997
      %v4445 = vpop.f32.mrf.mxu0
      %v4446 = vadd.f32 %v4207, %v4445
      %v4447 = vpop.f32.mrf.mxu0
      %v4448 = vadd.f32 %v4207, %v4447
      %4449 = vmatmul.bf16.gmra.mxu0 %v4001
      %v4450 = vpop.f32.mrf.mxu0
      %v4451 = vadd.f32 %v4207, %v4450
      %v4452 = vpop.f32.mrf.mxu0
      %v4453 = vadd.f32 %v4207, %v4452
      %4454 = vmatmul.bf16.gmra.mxu0 %v4005
      %v4455 = vpop.f32.mrf.mxu0
      %v4456 = vadd.f32 %v4207, %v4455
      %v4457 = vpop.f32.mrf.mxu0
      %v4458 = vadd.f32 %v4207, %v4457
      %4459 = vmatmul.bf16.gmra.mxu0 %v4009
      %v4460 = vpop.f32.mrf.mxu0
      %v4461 = vadd.f32 %v4207, %v4460
      %v4462 = vpop.f32.mrf.mxu0
      %v4463 = vadd.f32 %v4207, %v4462
      %4464 = vmatmul.bf16.gmra.mxu0 %v4013
      %v4465 = vpop.f32.mrf.mxu0
      %v4466 = vadd.f32 %v4207, %v4465
      %v4467 = vpop.f32.mrf.mxu0
      %v4468 = vadd.f32 %v4207, %v4467
      %4469 = vmatmul.bf16.gmra.mxu0 %v4017
      %v4470 = vpop.f32.mrf.mxu0
      %v4471 = vadd.f32 %v4207, %v4470
      %v4472 = vpop.f32.mrf.mxu0
      %v4473 = vadd.f32 %v4207, %v4472
      %4474 = vmatmul.bf16.gmra.mxu0 %v4021
      %v4475 = vpop.f32.mrf.mxu0
      %v4476 = vadd.f32 %v4207, %v4475
      %v4477 = vpop.f32.mrf.mxu0
      %v4478 = vadd.f32 %v4207, %v4477
      %4479 = vmatmul.bf16.gmra.mxu0 %v4025
      %v4480 = vpop.f32.mrf.mxu0
      %v4481 = vadd.f32 %v4207, %v4480
      %v4482 = vpop.f32.mrf.mxu0
      %v4483 = vadd.f32 %v4207, %v4482
      %4484 = vmatmul.bf16.gmra.mxu0 %v4029
      %v4485 = vpop.f32.mrf.mxu0
      %v4486 = vadd.f32 %v4207, %v4485
      %v4487 = vpop.f32.mrf.mxu0
      %v4488 = vadd.f32 %v4207, %v4487
      %4489 = vmatmul.bf16.gmra.mxu0 %v4033
      %v4490 = vpop.f32.mrf.mxu0
      %v4491 = vadd.f32 %v4207, %v4490
      %v4492 = vpop.f32.mrf.mxu0
      %v4493 = vadd.f32 %v4207, %v4492
      %4494 = vmatmul.bf16.gmra.mxu0 %v4037
      %v4495 = vpop.f32.mrf.mxu0
      %v4496 = vadd.f32 %v4207, %v4495
      %v4497 = vpop.f32.mrf.mxu0
      %v4498 = vadd.f32 %v4207, %v4497
      %4499 = vmatmul.bf16.gmra.mxu0 %v4041
      %v4500 = vpop.f32.mrf.mxu0
      %v4501 = vadd.f32 %v4207, %v4500
      %v4502 = vpop.f32.mrf.mxu0
      %v4503 = vadd.f32 %v4207, %v4502
      %4504 = vmatmul.bf16.gmra.mxu0 %v4045
      %v4505 = vpop.f32.mrf.mxu0
      %v4506 = vadd.f32 %v4207, %v4505
      %v4507 = vpop.f32.mrf.mxu0
      %v4508 = vadd.f32 %v4207, %v4507
      %4509 = vmatmul.bf16.gmra.mxu0 %v4049
      %v4510 = vpop.f32.mrf.mxu0
      %v4511 = vadd.f32 %v4207, %v4510
      %v4512 = vpop.f32.mrf.mxu0
      %v4513 = vadd.f32 %v4207, %v4512
      %4514 = vmatmul.bf16.gmra.mxu0 %v4053
      %v4515 = vpop.f32.mrf.mxu0
      %v4516 = vadd.f32 %v4207, %v4515
      %v4517 = vpop.f32.mrf.mxu0
      %v4518 = vadd.f32 %v4207, %v4517
      %4519 = vmatmul.bf16.gmra.mxu0 %v4057
      %v4520 = vpop.f32.mrf.mxu0
      %v4521 = vadd.f32 %v4207, %v4520
      %v4522 = vpop.f32.mrf.mxu0
      %v4523 = vadd.f32 %v4207, %v4522
      %4524 = vmatmul.bf16.gmra.mxu0 %v4061
      %v4525 = vpop.f32.mrf.mxu0
      %v4526 = vadd.f32 %v4207, %v4525
      %v4527 = vpop.f32.mrf.mxu0
      %v4528 = vadd.f32 %v4207, %v4527
      %4529 = vmatmul.bf16.gmra.mxu0 %v4065
      %v4530 = vpop.f32.mrf.mxu0
      %v4531 = vadd.f32 %v4207, %v4530
      %v4532 = vpop.f32.mrf.mxu0
      %v4533 = vadd.f32 %v4207, %v4532
      %4534 = vmatmul.bf16.gmra.mxu0 %v4069
      %v4535 = vpop.f32.mrf.mxu0
      %v4536 = vadd.f32 %v4207, %v4535
      %v4537 = vpop.f32.mrf.mxu0
      %v4538 = vadd.f32 %v4207, %v4537
      %4539 = vmatmul.bf16.gmra.mxu0 %v4073
      %v4540 = vpop.f32.mrf.mxu0
      %v4541 = vadd.f32 %v4207, %v4540
      %v4542 = vpop.f32.mrf.mxu0
      %v4543 = vadd.f32 %v4207, %v4542
      %4544 = vmatmul.bf16.gmra.mxu0 %v4077
      %v4545 = vpop.f32.mrf.mxu0
      %v4546 = vadd.f32 %v4207, %v4545
      %v4547 = vpop.f32.mrf.mxu0
      %v4548 = vadd.f32 %v4207, %v4547
      %4549 = vmatmul.bf16.gmra.mxu0 %v4081
      %v4550 = vpop.f32.mrf.mxu0
      %v4551 = vadd.f32 %v4207, %v4550
      %v4552 = vpop.f32.mrf.mxu0
      %v4553 = vadd.f32 %v4207, %v4552
      %4554 = vmatmul.bf16.gmra.mxu0 %v4085
      %v4555 = vpop.f32.mrf.mxu0
      %v4556 = vadd.f32 %v4207, %v4555
      %v4557 = vpop.f32.mrf.mxu0
      %v4558 = vadd.f32 %v4207, %v4557
      %4559 = vmatmul.bf16.gmra.mxu0 %v4089
      %v4560 = vpop.f32.mrf.mxu0
      %v4561 = vadd.f32 %v4207, %v4560
      %v4562 = vpop.f32.mrf.mxu0
      %v4563 = vadd.f32 %v4207, %v4562
      %4564 = vmatmul.bf16.gmra.mxu0 %v4093
      %v4565 = vpop.f32.mrf.mxu0
      %v4566 = vadd.f32 %v4207, %v4565
      %v4567 = vpop.f32.mrf.mxu0
      %v4568 = vadd.f32 %v4207, %v4567
      %4569 = vmatmul.bf16.gmra.mxu0 %v4097
      %v4570 = vpop.f32.mrf.mxu0
      %v4571 = vadd.f32 %v4207, %v4570
      %v4572 = vpop.f32.mrf.mxu0
      %v4573 = vadd.f32 %v4207, %v4572
      %4574 = vmatmul.bf16.gmra.mxu0 %v4101
      %v4575 = vpop.f32.mrf.mxu0
      %v4576 = vadd.f32 %v4207, %v4575
      %v4577 = vpop.f32.mrf.mxu0
      %v4578 = vadd.f32 %v4207, %v4577
      %4579 = vmatmul.bf16.gmra.mxu0 %v4105
      %v4580 = vpop.f32.mrf.mxu0
      %v4581 = vadd.f32 %v4207, %v4580
      %v4582 = vpop.f32.mrf.mxu0
      %v4583 = vadd.f32 %v4207, %v4582
      %4584 = vmatmul.bf16.gmra.mxu0 %v4109
      %v4585 = vpop.f32.mrf.mxu0
      %v4586 = vadd.f32 %v4207, %v4585
      %v4587 = vpop.f32.mrf.mxu0
      %v4588 = vadd.f32 %v4207, %v4587
      %4589 = vmatmul.bf16.gmra.mxu0 %v4113
      %v4590 = vpop.f32.mrf.mxu0
      %v4591 = vadd.f32 %v4207, %v4590
      %v4592 = vpop.f32.mrf.mxu0
      %v4593 = vadd.f32 %v4207, %v4592
      %4594 = vmatmul.bf16.gmra.mxu0 %v4117
      %v4595 = vpop.f32.mrf.mxu0
      %v4596 = vadd.f32 %v4207, %v4595
      %v4597 = vpop.f32.mrf.mxu0
      %v4598 = vadd.f32 %v4207, %v4597
      %4599 = vmatmul.bf16.gmra.mxu0 %v4121
      %v4600 = vpop.f32.mrf.mxu0
      %v4601 = vadd.f32 %v4207, %v4600
      %v4602 = vpop.f32.mrf.mxu0
      %v4603 = vadd.f32 %v4207, %v4602
      %4604 = vmatmul.bf16.gmra.mxu0 %v4125
      %v4605 = vpop.f32.mrf.mxu0
      %v4606 = vadd.f32 %v4207, %v4605
      %v4607 = vpop.f32.mrf.mxu0
      %v4608 = vadd.f32 %v4207, %v4607
      %4609 = vmatmul.bf16.gmra.mxu0 %v4129
      %v4610 = vpop.f32.mrf.mxu0
      %v4611 = vadd.f32 %v4207, %v4610
      %v4612 = vpop.f32.mrf.mxu0
      %v4613 = vadd.f32 %v4207, %v4612
      %4614 = vmatmul.bf16.gmra.mxu0 %v4133
      %v4615 = vpop.f32.mrf.mxu0
      %v4616 = vadd.f32 %v4207, %v4615
      %v4617 = vpop.f32.mrf.mxu0
      %v4618 = vadd.f32 %v4207, %v4617
      %4619 = vmatmul.bf16.gmra.mxu0 %v4137
      %v4620 = vpop.f32.mrf.mxu0
      %v4621 = vadd.f32 %v4207, %v4620
      %v4622 = vpop.f32.mrf.mxu0
      %v4623 = vadd.f32 %v4207, %v4622
      %4624 = vdwg.mxu0
      %4625 = vmatpush.bf16.msra.mxu0 %v4352
      %4626 = vmatpush.bf16.msra.mxu0 %v4351
      %4627 = vmatpush.bf16.msra.mxu0 %v4350
      %4628 = vmatpush.bf16.msra.mxu0 %v4349
      %4629 = vmatpush.bf16.msra.mxu0 %v4348
      %4630 = vmatpush.bf16.msra.mxu0 %v4347
      %4631 = vmatpush.bf16.msra.mxu0 %v4346
      %4632 = vmatpush.bf16.msra.mxu0 %v4345
      %4633 = vmatmul.bf16.gmra.mxu0 %v3970
      %v4634 = vpop.f32.mrf.mxu0
      %v4635 = vadd.f32 %v4411, %v4634
      %v4636 = vpop.f32.mrf.mxu0
      %v4637 = vadd.f32 %v4413, %v4636
      %4638 = vmatmul.bf16.gmra.mxu0 %v3974
      %v4639 = vpop.f32.mrf.mxu0
      %v4640 = vadd.f32 %v4416, %v4639
      %v4641 = vpop.f32.mrf.mxu0
      %v4642 = vadd.f32 %v4418, %v4641
      %4643 = vmatmul.bf16.gmra.mxu0 %v3978
      %v4644 = vpop.f32.mrf.mxu0
      %v4645 = vadd.f32 %v4421, %v4644
      %v4646 = vpop.f32.mrf.mxu0
      %v4647 = vadd.f32 %v4423, %v4646
      %4648 = vmatmul.bf16.gmra.mxu0 %v3982
      %v4649 = vpop.f32.mrf.mxu0
      %v4650 = vadd.f32 %v4426, %v4649
      %v4651 = vpop.f32.mrf.mxu0
      %v4652 = vadd.f32 %v4428, %v4651
      %4653 = vmatmul.bf16.gmra.mxu0 %v3986
      %v4654 = vpop.f32.mrf.mxu0
      %v4655 = vadd.f32 %v4431, %v4654
      %v4656 = vpop.f32.mrf.mxu0
      %v4657 = vadd.f32 %v4433, %v4656
      %4658 = vmatmul.bf16.gmra.mxu0 %v3990
      %v4659 = vpop.f32.mrf.mxu0
      %v4660 = vadd.f32 %v4436, %v4659
      %v4661 = vpop.f32.mrf.mxu0
      %v4662 = vadd.f32 %v4438, %v4661
      %4663 = vmatmul.bf16.gmra.mxu0 %v3994
      %v4664 = vpop.f32.mrf.mxu0
      %v4665 = vadd.f32 %v4441, %v4664
      %v4666 = vpop.f32.mrf.mxu0
      %v4667 = vadd.f32 %v4443, %v4666
      %4668 = vmatmul.bf16.gmra.mxu0 %v3998
      %v4669 = vpop.f32.mrf.mxu0
      %v4670 = vadd.f32 %v4446, %v4669
      %v4671 = vpop.f32.mrf.mxu0
      %v4672 = vadd.f32 %v4448, %v4671
      %4673 = vmatmul.bf16.gmra.mxu0 %v4002
      %v4674 = vpop.f32.mrf.mxu0
      %v4675 = vadd.f32 %v4451, %v4674
      %v4676 = vpop.f32.mrf.mxu0
      %v4677 = vadd.f32 %v4453, %v4676
      %4678 = vmatmul.bf16.gmra.mxu0 %v4006
      %v4679 = vpop.f32.mrf.mxu0
      %v4680 = vadd.f32 %v4456, %v4679
      %v4681 = vpop.f32.mrf.mxu0
      %v4682 = vadd.f32 %v4458, %v4681
      %4683 = vmatmul.bf16.gmra.mxu0 %v4010
      %v4684 = vpop.f32.mrf.mxu0
      %v4685 = vadd.f32 %v4461, %v4684
      %v4686 = vpop.f32.mrf.mxu0
      %v4687 = vadd.f32 %v4463, %v4686
      %4688 = vmatmul.bf16.gmra.mxu0 %v4014
      %v4689 = vpop.f32.mrf.mxu0
      %v4690 = vadd.f32 %v4466, %v4689
      %v4691 = vpop.f32.mrf.mxu0
      %v4692 = vadd.f32 %v4468, %v4691
      %4693 = vmatmul.bf16.gmra.mxu0 %v4018
      %v4694 = vpop.f32.mrf.mxu0
      %v4695 = vadd.f32 %v4471, %v4694
      %v4696 = vpop.f32.mrf.mxu0
      %v4697 = vadd.f32 %v4473, %v4696
      %4698 = vmatmul.bf16.gmra.mxu0 %v4022
      %v4699 = vpop.f32.mrf.mxu0
      %v4700 = vadd.f32 %v4476, %v4699
      %v4701 = vpop.f32.mrf.mxu0
      %v4702 = vadd.f32 %v4478, %v4701
      %4703 = vmatmul.bf16.gmra.mxu0 %v4026
      %v4704 = vpop.f32.mrf.mxu0
      %v4705 = vadd.f32 %v4481, %v4704
      %v4706 = vpop.f32.mrf.mxu0
      %v4707 = vadd.f32 %v4483, %v4706
      %4708 = vmatmul.bf16.gmra.mxu0 %v4030
      %v4709 = vpop.f32.mrf.mxu0
      %v4710 = vadd.f32 %v4486, %v4709
      %v4711 = vpop.f32.mrf.mxu0
      %v4712 = vadd.f32 %v4488, %v4711
      %4713 = vmatmul.bf16.gmra.mxu0 %v4034
      %v4714 = vpop.f32.mrf.mxu0
      %v4715 = vadd.f32 %v4491, %v4714
      %v4716 = vpop.f32.mrf.mxu0
      %v4717 = vadd.f32 %v4493, %v4716
      %4718 = vmatmul.bf16.gmra.mxu0 %v4038
      %v4719 = vpop.f32.mrf.mxu0
      %v4720 = vadd.f32 %v4496, %v4719
      %v4721 = vpop.f32.mrf.mxu0
      %v4722 = vadd.f32 %v4498, %v4721
      %4723 = vmatmul.bf16.gmra.mxu0 %v4042
      %v4724 = vpop.f32.mrf.mxu0
      %v4725 = vadd.f32 %v4501, %v4724
      %v4726 = vpop.f32.mrf.mxu0
      %v4727 = vadd.f32 %v4503, %v4726
      %4728 = vmatmul.bf16.gmra.mxu0 %v4046
      %v4729 = vpop.f32.mrf.mxu0
      %v4730 = vadd.f32 %v4506, %v4729
      %v4731 = vpop.f32.mrf.mxu0
      %v4732 = vadd.f32 %v4508, %v4731
      %4733 = vmatmul.bf16.gmra.mxu0 %v4050
      %v4734 = vpop.f32.mrf.mxu0
      %v4735 = vadd.f32 %v4511, %v4734
      %v4736 = vpop.f32.mrf.mxu0
      %v4737 = vadd.f32 %v4513, %v4736
      %4738 = vmatmul.bf16.gmra.mxu0 %v4054
      %v4739 = vpop.f32.mrf.mxu0
      %v4740 = vadd.f32 %v4516, %v4739
      %v4741 = vpop.f32.mrf.mxu0
      %v4742 = vadd.f32 %v4518, %v4741
      %4743 = vmatmul.bf16.gmra.mxu0 %v4058
      %v4744 = vpop.f32.mrf.mxu0
      %v4745 = vadd.f32 %v4521, %v4744
      %v4746 = vpop.f32.mrf.mxu0
      %v4747 = vadd.f32 %v4523, %v4746
      %4748 = vmatmul.bf16.gmra.mxu0 %v4062
      %v4749 = vpop.f32.mrf.mxu0
      %v4750 = vadd.f32 %v4526, %v4749
      %v4751 = vpop.f32.mrf.mxu0
      %v4752 = vadd.f32 %v4528, %v4751
      %4753 = vmatmul.bf16.gmra.mxu0 %v4066
      %v4754 = vpop.f32.mrf.mxu0
      %v4755 = vadd.f32 %v4531, %v4754
      %v4756 = vpop.f32.mrf.mxu0
      %v4757 = vadd.f32 %v4533, %v4756
      %4758 = vmatmul.bf16.gmra.mxu0 %v4070
      %v4759 = vpop.f32.mrf.mxu0
      %v4760 = vadd.f32 %v4536, %v4759
      %v4761 = vpop.f32.mrf.mxu0
      %v4762 = vadd.f32 %v4538, %v4761
      %4763 = vmatmul.bf16.gmra.mxu0 %v4074
      %v4764 = vpop.f32.mrf.mxu0
      %v4765 = vadd.f32 %v4541, %v4764
      %v4766 = vpop.f32.mrf.mxu0
      %v4767 = vadd.f32 %v4543, %v4766
      %4768 = vmatmul.bf16.gmra.mxu0 %v4078
      %v4769 = vpop.f32.mrf.mxu0
      %v4770 = vadd.f32 %v4546, %v4769
      %v4771 = vpop.f32.mrf.mxu0
      %v4772 = vadd.f32 %v4548, %v4771
      %4773 = vmatmul.bf16.gmra.mxu0 %v4082
      %v4774 = vpop.f32.mrf.mxu0
      %v4775 = vadd.f32 %v4551, %v4774
      %v4776 = vpop.f32.mrf.mxu0
      %v4777 = vadd.f32 %v4553, %v4776
      %4778 = vmatmul.bf16.gmra.mxu0 %v4086
      %v4779 = vpop.f32.mrf.mxu0
      %v4780 = vadd.f32 %v4556, %v4779
      %v4781 = vpop.f32.mrf.mxu0
      %v4782 = vadd.f32 %v4558, %v4781
      %4783 = vmatmul.bf16.gmra.mxu0 %v4090
      %v4784 = vpop.f32.mrf.mxu0
      %v4785 = vadd.f32 %v4561, %v4784
      %v4786 = vpop.f32.mrf.mxu0
      %v4787 = vadd.f32 %v4563, %v4786
      %4788 = vmatmul.bf16.gmra.mxu0 %v4094
      %v4789 = vpop.f32.mrf.mxu0
      %v4790 = vadd.f32 %v4566, %v4789
      %v4791 = vpop.f32.mrf.mxu0
      %v4792 = vadd.f32 %v4568, %v4791
      %4793 = vmatmul.bf16.gmra.mxu0 %v4098
      %v4794 = vpop.f32.mrf.mxu0
      %v4795 = vadd.f32 %v4571, %v4794
      %v4796 = vpop.f32.mrf.mxu0
      %v4797 = vadd.f32 %v4573, %v4796
      %4798 = vmatmul.bf16.gmra.mxu0 %v4102
      %v4799 = vpop.f32.mrf.mxu0
      %v4800 = vadd.f32 %v4576, %v4799
      %v4801 = vpop.f32.mrf.mxu0
      %v4802 = vadd.f32 %v4578, %v4801
      %4803 = vmatmul.bf16.gmra.mxu0 %v4106
      %v4804 = vpop.f32.mrf.mxu0
      %v4805 = vadd.f32 %v4581, %v4804
      %v4806 = vpop.f32.mrf.mxu0
      %v4807 = vadd.f32 %v4583, %v4806
      %4808 = vmatmul.bf16.gmra.mxu0 %v4110
      %v4809 = vpop.f32.mrf.mxu0
      %v4810 = vadd.f32 %v4586, %v4809
      %v4811 = vpop.f32.mrf.mxu0
      %v4812 = vadd.f32 %v4588, %v4811
      %4813 = vmatmul.bf16.gmra.mxu0 %v4114
      %v4814 = vpop.f32.mrf.mxu0
      %v4815 = vadd.f32 %v4591, %v4814
      %v4816 = vpop.f32.mrf.mxu0
      %v4817 = vadd.f32 %v4593, %v4816
      %4818 = vmatmul.bf16.gmra.mxu0 %v4118
      %v4819 = vpop.f32.mrf.mxu0
      %v4820 = vadd.f32 %v4596, %v4819
      %v4821 = vpop.f32.mrf.mxu0
      %v4822 = vadd.f32 %v4598, %v4821
      %4823 = vmatmul.bf16.gmra.mxu0 %v4122
      %v4824 = vpop.f32.mrf.mxu0
      %v4825 = vadd.f32 %v4601, %v4824
      %v4826 = vpop.f32.mrf.mxu0
      %v4827 = vadd.f32 %v4603, %v4826
      %4828 = vmatmul.bf16.gmra.mxu0 %v4126
      %v4829 = vpop.f32.mrf.mxu0
      %v4830 = vadd.f32 %v4606, %v4829
      %v4831 = vpop.f32.mrf.mxu0
      %v4832 = vadd.f32 %v4608, %v4831
      %4833 = vmatmul.bf16.gmra.mxu0 %v4130
      %v4834 = vpop.f32.mrf.mxu0
      %v4835 = vadd.f32 %v4611, %v4834
      %v4836 = vpop.f32.mrf.mxu0
      %v4837 = vadd.f32 %v4613, %v4836
      %4838 = vmatmul.bf16.gmra.mxu0 %v4134
      %v4839 = vpop.f32.mrf.mxu0
      %v4840 = vadd.f32 %v4616, %v4839
      %v4841 = vpop.f32.mrf.mxu0
      %v4842 = vadd.f32 %v4618, %v4841
      %4843 = vmatmul.bf16.gmra.mxu0 %v4138
      %v4844 = vpop.f32.mrf.mxu0
      %v4845 = vadd.f32 %v4621, %v4844
      %v4846 = vpop.f32.mrf.mxu0
      %v4847 = vadd.f32 %v4623, %v4846
      %4848 = vdwg.mxu0
      %4849 = vmatpush.bf16.msra.mxu0 %v4360
      %4850 = vmatpush.bf16.msra.mxu0 %v4359
      %4851 = vmatpush.bf16.msra.mxu0 %v4358
      %4852 = vmatpush.bf16.msra.mxu0 %v4357
      %4853 = vmatpush.bf16.msra.mxu0 %v4356
      %4854 = vmatpush.bf16.msra.mxu0 %v4355
      %4855 = vmatpush.bf16.msra.mxu0 %v4354
      %4856 = vmatpush.bf16.msra.mxu0 %v4353
      %4857 = vmatmul.bf16.gmra.mxu0 %v3971
      %v4858 = vpop.f32.mrf.mxu0
      %v4859 = vadd.f32 %v4635, %v4858
      %v4860 = vpop.f32.mrf.mxu0
      %v4861 = vadd.f32 %v4637, %v4860
      %4862 = vmatmul.bf16.gmra.mxu0 %v3975
      %v4863 = vpop.f32.mrf.mxu0
      %v4864 = vadd.f32 %v4640, %v4863
      %v4865 = vpop.f32.mrf.mxu0
      %v4866 = vadd.f32 %v4642, %v4865
      %4867 = vmatmul.bf16.gmra.mxu0 %v3979
      %v4868 = vpop.f32.mrf.mxu0
      %v4869 = vadd.f32 %v4645, %v4868
      %v4870 = vpop.f32.mrf.mxu0
      %v4871 = vadd.f32 %v4647, %v4870
      %4872 = vmatmul.bf16.gmra.mxu0 %v3983
      %v4873 = vpop.f32.mrf.mxu0
      %v4874 = vadd.f32 %v4650, %v4873
      %v4875 = vpop.f32.mrf.mxu0
      %v4876 = vadd.f32 %v4652, %v4875
      %4877 = vmatmul.bf16.gmra.mxu0 %v3987
      %v4878 = vpop.f32.mrf.mxu0
      %v4879 = vadd.f32 %v4655, %v4878
      %v4880 = vpop.f32.mrf.mxu0
      %v4881 = vadd.f32 %v4657, %v4880
      %4882 = vmatmul.bf16.gmra.mxu0 %v3991
      %v4883 = vpop.f32.mrf.mxu0
      %v4884 = vadd.f32 %v4660, %v4883
      %v4885 = vpop.f32.mrf.mxu0
      %v4886 = vadd.f32 %v4662, %v4885
      %4887 = vmatmul.bf16.gmra.mxu0 %v3995
      %v4888 = vpop.f32.mrf.mxu0
      %v4889 = vadd.f32 %v4665, %v4888
      %v4890 = vpop.f32.mrf.mxu0
      %v4891 = vadd.f32 %v4667, %v4890
      %4892 = vmatmul.bf16.gmra.mxu0 %v3999
      %v4893 = vpop.f32.mrf.mxu0
      %v4894 = vadd.f32 %v4670, %v4893
      %v4895 = vpop.f32.mrf.mxu0
      %v4896 = vadd.f32 %v4672, %v4895
      %4897 = vmatmul.bf16.gmra.mxu0 %v4003
      %v4898 = vpop.f32.mrf.mxu0
      %v4899 = vadd.f32 %v4675, %v4898
      %v4900 = vpop.f32.mrf.mxu0
      %v4901 = vadd.f32 %v4677, %v4900
      %4902 = vmatmul.bf16.gmra.mxu0 %v4007
      %v4903 = vpop.f32.mrf.mxu0
      %v4904 = vadd.f32 %v4680, %v4903
      %v4905 = vpop.f32.mrf.mxu0
      %v4906 = vadd.f32 %v4682, %v4905
      %4907 = vmatmul.bf16.gmra.mxu0 %v4011
      %v4908 = vpop.f32.mrf.mxu0
      %v4909 = vadd.f32 %v4685, %v4908
      %v4910 = vpop.f32.mrf.mxu0
      %v4911 = vadd.f32 %v4687, %v4910
      %4912 = vmatmul.bf16.gmra.mxu0 %v4015
      %v4913 = vpop.f32.mrf.mxu0
      %v4914 = vadd.f32 %v4690, %v4913
      %v4915 = vpop.f32.mrf.mxu0
      %v4916 = vadd.f32 %v4692, %v4915
      %4917 = vmatmul.bf16.gmra.mxu0 %v4019
      %v4918 = vpop.f32.mrf.mxu0
      %v4919 = vadd.f32 %v4695, %v4918
      %v4920 = vpop.f32.mrf.mxu0
      %v4921 = vadd.f32 %v4697, %v4920
      %4922 = vmatmul.bf16.gmra.mxu0 %v4023
      %v4923 = vpop.f32.mrf.mxu0
      %v4924 = vadd.f32 %v4700, %v4923
      %v4925 = vpop.f32.mrf.mxu0
      %v4926 = vadd.f32 %v4702, %v4925
      %4927 = vmatmul.bf16.gmra.mxu0 %v4027
      %v4928 = vpop.f32.mrf.mxu0
      %v4929 = vadd.f32 %v4705, %v4928
      %v4930 = vpop.f32.mrf.mxu0
      %v4931 = vadd.f32 %v4707, %v4930
      %4932 = vmatmul.bf16.gmra.mxu0 %v4031
      %v4933 = vpop.f32.mrf.mxu0
      %v4934 = vadd.f32 %v4710, %v4933
      %v4935 = vpop.f32.mrf.mxu0
      %v4936 = vadd.f32 %v4712, %v4935
      %4937 = vmatmul.bf16.gmra.mxu0 %v4035
      %v4938 = vpop.f32.mrf.mxu0
      %v4939 = vadd.f32 %v4715, %v4938
      %v4940 = vpop.f32.mrf.mxu0
      %v4941 = vadd.f32 %v4717, %v4940
      %4942 = vmatmul.bf16.gmra.mxu0 %v4039
      %v4943 = vpop.f32.mrf.mxu0
      %v4944 = vadd.f32 %v4720, %v4943
      %v4945 = vpop.f32.mrf.mxu0
      %v4946 = vadd.f32 %v4722, %v4945
      %4947 = vmatmul.bf16.gmra.mxu0 %v4043
      %v4948 = vpop.f32.mrf.mxu0
      %v4949 = vadd.f32 %v4725, %v4948
      %v4950 = vpop.f32.mrf.mxu0
      %v4951 = vadd.f32 %v4727, %v4950
      %4952 = vmatmul.bf16.gmra.mxu0 %v4047
      %v4953 = vpop.f32.mrf.mxu0
      %v4954 = vadd.f32 %v4730, %v4953
      %v4955 = vpop.f32.mrf.mxu0
      %v4956 = vadd.f32 %v4732, %v4955
      %4957 = vmatmul.bf16.gmra.mxu0 %v4051
      %v4958 = vpop.f32.mrf.mxu0
      %v4959 = vadd.f32 %v4735, %v4958
      %v4960 = vpop.f32.mrf.mxu0
      %v4961 = vadd.f32 %v4737, %v4960
      %4962 = vmatmul.bf16.gmra.mxu0 %v4055
      %v4963 = vpop.f32.mrf.mxu0
      %v4964 = vadd.f32 %v4740, %v4963
      %v4965 = vpop.f32.mrf.mxu0
      %v4966 = vadd.f32 %v4742, %v4965
      %4967 = vmatmul.bf16.gmra.mxu0 %v4059
      %v4968 = vpop.f32.mrf.mxu0
      %v4969 = vadd.f32 %v4745, %v4968
      %v4970 = vpop.f32.mrf.mxu0
      %v4971 = vadd.f32 %v4747, %v4970
      %4972 = vmatmul.bf16.gmra.mxu0 %v4063
      %v4973 = vpop.f32.mrf.mxu0
      %v4974 = vadd.f32 %v4750, %v4973
      %v4975 = vpop.f32.mrf.mxu0
      %v4976 = vadd.f32 %v4752, %v4975
      %4977 = vmatmul.bf16.gmra.mxu0 %v4067
      %v4978 = vpop.f32.mrf.mxu0
      %v4979 = vadd.f32 %v4755, %v4978
      %v4980 = vpop.f32.mrf.mxu0
      %v4981 = vadd.f32 %v4757, %v4980
      %4982 = vmatmul.bf16.gmra.mxu0 %v4071
      %v4983 = vpop.f32.mrf.mxu0
      %v4984 = vadd.f32 %v4760, %v4983
      %v4985 = vpop.f32.mrf.mxu0
      %v4986 = vadd.f32 %v4762, %v4985
      %4987 = vmatmul.bf16.gmra.mxu0 %v4075
      %v4988 = vpop.f32.mrf.mxu0
      %v4989 = vadd.f32 %v4765, %v4988
      %v4990 = vpop.f32.mrf.mxu0
      %v4991 = vadd.f32 %v4767, %v4990
      %4992 = vmatmul.bf16.gmra.mxu0 %v4079
      %v4993 = vpop.f32.mrf.mxu0
      %v4994 = vadd.f32 %v4770, %v4993
      %v4995 = vpop.f32.mrf.mxu0
      %v4996 = vadd.f32 %v4772, %v4995
      %4997 = vmatmul.bf16.gmra.mxu0 %v4083
      %v4998 = vpop.f32.mrf.mxu0
      %v4999 = vadd.f32 %v4775, %v4998
      %v5000 = vpop.f32.mrf.mxu0
      %v5001 = vadd.f32 %v4777, %v5000
      %5002 = vmatmul.bf16.gmra.mxu0 %v4087
      %v5003 = vpop.f32.mrf.mxu0
      %v5004 = vadd.f32 %v4780, %v5003
      %v5005 = vpop.f32.mrf.mxu0
      %v5006 = vadd.f32 %v4782, %v5005
      %5007 = vmatmul.bf16.gmra.mxu0 %v4091
      %v5008 = vpop.f32.mrf.mxu0
      %v5009 = vadd.f32 %v4785, %v5008
      %v5010 = vpop.f32.mrf.mxu0
      %v5011 = vadd.f32 %v4787, %v5010
      %5012 = vmatmul.bf16.gmra.mxu0 %v4095
      %v5013 = vpop.f32.mrf.mxu0
      %v5014 = vadd.f32 %v4790, %v5013
      %v5015 = vpop.f32.mrf.mxu0
      %v5016 = vadd.f32 %v4792, %v5015
      %5017 = vmatmul.bf16.gmra.mxu0 %v4099
      %v5018 = vpop.f32.mrf.mxu0
      %v5019 = vadd.f32 %v4795, %v5018
      %v5020 = vpop.f32.mrf.mxu0
      %v5021 = vadd.f32 %v4797, %v5020
      %5022 = vmatmul.bf16.gmra.mxu0 %v4103
      %v5023 = vpop.f32.mrf.mxu0
      %v5024 = vadd.f32 %v4800, %v5023
      %v5025 = vpop.f32.mrf.mxu0
      %v5026 = vadd.f32 %v4802, %v5025
      %5027 = vmatmul.bf16.gmra.mxu0 %v4107
      %v5028 = vpop.f32.mrf.mxu0
      %v5029 = vadd.f32 %v4805, %v5028
      %v5030 = vpop.f32.mrf.mxu0
      %v5031 = vadd.f32 %v4807, %v5030
      %5032 = vmatmul.bf16.gmra.mxu0 %v4111
      %v5033 = vpop.f32.mrf.mxu0
      %v5034 = vadd.f32 %v4810, %v5033
      %v5035 = vpop.f32.mrf.mxu0
      %v5036 = vadd.f32 %v4812, %v5035
      %5037 = vmatmul.bf16.gmra.mxu0 %v4115
      %v5038 = vpop.f32.mrf.mxu0
      %v5039 = vadd.f32 %v4815, %v5038
      %v5040 = vpop.f32.mrf.mxu0
      %v5041 = vadd.f32 %v4817, %v5040
      %5042 = vmatmul.bf16.gmra.mxu0 %v4119
      %v5043 = vpop.f32.mrf.mxu0
      %v5044 = vadd.f32 %v4820, %v5043
      %v5045 = vpop.f32.mrf.mxu0
      %v5046 = vadd.f32 %v4822, %v5045
      %5047 = vmatmul.bf16.gmra.mxu0 %v4123
      %v5048 = vpop.f32.mrf.mxu0
      %v5049 = vadd.f32 %v4825, %v5048
      %v5050 = vpop.f32.mrf.mxu0
      %v5051 = vadd.f32 %v4827, %v5050
      %5052 = vmatmul.bf16.gmra.mxu0 %v4127
      %v5053 = vpop.f32.mrf.mxu0
      %v5054 = vadd.f32 %v4830, %v5053
      %v5055 = vpop.f32.mrf.mxu0
      %v5056 = vadd.f32 %v4832, %v5055
      %5057 = vmatmul.bf16.gmra.mxu0 %v4131
      %v5058 = vpop.f32.mrf.mxu0
      %v5059 = vadd.f32 %v4835, %v5058
      %v5060 = vpop.f32.mrf.mxu0
      %v5061 = vadd.f32 %v4837, %v5060
      %5062 = vmatmul.bf16.gmra.mxu0 %v4135
      %v5063 = vpop.f32.mrf.mxu0
      %v5064 = vadd.f32 %v4840, %v5063
      %v5065 = vpop.f32.mrf.mxu0
      %v5066 = vadd.f32 %v4842, %v5065
      %5067 = vmatmul.bf16.gmra.mxu0 %v4139
      %v5068 = vpop.f32.mrf.mxu0
      %v5069 = vadd.f32 %v4845, %v5068
      %v5070 = vpop.f32.mrf.mxu0
      %v5071 = vadd.f32 %v4847, %v5070
      %5072 = vdwg.mxu0
      %5073 = vmatpush.bf16.msra.mxu0 %v4368
      %5074 = vmatpush.bf16.msra.mxu0 %v4367
      %5075 = vmatpush.bf16.msra.mxu0 %v4366
      %5076 = vmatpush.bf16.msra.mxu0 %v4365
      %5077 = vmatpush.bf16.msra.mxu0 %v4364
      %5078 = vmatpush.bf16.msra.mxu0 %v4363
      %5079 = vmatpush.bf16.msra.mxu0 %v4362
      %5080 = vmatpush.bf16.msra.mxu0 %v4361
      %5081 = vmatmul.bf16.gmra.mxu0 %v3972
      %v5082 = vpop.f32.mrf.mxu0
      %v5083 = vadd.f32 %v4859, %v5082
      %v5084 = vpop.f32.mrf.mxu0
      %v5085 = vadd.f32 %v4861, %v5084
      %5086 = vmatmul.bf16.gmra.mxu0 %v3976
      %v5087 = vpop.f32.mrf.mxu0
      %v5088 = vadd.f32 %v4864, %v5087
      %v5089 = vpop.f32.mrf.mxu0
      %v5090 = vadd.f32 %v4866, %v5089
      %5091 = vmatmul.bf16.gmra.mxu0 %v3980
      %v5092 = vpop.f32.mrf.mxu0
      %v5093 = vadd.f32 %v4869, %v5092
      %v5094 = vpop.f32.mrf.mxu0
      %v5095 = vadd.f32 %v4871, %v5094
      %5096 = vmatmul.bf16.gmra.mxu0 %v3984
      %v5097 = vpop.f32.mrf.mxu0
      %v5098 = vadd.f32 %v4874, %v5097
      %v5099 = vpop.f32.mrf.mxu0
      %v5100 = vadd.f32 %v4876, %v5099
      %5101 = vmatmul.bf16.gmra.mxu0 %v3988
      %v5102 = vpop.f32.mrf.mxu0
      %v5103 = vadd.f32 %v4879, %v5102
      %v5104 = vpop.f32.mrf.mxu0
      %v5105 = vadd.f32 %v4881, %v5104
      %5106 = vmatmul.bf16.gmra.mxu0 %v3992
      %v5107 = vpop.f32.mrf.mxu0
      %v5108 = vadd.f32 %v4884, %v5107
      %v5109 = vpop.f32.mrf.mxu0
      %v5110 = vadd.f32 %v4886, %v5109
      %5111 = vmatmul.bf16.gmra.mxu0 %v3996
      %v5112 = vpop.f32.mrf.mxu0
      %v5113 = vadd.f32 %v4889, %v5112
      %v5114 = vpop.f32.mrf.mxu0
      %v5115 = vadd.f32 %v4891, %v5114
      %5116 = vmatmul.bf16.gmra.mxu0 %v4000
      %v5117 = vpop.f32.mrf.mxu0
      %v5118 = vadd.f32 %v4894, %v5117
      %v5119 = vpop.f32.mrf.mxu0
      %v5120 = vadd.f32 %v4896, %v5119
      %5121 = vmatmul.bf16.gmra.mxu0 %v4004
      %v5122 = vpop.f32.mrf.mxu0
      %v5123 = vadd.f32 %v4899, %v5122
      %v5124 = vpop.f32.mrf.mxu0
      %v5125 = vadd.f32 %v4901, %v5124
      %5126 = vmatmul.bf16.gmra.mxu0 %v4008
      %v5127 = vpop.f32.mrf.mxu0
      %v5128 = vadd.f32 %v4904, %v5127
      %v5129 = vpop.f32.mrf.mxu0
      %v5130 = vadd.f32 %v4906, %v5129
      %5131 = vmatmul.bf16.gmra.mxu0 %v4012
      %v5132 = vpop.f32.mrf.mxu0
      %v5133 = vadd.f32 %v4909, %v5132
      %v5134 = vpop.f32.mrf.mxu0
      %v5135 = vadd.f32 %v4911, %v5134
      %5136 = vmatmul.bf16.gmra.mxu0 %v4016
      %v5137 = vpop.f32.mrf.mxu0
      %v5138 = vadd.f32 %v4914, %v5137
      %v5139 = vpop.f32.mrf.mxu0
      %v5140 = vadd.f32 %v4916, %v5139
      %5141 = vmatmul.bf16.gmra.mxu0 %v4020
      %v5142 = vpop.f32.mrf.mxu0
      %v5143 = vadd.f32 %v4919, %v5142
      %v5144 = vpop.f32.mrf.mxu0
      %v5145 = vadd.f32 %v4921, %v5144
      %5146 = vmatmul.bf16.gmra.mxu0 %v4024
      %v5147 = vpop.f32.mrf.mxu0
      %v5148 = vadd.f32 %v4924, %v5147
      %v5149 = vpop.f32.mrf.mxu0
      %v5150 = vadd.f32 %v4926, %v5149
      %5151 = vmatmul.bf16.gmra.mxu0 %v4028
      %v5152 = vpop.f32.mrf.mxu0
      %v5153 = vadd.f32 %v4929, %v5152
      %v5154 = vpop.f32.mrf.mxu0
      %v5155 = vadd.f32 %v4931, %v5154
      %5156 = vmatmul.bf16.gmra.mxu0 %v4032
      %v5157 = vpop.f32.mrf.mxu0
      %v5158 = vadd.f32 %v4934, %v5157
      %v5159 = vpop.f32.mrf.mxu0
      %v5160 = vadd.f32 %v4936, %v5159
      %5161 = vmatmul.bf16.gmra.mxu0 %v4036
      %v5162 = vpop.f32.mrf.mxu0
      %v5163 = vadd.f32 %v4939, %v5162
      %v5164 = vpop.f32.mrf.mxu0
      %v5165 = vadd.f32 %v4941, %v5164
      %5166 = vmatmul.bf16.gmra.mxu0 %v4040
      %v5167 = vpop.f32.mrf.mxu0
      %v5168 = vadd.f32 %v4944, %v5167
      %v5169 = vpop.f32.mrf.mxu0
      %v5170 = vadd.f32 %v4946, %v5169
      %5171 = vmatmul.bf16.gmra.mxu0 %v4044
      %v5172 = vpop.f32.mrf.mxu0
      %v5173 = vadd.f32 %v4949, %v5172
      %v5174 = vpop.f32.mrf.mxu0
      %v5175 = vadd.f32 %v4951, %v5174
      %5176 = vmatmul.bf16.gmra.mxu0 %v4048
      %v5177 = vpop.f32.mrf.mxu0
      %v5178 = vadd.f32 %v4954, %v5177
      %v5179 = vpop.f32.mrf.mxu0
      %v5180 = vadd.f32 %v4956, %v5179
      %5181 = vmatmul.bf16.gmra.mxu0 %v4052
      %v5182 = vpop.f32.mrf.mxu0
      %v5183 = vadd.f32 %v4959, %v5182
      %v5184 = vpop.f32.mrf.mxu0
      %v5185 = vadd.f32 %v4961, %v5184
      %5186 = vmatmul.bf16.gmra.mxu0 %v4056
      %v5187 = vpop.f32.mrf.mxu0
      %v5188 = vadd.f32 %v4964, %v5187
      %v5189 = vpop.f32.mrf.mxu0
      %v5190 = vadd.f32 %v4966, %v5189
      %5191 = vmatmul.bf16.gmra.mxu0 %v4060
      %v5192 = vpop.f32.mrf.mxu0
      %v5193 = vadd.f32 %v4969, %v5192
      %v5194 = vpop.f32.mrf.mxu0
      %v5195 = vadd.f32 %v4971, %v5194
      %5196 = vmatmul.bf16.gmra.mxu0 %v4064
      %v5197 = vpop.f32.mrf.mxu0
      %v5198 = vadd.f32 %v4974, %v5197
      %v5199 = vpop.f32.mrf.mxu0
      %v5200 = vadd.f32 %v4976, %v5199
      %5201 = vmatmul.bf16.gmra.mxu0 %v4068
      %v5202 = vpop.f32.mrf.mxu0
      %v5203 = vadd.f32 %v4979, %v5202
      %v5204 = vpop.f32.mrf.mxu0
      %v5205 = vadd.f32 %v4981, %v5204
      %5206 = vmatmul.bf16.gmra.mxu0 %v4072
      %v5207 = vpop.f32.mrf.mxu0
      %v5208 = vadd.f32 %v4984, %v5207
      %v5209 = vpop.f32.mrf.mxu0
      %v5210 = vadd.f32 %v4986, %v5209
      %5211 = vmatmul.bf16.gmra.mxu0 %v4076
      %v5212 = vpop.f32.mrf.mxu0
      %v5213 = vadd.f32 %v4989, %v5212
      %v5214 = vpop.f32.mrf.mxu0
      %v5215 = vadd.f32 %v4991, %v5214
      %5216 = vmatmul.bf16.gmra.mxu0 %v4080
      %v5217 = vpop.f32.mrf.mxu0
      %v5218 = vadd.f32 %v4994, %v5217
      %v5219 = vpop.f32.mrf.mxu0
      %v5220 = vadd.f32 %v4996, %v5219
      %5221 = vmatmul.bf16.gmra.mxu0 %v4084
      %v5222 = vpop.f32.mrf.mxu0
      %v5223 = vadd.f32 %v4999, %v5222
      %v5224 = vpop.f32.mrf.mxu0
      %v5225 = vadd.f32 %v5001, %v5224
      %5226 = vmatmul.bf16.gmra.mxu0 %v4088
      %v5227 = vpop.f32.mrf.mxu0
      %v5228 = vadd.f32 %v5004, %v5227
      %v5229 = vpop.f32.mrf.mxu0
      %v5230 = vadd.f32 %v5006, %v5229
      %5231 = vmatmul.bf16.gmra.mxu0 %v4092
      %v5232 = vpop.f32.mrf.mxu0
      %v5233 = vadd.f32 %v5009, %v5232
      %v5234 = vpop.f32.mrf.mxu0
      %v5235 = vadd.f32 %v5011, %v5234
      %5236 = vmatmul.bf16.gmra.mxu0 %v4096
      %v5237 = vpop.f32.mrf.mxu0
      %v5238 = vadd.f32 %v5014, %v5237
      %v5239 = vpop.f32.mrf.mxu0
      %v5240 = vadd.f32 %v5016, %v5239
      %5241 = vmatmul.bf16.gmra.mxu0 %v4100
      %v5242 = vpop.f32.mrf.mxu0
      %v5243 = vadd.f32 %v5019, %v5242
      %v5244 = vpop.f32.mrf.mxu0
      %v5245 = vadd.f32 %v5021, %v5244
      %5246 = vmatmul.bf16.gmra.mxu0 %v4104
      %v5247 = vpop.f32.mrf.mxu0
      %v5248 = vadd.f32 %v5024, %v5247
      %v5249 = vpop.f32.mrf.mxu0
      %v5250 = vadd.f32 %v5026, %v5249
      %5251 = vmatmul.bf16.gmra.mxu0 %v4108
      %v5252 = vpop.f32.mrf.mxu0
      %v5253 = vadd.f32 %v5029, %v5252
      %v5254 = vpop.f32.mrf.mxu0
      %v5255 = vadd.f32 %v5031, %v5254
      %5256 = vmatmul.bf16.gmra.mxu0 %v4112
      %v5257 = vpop.f32.mrf.mxu0
      %v5258 = vadd.f32 %v5034, %v5257
      %v5259 = vpop.f32.mrf.mxu0
      %v5260 = vadd.f32 %v5036, %v5259
      %5261 = vmatmul.bf16.gmra.mxu0 %v4116
      %v5262 = vpop.f32.mrf.mxu0
      %v5263 = vadd.f32 %v5039, %v5262
      %v5264 = vpop.f32.mrf.mxu0
      %v5265 = vadd.f32 %v5041, %v5264
      %5266 = vmatmul.bf16.gmra.mxu0 %v4120
      %v5267 = vpop.f32.mrf.mxu0
      %v5268 = vadd.f32 %v5044, %v5267
      %v5269 = vpop.f32.mrf.mxu0
      %v5270 = vadd.f32 %v5046, %v5269
      %5271 = vmatmul.bf16.gmra.mxu0 %v4124
      %v5272 = vpop.f32.mrf.mxu0
      %v5273 = vadd.f32 %v5049, %v5272
      %v5274 = vpop.f32.mrf.mxu0
      %v5275 = vadd.f32 %v5051, %v5274
      %5276 = vmatmul.bf16.gmra.mxu0 %v4128
      %v5277 = vpop.f32.mrf.mxu0
      %v5278 = vadd.f32 %v5054, %v5277
      %v5279 = vpop.f32.mrf.mxu0
      %v5280 = vadd.f32 %v5056, %v5279
      %5281 = vmatmul.bf16.gmra.mxu0 %v4132
      %v5282 = vpop.f32.mrf.mxu0
      %v5283 = vadd.f32 %v5059, %v5282
      %v5284 = vpop.f32.mrf.mxu0
      %v5285 = vadd.f32 %v5061, %v5284
      %5286 = vmatmul.bf16.gmra.mxu0 %v4136
      %v5287 = vpop.f32.mrf.mxu0
      %v5288 = vadd.f32 %v5064, %v5287
      %v5289 = vpop.f32.mrf.mxu0
      %v5290 = vadd.f32 %v5066, %v5289
      %5291 = vmatmul.bf16.gmra.mxu0 %v4140
      %v5292 = vpop.f32.mrf.mxu0
      %v5293 = vadd.f32 %v5069, %v5292
      %v5294 = vpop.f32.mrf.mxu0
      %v5295 = vadd.f32 %v5071, %v5294
      %5296 = vdwg.mxu0
      %v5297 = vpack.c.bf16 %v5083, %v5083
      %v5298 = vpack.c.bf16 %v5085, %v5085
      %v5299 = vpack.c.bf16 %v5088, %v5088
      %v5300 = vpack.c.bf16 %v5090, %v5090
      %v5301 = vpack.c.bf16 %v5093, %v5093
      %v5302 = vpack.c.bf16 %v5095, %v5095
      %v5303 = vpack.c.bf16 %v5098, %v5098
      %v5304 = vpack.c.bf16 %v5100, %v5100
      %v5305 = vpack.c.bf16 %v5103, %v5103
      %v5306 = vpack.c.bf16 %v5105, %v5105
      %v5307 = vpack.c.bf16 %v5108, %v5108
      %v5308 = vpack.c.bf16 %v5110, %v5110
      %v5309 = vpack.c.bf16 %v5113, %v5113
      %v5310 = vpack.c.bf16 %v5115, %v5115
      %v5311 = vpack.c.bf16 %v5118, %v5118
      %v5312 = vpack.c.bf16 %v5120, %v5120
      %v5313 = vpack.c.bf16 %v5123, %v5123
      %v5314 = vpack.c.bf16 %v5125, %v5125
      %v5315 = vpack.c.bf16 %v5128, %v5128
      %v5316 = vpack.c.bf16 %v5130, %v5130
      %v5317 = vpack.c.bf16 %v5133, %v5133
      %v5318 = vpack.c.bf16 %v5135, %v5135
      %v5319 = vpack.c.bf16 %v5138, %v5138
      %v5320 = vpack.c.bf16 %v5140, %v5140
      %v5321 = vpack.c.bf16 %v5143, %v5143
      %v5322 = vpack.c.bf16 %v5145, %v5145
      %v5323 = vpack.c.bf16 %v5148, %v5148
      %v5324 = vpack.c.bf16 %v5150, %v5150
      %v5325 = vpack.c.bf16 %v5153, %v5153
      %v5326 = vpack.c.bf16 %v5155, %v5155
      %v5327 = vpack.c.bf16 %v5158, %v5158
      %v5328 = vpack.c.bf16 %v5160, %v5160
      %v5329 = vpack.c.bf16 %v5163, %v5163
      %v5330 = vpack.c.bf16 %v5165, %v5165
      %v5331 = vpack.c.bf16 %v5168, %v5168
      %v5332 = vpack.c.bf16 %v5170, %v5170
      %v5333 = vpack.c.bf16 %v5173, %v5173
      %v5334 = vpack.c.bf16 %v5175, %v5175
      %v5335 = vpack.c.bf16 %v5178, %v5178
      %v5336 = vpack.c.bf16 %v5180, %v5180
      %v5337 = vpack.c.bf16 %v5183, %v5183
      %v5338 = vpack.c.bf16 %v5185, %v5185
      %v5339 = vpack.c.bf16 %v5188, %v5188
      %v5340 = vpack.c.bf16 %v5190, %v5190
      %v5341 = vpack.c.bf16 %v5193, %v5193
      %v5342 = vpack.c.bf16 %v5195, %v5195
      %v5343 = vpack.c.bf16 %v5198, %v5198
      %v5344 = vpack.c.bf16 %v5200, %v5200
      %v5345 = vpack.c.bf16 %v5203, %v5203
      %v5346 = vpack.c.bf16 %v5205, %v5205
      %v5347 = vpack.c.bf16 %v5208, %v5208
      %v5348 = vpack.c.bf16 %v5210, %v5210
      %v5349 = vpack.c.bf16 %v5213, %v5213
      %v5350 = vpack.c.bf16 %v5215, %v5215
      %v5351 = vpack.c.bf16 %v5218, %v5218
      %v5352 = vpack.c.bf16 %v5220, %v5220
      %v5353 = vpack.c.bf16 %v5223, %v5223
      %v5354 = vpack.c.bf16 %v5225, %v5225
      %v5355 = vpack.c.bf16 %v5228, %v5228
      %v5356 = vpack.c.bf16 %v5230, %v5230
      %v5357 = vpack.c.bf16 %v5233, %v5233
      %v5358 = vpack.c.bf16 %v5235, %v5235
      %v5359 = vpack.c.bf16 %v5238, %v5238
      %v5360 = vpack.c.bf16 %v5240, %v5240
      %v5361 = vpack.c.bf16 %v5243, %v5243
      %v5362 = vpack.c.bf16 %v5245, %v5245
      %v5363 = vpack.c.bf16 %v5248, %v5248
      %v5364 = vpack.c.bf16 %v5250, %v5250
      %v5365 = vpack.c.bf16 %v5253, %v5253
      %v5366 = vpack.c.bf16 %v5255, %v5255
      %v5367 = vpack.c.bf16 %v5258, %v5258
      %v5368 = vpack.c.bf16 %v5260, %v5260
      %v5369 = vpack.c.bf16 %v5263, %v5263
      %v5370 = vpack.c.bf16 %v5265, %v5265
      %v5371 = vpack.c.bf16 %v5268, %v5268
      %v5372 = vpack.c.bf16 %v5270, %v5270
      %v5373 = vpack.c.bf16 %v5273, %v5273
      %v5374 = vpack.c.bf16 %v5275, %v5275
      %v5375 = vpack.c.bf16 %v5278, %v5278
      %v5376 = vpack.c.bf16 %v5280, %v5280
      %v5377 = vpack.c.bf16 %v5283, %v5283
      %v5378 = vpack.c.bf16 %v5285, %v5285
      %v5379 = vpack.c.bf16 %v5288, %v5288
      %v5380 = vpack.c.bf16 %v5290, %v5290
      %v5381 = vpack.c.bf16 %v5293, %v5293
      %v5382 = vpack.c.bf16 %v5295, %v5295
      %5383 = vst [vmem:[%s280] sm:$0xf] %v5297
      %5384 = vst [vmem:[%s280 + $0x4] sm:$0xf] %v5298
      %5385 = vst [vmem:[%s280 + $0x8] sm:$0xf] %v5299
      %5386 = vst [vmem:[%s280 + $0xc] sm:$0xf] %v5300
      %5387 = vst [vmem:[%s280 + $0x10] sm:$0xf] %v5301
      %5388 = vst [vmem:[%s280 + $0x14] sm:$0xf] %v5302
      %5389 = vst [vmem:[%s280 + $0x18] sm:$0xf] %v5303
      %5390 = vst [vmem:[%s280 + $0x1c] sm:$0xf] %v5304
      %5391 = vst [vmem:[%s280 + $0x20] sm:$0xf] %v5305
      %5392 = vst [vmem:[%s280 + $0x24] sm:$0xf] %v5306
      %5393 = vst [vmem:[%s280 + $0x28] sm:$0xf] %v5307
      %5394 = vst [vmem:[%s280 + $0x2c] sm:$0xf] %v5308
      %5395 = vst [vmem:[%s280 + $0x30] sm:$0xf] %v5309
      %5396 = vst [vmem:[%s280 + $0x34] sm:$0xf] %v5310
      %5397 = vst [vmem:[%s280 + $0x38] sm:$0xf] %v5311
      %5398 = vst [vmem:[%s280 + $0x3c] sm:$0xf] %v5312
      %5399 = vst [vmem:[%s280 + $0x40] sm:$0xf] %v5313
      %5400 = vst [vmem:[%s280 + $0x44] sm:$0xf] %v5314
      %5401 = vst [vmem:[%s280 + $0x48] sm:$0xf] %v5315
      %5402 = vst [vmem:[%s280 + $0x4c] sm:$0xf] %v5316
      %5403 = vst [vmem:[%s280 + $0x50] sm:$0xf] %v5317
      %5404 = vst [vmem:[%s280 + $0x54] sm:$0xf] %v5318
      %5405 = vst [vmem:[%s280 + $0x58] sm:$0xf] %v5319
      %5406 = vst [vmem:[%s280 + $0x5c] sm:$0xf] %v5320
      %5407 = vst [vmem:[%s280 + $0x60] sm:$0xf] %v5321
      %5408 = vst [vmem:[%s280 + $0x64] sm:$0xf] %v5322
      %5409 = vst [vmem:[%s280 + $0x68] sm:$0xf] %v5323
      %5410 = vst [vmem:[%s280 + $0x6c] sm:$0xf] %v5324
      %5411 = vst [vmem:[%s280 + $0x70] sm:$0xf] %v5325
      %5412 = vst [vmem:[%s280 + $0x74] sm:$0xf] %v5326
      %5413 = vst [vmem:[%s280 + $0x78] sm:$0xf] %v5327
      %5414 = vst [vmem:[%s280 + $0x7c] sm:$0xf] %v5328
      %5415 = vst [vmem:[%s280 + $0x80] sm:$0xf] %v5329
      %5416 = vst [vmem:[%s280 + $0x84] sm:$0xf] %v5330
      %5417 = vst [vmem:[%s280 + $0x88] sm:$0xf] %v5331
      %5418 = vst [vmem:[%s280 + $0x8c] sm:$0xf] %v5332
      %5419 = vst [vmem:[%s280 + $0x90] sm:$0xf] %v5333
      %5420 = vst [vmem:[%s280 + $0x94] sm:$0xf] %v5334
      %5421 = vst [vmem:[%s280 + $0x98] sm:$0xf] %v5335
      %5422 = vst [vmem:[%s280 + $0x9c] sm:$0xf] %v5336
      %5423 = vst [vmem:[%s280 + $0xa0] sm:$0xf] %v5337
      %5424 = vst [vmem:[%s280 + $0xa4] sm:$0xf] %v5338
      %5425 = vst [vmem:[%s280 + $0xa8] sm:$0xf] %v5339
      %5426 = vst [vmem:[%s280 + $0xac] sm:$0xf] %v5340
      %5427 = vst [vmem:[%s280 + $0xb0] sm:$0xf] %v5341
      %5428 = vst [vmem:[%s280 + $0xb4] sm:$0xf] %v5342
      %5429 = vst [vmem:[%s280 + $0xb8] sm:$0xf] %v5343
      %5430 = vst [vmem:[%s280 + $0xbc] sm:$0xf] %v5344
      %5431 = vst [vmem:[%s280 + $0xc0] sm:$0xf] %v5345
      %5432 = vst [vmem:[%s280 + $0xc4] sm:$0xf] %v5346
      %5433 = vst [vmem:[%s280 + $0xc8] sm:$0xf] %v5347
      %5434 = vst [vmem:[%s280 + $0xcc] sm:$0xf] %v5348
      %5435 = vst [vmem:[%s280 + $0xd0] sm:$0xf] %v5349
      %5436 = vst [vmem:[%s280 + $0xd4] sm:$0xf] %v5350
      %5437 = vst [vmem:[%s280 + $0xd8] sm:$0xf] %v5351
      %5438 = vst [vmem:[%s280 + $0xdc] sm:$0xf] %v5352
      %5439 = vst [vmem:[%s280 + $0xe0] sm:$0xf] %v5353
      %5440 = vst [vmem:[%s280 + $0xe4] sm:$0xf] %v5354
      %5441 = vst [vmem:[%s280 + $0xe8] sm:$0xf] %v5355
      %5442 = vst [vmem:[%s280 + $0xec] sm:$0xf] %v5356
      %5443 = vst [vmem:[%s280 + $0xf0] sm:$0xf] %v5357
      %5444 = vst [vmem:[%s280 + $0xf4] sm:$0xf] %v5358
      %5445 = vst [vmem:[%s280 + $0xf8] sm:$0xf] %v5359
      %5446 = vst [vmem:[%s280 + $0xfc] sm:$0xf] %v5360
      %5447 = vst [vmem:[%s280 + $0x100] sm:$0xf] %v5361
      %5448 = vst [vmem:[%s280 + $0x104] sm:$0xf] %v5362
      %5449 = vst [vmem:[%s280 + $0x108] sm:$0xf] %v5363
      %5450 = vst [vmem:[%s280 + $0x10c] sm:$0xf] %v5364
      %5451 = vst [vmem:[%s280 + $0x110] sm:$0xf] %v5365
      %5452 = vst [vmem:[%s280 + $0x114] sm:$0xf] %v5366
      %5453 = vst [vmem:[%s280 + $0x118] sm:$0xf] %v5367
      %5454 = vst [vmem:[%s280 + $0x11c] sm:$0xf] %v5368
      %5455 = vst [vmem:[%s280 + $0x120] sm:$0xf] %v5369
      %5456 = vst [vmem:[%s280 + $0x124] sm:$0xf] %v5370
      %5457 = vst [vmem:[%s280 + $0x128] sm:$0xf] %v5371
      %5458 = vst [vmem:[%s280 + $0x12c] sm:$0xf] %v5372
      %5459 = vst [vmem:[%s280 + $0x130] sm:$0xf] %v5373
      %5460 = vst [vmem:[%s280 + $0x134] sm:$0xf] %v5374
      %5461 = vst [vmem:[%s280 + $0x138] sm:$0xf] %v5375
      %5462 = vst [vmem:[%s280 + $0x13c] sm:$0xf] %v5376
      %5463 = vst [vmem:[%s280 + $0x140] sm:$0xf] %v5377
      %5464 = vst [vmem:[%s280 + $0x144] sm:$0xf] %v5378
      %5465 = vst [vmem:[%s280 + $0x148] sm:$0xf] %v5379
      %5466 = vst [vmem:[%s280 + $0x14c] sm:$0xf] %v5380
      %5467 = vst [vmem:[%s280 + $0x150] sm:$0xf] %v5381
      %5468 = vst [vmem:[%s280 + $0x154] sm:$0xf] %v5382
      %s5469 = smul.u32 86, %s18
      %p5470 = scmp.lt.s32.totalorder %s5469, 343
      %s5471 = scalar_select %p5470, %s5469, 343
      %s5472 = smul.addr %s5471, 4
      %s5473 = scalar_lea.vmem %s7, %s5472
      // Predicated region
      $region49: #{fpn_encoder_forward.3} parent=47 // pred_check
        %p5474 = pneg %p188
      $region50: #{fpn_encoder_forward.3} parent=47 // pred_check_branch
        %5476 = sbr.rel (%p5474) target = $region52
      $region51: #{fpn_encoder_forward.3} parent=47 // pred_region
        %s5477 = smul.u32 86, %s18
      $region52: #{fpn_encoder_forward.3} parent=47 // pred_fallthru
        _
    $region48: #{fpn_encoder_forward.3} parent=5 // pred_fallthru
      _
    %p5478 = scmp.le.s32.totalorder 2, %s13
    // Predicated region
    $region53: #{fpn_encoder_forward.3} parent=5 // pred_check
      %p5479 = pneg %p5478
    $region54: #{fpn_encoder_forward.3} parent=5 // pred_check_branch
      %5481 = sbr.rel (%p5479) target = $region56
    $region55: #{fpn_encoder_forward.3} parent=5 // pred_region
      %s5482 = ssub.s32 %s13, 2
      // Predicated region
      $region57: #{fpn_encoder_forward.3} parent=55 // pred_check
        %p5483 = pneg %p194
      $region58: #{fpn_encoder_forward.3} parent=55 // pred_check_branch
        %5485 = sbr.rel (%p5483) target = $region60
      $region59: #{fpn_encoder_forward.3} parent=55 // pred_region
        %s5486 = smul.u32 86, %s19
        %p5487 = scmp.lt.s32.totalorder %s5486, 343
        %s5488 = scalar_select %p5487, %s5486, 343
        %s5489 = smul.addr %s5488, 4
        %s5490 = scalar_lea.vmem %s7, %s5489
      $region60: #{fpn_encoder_forward.3} parent=55 // pred_fallthru
        _
    $region56: #{fpn_encoder_forward.3} parent=5 // pred_fallthru
      _
  $region6: #{fpn_encoder_forward.3} parent=0 // loop_footer
    %s17 = sadd.s32 1, %s13
  $region7: #{fpn_encoder_forward.3} parent=0 // loop_footer_branch
    %12 = sbr.rel target = $region3
  $region8: #{fpn_encoder_forward.3} parent=0 // loop_exit
    _

</llo_original>
